<compile_context>
chip_gen: v5e
topology: v5e:2x2
jax: 0.10.0
libtpu: 0.0.40
codegen_flags: <defaults>
</compile_context>

<pallas_src>
import jax
import jax.numpy as jnp
from jax.experimental import pallas as pl
from jax.experimental.pallas import tpu as pltpu

PATCHES_PER_BAG = 100   # the hard-coded "100" in .view(-1, 100, n_classes)
NCLS_PAD = 128          # lane-dense padding for the tiny n_classes dimension


def baseline_kernel(x_ref, g_ref, we_ref, bf_ref, wp_ref, bp_ref, out_ref):
    # x_ref  : (N_BLK, K)      bf16  flattened patches for B_BLK complete bags (K = C*H*W)
    # g_ref  : (B_BLK, N_BLK)  f32   constant 0/1 bag indicator (resident across tiles)
    # we_ref : (K, d_embed)    bf16  feature weight with the GAP folded in (wf/HW repeated)
    # bf_ref : (1, d_embed)    f32   100 * feature bias   (per-bag contribution)
    # wp_ref : (d_embed, 128)  f32   image_proj weight, zero-padded to 128 lanes
    # bp_ref : (1, 128)        f32   100 * image_proj bias, zero-padded
    # out_ref: (B_BLK, 128)    f32   per-bag logits (padded lanes stay zero)

    # FeatureExtractor (GAP + Linear) as one lane-dense K = C*HW MXU matmul.
    feats = jnp.dot(x_ref[...], we_ref[...],
                    preferred_element_type=jnp.float32)                    # (N_BLK, d_embed)

    # Bag-sum BEFORE the projection (exact by linearity): 0/1 indicator matmul on the MXU.
    bag_feats = jnp.dot(g_ref[...], feats,
                        preferred_element_type=jnp.float32) + bf_ref[...]  # (B_BLK, d_embed)

    # image_proj on bag features: 100x fewer rows than projecting per patch.
    out_ref[...] = jnp.dot(bag_feats, wp_ref[...],
                           preferred_element_type=jnp.float32) + bp_ref[...]


def _pick_bag_block(n_bags, k, max_bags_per_block,
                    x_bytes=2, x_tile_budget=12 * 1024 * 1024):
    """Largest legal bag-block: divides n_bags, keeps the double-buffered bf16
    x tile within the budget, and keeps every block (8,128)-legal
    (block == full array, or a multiple-of-8 sublane dim)."""
    valid = [n_bags] + [b for b in range(8, n_bags, 8) if n_bags % b == 0]

    def tile_bytes(b):  # double-buffered x tile
        return 2 * b * PATCHES_PER_BAG * k * x_bytes

    good = [b for b in valid if b <= max_bags_per_block and tile_bytes(b) <= x_tile_budget]
    return max(good) if good else min(valid)


def baseline_forward(image, w_feat, b_feat, w_proj, b_proj, *, max_bags_per_block=None):
    """image: (N, C, H, W) NCHW with N = B * 100. Returns (B, n_classes) float32."""
    N, C, H, W = image.shape
    assert N % PATCHES_PER_BAG == 0, "batch of patches must be a multiple of 100"
    B = N // PATCHES_PER_BAG
    hw = H * W
    K = C * hw
    d_embed = w_feat.shape[1]
    n_classes = w_proj.shape[1]
    assert n_classes <= NCLS_PAD

    if max_bags_per_block is None:
        max_bags_per_block = B
    b_blk = _pick_bag_block(B, K, max_bags_per_block)
    n_blk = b_blk * PATCHES_PER_BAG
    num_tiles = B // b_blk

    # Lane-dense patch layout, bf16 for HBM/VMEM traffic; f32 accumulation in-kernel.
    x = image.reshape(N, K).astype(jnp.bfloat16)

    # Fold GAP into the feature weight: mean_s(x[n,c,s]) @ wf == x_flat @ (repeat(wf, HW)/HW).
    w_eff = (jnp.repeat(w_feat.astype(jnp.float32), hw, axis=0) / hw).astype(jnp.bfloat16)

    # Per-bag bias contributions (sum over 100 patches), f32 for exactness.
    bf_scaled = (PATCHES_PER_BAG * b_feat.astype(jnp.float32)).reshape(1, d_embed)
    wp_pad = jnp.zeros((d_embed, NCLS_PAD), jnp.float32)
    wp_pad = wp_pad.at[:, :n_classes].set(w_proj.astype(jnp.float32))
    bp_pad = jnp.zeros((1, NCLS_PAD), jnp.float32)
    bp_pad = bp_pad.at[:, :n_classes].set(PATCHES_PER_BAG * b_proj.astype(jnp.float32))

    # Constant per-tile bag indicator (tiles always cover whole bags).
    group = (jnp.arange(n_blk) // PATCHES_PER_BAG
             == jnp.arange(b_blk)[:, None]).astype(jnp.float32)           # (b_blk, n_blk)

    out_pad = pl.pallas_call(
        baseline_kernel,
        out_shape=jax.ShapeDtypeStruct((B, NCLS_PAD), jnp.float32),
        grid=(num_tiles,),
        in_specs=[
            pl.BlockSpec((n_blk, K), lambda i: (i, 0)),          # x: pipelined over patch tiles
            pl.BlockSpec((b_blk, n_blk), lambda i: (0, 0)),      # bag indicator (resident)
            pl.BlockSpec((K, d_embed), lambda i: (0, 0)),        # folded feature weight
            pl.BlockSpec((1, d_embed), lambda i: (0, 0)),        # 100 * feature bias
            pl.BlockSpec((d_embed, NCLS_PAD), lambda i: (0, 0)), # padded proj weight
            pl.BlockSpec((1, NCLS_PAD), lambda i: (0, 0)),       # 100 * padded proj bias
        ],
        out_specs=pl.BlockSpec((b_blk, NCLS_PAD), lambda i: (i, 0)),
        compiler_params=pltpu.CompilerParams(
            dimension_semantics=("parallel",),       # disjoint output rows per tile
            vmem_limit_bytes=32 * 1024 * 1024,
        ),
    )(x, group, w_eff, bf_scaled, wp_pad, bp_pad)

    return out_pad[:, :n_classes]


def reference_forward(image, w_feat, b_feat, w_proj, b_proj):
    """Pure-JAX f32 reference matching the PyTorch forward semantics."""
    N, C, H, W = image.shape
    B = N // PATCHES_PER_BAG
    pooled = jnp.mean(image.reshape(N, C, H * W), axis=-1)
    feats = pooled @ w_feat + b_feat
    logits = feats @ w_proj + b_proj
    return jnp.sum(logits.reshape(B, PATCHES_PER_BAG, -1), axis=1)


if __name__ == "__main__":
    d_embed, n_classes = 768, 5
    C, H, W = 4, 16, 16

    key = jax.random.PRNGKey(0)
    k_img, k_img2, k_wf, k_bf, k_wp, k_bp = jax.random.split(key, 6)

    # Deterministic nn.Linear-style init: U(-1/sqrt(fan_in), 1/sqrt(fan_in)).
    lim_f = 1.0 / jnp.sqrt(jnp.float32(C))
    w_feat = jax.random.uniform(k_wf, (C, d_embed), jnp.float32, -lim_f, lim_f)
    b_feat = jax.random.uniform(k_bf, (d_embed,), jnp.float32, -lim_f, lim_f)
    lim_p = 1.0 / jnp.sqrt(jnp.float32(d_embed))
    w_proj = jax.random.uniform(k_wp, (d_embed, n_classes), jnp.float32, -lim_p, lim_p)
    b_proj = jax.random.uniform(k_bp, (n_classes,), jnp.float32, -lim_p, lim_p)

    # --- Test 1: small case, B=2 bags (N=200 patches), single-tile grid ---
    B1 = 2
    N1 = B1 * PATCHES_PER_BAG
    image1 = jax.random.normal(k_img, (N1, C, H, W), dtype=jnp.float32)
    out1 = jax.block_until_ready(baseline_forward(image1, w_feat, b_feat, w_proj, b_proj))
    ref1 = reference_forward(image1, w_feat, b_feat, w_proj, b_proj)
    assert out1.shape == (B1, n_classes)
    assert jnp.allclose(out1, ref1, atol=1e-2, rtol=1e-2)

    # --- Test 2: B=16 bags, forced 8-bag tiles -> 2-step "parallel" grid ---
    B2 = 16
    N2 = B2 * PATCHES_PER_BAG
    image2 = jax.random.normal(k_img2, (N2, C, H, W), dtype=jnp.float32)
    out2 = jax.block_until_ready(
        baseline_forward(image2, w_feat, b_feat, w_proj, b_proj, max_bags_per_block=8))
    ref2 = reference_forward(image2, w_feat, b_feat, w_proj, b_proj)
    assert out2.shape == (B2, n_classes)
    assert jnp.allclose(out2, ref2, atol=1e-2, rtol=1e-2)

    print("KERNEL_OK")
</pallas_src>

<mosaic_0001>
module attributes {stable_mosaic.version = 11 : i64} {
  func.func @baseline_kernel(%arg0: i32, %arg1: memref<200x1024xbf16, #tpu.memory_space<vmem>>, %arg2: memref<2x200xf32, #tpu.memory_space<vmem>>, %arg3: memref<1024x768xbf16, #tpu.memory_space<vmem>>, %arg4: memref<1x768xf32, #tpu.memory_space<vmem>>, %arg5: memref<768x128xf32, #tpu.memory_space<vmem>>, %arg6: memref<1x128xf32, #tpu.memory_space<vmem>>, %arg7: memref<2x128xf32, #tpu.memory_space<vmem>>) attributes {dimension_semantics = [#tpu.dimension_semantics<parallel>], iteration_bounds = array<i64: 1>, scalar_prefetch = 0 : i64, scratch_operands = 0 : i64, tpu.core_type = #tpu.core_type<tc>, window_params = [{transform_indices = @transform_0, window_bounds = array<i64: 200, 1024>}, {pipeline_mode = #tpu.pipeline_mode<synchronous>, transform_indices = @transform_1, window_bounds = array<i64: 2, 200>}, {pipeline_mode = #tpu.pipeline_mode<synchronous>, transform_indices = @transform_2, window_bounds = array<i64: 1024, 768>}, {pipeline_mode = #tpu.pipeline_mode<synchronous>, transform_indices = @transform_3, window_bounds = array<i64: 1, 768>}, {pipeline_mode = #tpu.pipeline_mode<synchronous>, transform_indices = @transform_4, window_bounds = array<i64: 768, 128>}, {pipeline_mode = #tpu.pipeline_mode<synchronous>, transform_indices = @transform_5, window_bounds = array<i64: 1, 128>}, {transform_indices = @transform_6, window_bounds = array<i64: 2, 128>}]} {
    %c0 = arith.constant 0 : index
    %c0_0 = arith.constant 0 : index
    %0 = vector.load %arg1[%c0, %c0_0] : memref<200x1024xbf16, #tpu.memory_space<vmem>>, vector<200x1024xbf16>
    %c0_1 = arith.constant 0 : index
    %c0_2 = arith.constant 0 : index
    %1 = vector.load %arg3[%c0_1, %c0_2] : memref<1024x768xbf16, #tpu.memory_space<vmem>>, vector<1024x768xbf16>
    %cst = arith.constant dense<0.000000e+00> : vector<200x768xf32>
    %2 = tpu.matmul %0, %1, %cst {dimension_numbers = #tpu.dot_dimension_numbers<[1], [0], [0], [1], [0, 0, 1, 1], [], []>} : vector<200x1024xbf16>, vector<1024x768xbf16>, vector<200x768xf32> -> vector<200x768xf32>
    %c0_3 = arith.constant 0 : index
    %c0_4 = arith.constant 0 : index
    %3 = vector.load %arg2[%c0_3, %c0_4] : memref<2x200xf32, #tpu.memory_space<vmem>>, vector<2x200xf32>
    %cst_5 = arith.constant dense<0.000000e+00> : vector<2x768xf32>
    %4 = tpu.matmul %3, %2, %cst_5 {dimension_numbers = #tpu.dot_dimension_numbers<[1], [0], [0], [1], [0, 0, 1, 1], [], []>} : vector<2x200xf32>, vector<200x768xf32>, vector<2x768xf32> -> vector<2x768xf32>
    %c0_6 = arith.constant 0 : index
    %c0_7 = arith.constant 0 : index
    %5 = vector.load %arg4[%c0_6, %c0_7] : memref<1x768xf32, #tpu.memory_space<vmem>>, vector<1x768xf32>
    %6 = vector.broadcast %5 : vector<1x768xf32> to vector<2x768xf32>
    %7 = arith.addf %4, %6 : vector<2x768xf32>
    %c0_8 = arith.constant 0 : index
    %c0_9 = arith.constant 0 : index
    %8 = vector.load %arg5[%c0_8, %c0_9] : memref<768x128xf32, #tpu.memory_space<vmem>>, vector<768x128xf32>
    %cst_10 = arith.constant dense<0.000000e+00> : vector<2x128xf32>
    %9 = tpu.matmul %7, %8, %cst_10 {dimension_numbers = #tpu.dot_dimension_numbers<[1], [0], [0], [1], [0, 0, 1, 1], [], []>} : vector<2x768xf32>, vector<768x128xf32>, vector<2x128xf32> -> vector<2x128xf32>
    %c0_11 = arith.constant 0 : index
    %c0_12 = arith.constant 0 : index
    %10 = vector.load %arg6[%c0_11, %c0_12] : memref<1x128xf32, #tpu.memory_space<vmem>>, vector<1x128xf32>
    %11 = vector.broadcast %10 : vector<1x128xf32> to vector<2x128xf32>
    %12 = arith.addf %9, %11 : vector<2x128xf32>
    %c0_13 = arith.constant 0 : index
    %c0_14 = arith.constant 0 : index
    %13 = vector.load %arg7[%c0_13, %c0_14] : memref<2x128xf32, #tpu.memory_space<vmem>>, vector<2x128xf32>
    tpu.vector_store %arg7[%c0_13, %c0_14], %12 {strides = array<i32>} : memref<2x128xf32, #tpu.memory_space<vmem>>, vector<2x128xf32>,
    return
  }
  func.func @transform_0(%arg0: i32) -> (i32, i32) {
    %c0_i32 = arith.constant 0 : i32
    %c0_i32_0 = arith.constant 0 : i32
    return %arg0, %c0_i32 : i32, i32
  }
  func.func @transform_1(%arg0: i32) -> (i32, i32) {
    %c0_i32 = arith.constant 0 : i32
    %c0_i32_0 = arith.constant 0 : i32
    %c0_i32_1 = arith.constant 0 : i32
    return %c0_i32, %c0_i32_0 : i32, i32
  }
  func.func @transform_2(%arg0: i32) -> (i32, i32) {
    %c0_i32 = arith.constant 0 : i32
    %c0_i32_0 = arith.constant 0 : i32
    %c0_i32_1 = arith.constant 0 : i32
    return %c0_i32, %c0_i32_0 : i32, i32
  }
  func.func @transform_3(%arg0: i32) -> (i32, i32) {
    %c0_i32 = arith.constant 0 : i32
    %c0_i32_0 = arith.constant 0 : i32
    %c0_i32_1 = arith.constant 0 : i32
    return %c0_i32, %c0_i32_0 : i32, i32
  }
  func.func @transform_4(%arg0: i32) -> (i32, i32) {
    %c0_i32 = arith.constant 0 : i32
    %c0_i32_0 = arith.constant 0 : i32
    %c0_i32_1 = arith.constant 0 : i32
    return %c0_i32, %c0_i32_0 : i32, i32
  }
  func.func @transform_5(%arg0: i32) -> (i32, i32) {
    %c0_i32 = arith.constant 0 : i32
    %c0_i32_0 = arith.constant 0 : i32
    %c0_i32_1 = arith.constant 0 : i32
    return %c0_i32, %c0_i32_0 : i32, i32
  }
  func.func @transform_6(%arg0: i32) -> (i32, i32) {
    %c0_i32 = arith.constant 0 : i32
    %c0_i32_0 = arith.constant 0 : i32
    return %arg0, %c0_i32 : i32, i32
  }
}

</mosaic_0001>

<llo_original>
// kernel: tpu_custom_call.1
$region0: #{tpu_custom_call.1}
  #allocation0 [shape = 'u32[]', space=smem, size = 0x4, offset = 0x4, fixed_abs, tag = 'smem constant byte address 0x4 - core index']
  #allocation1 [shape = 'u32[72,128]{1,0:T(1,128)}', space=vmem, size = 0x9000, scoped, tag = 'internal scratch']
  %s0 = inlined_call_operand.hbm [shape: bf16[200,1024], index: 0, kind: input, shape index: {}]
  %s1 = inlined_call_operand.hbm [shape: f32[2,200], index: 1, kind: input, shape index: {}]
  %s2 = inlined_call_operand.hbm [shape: bf16[1024,768], index: 2, kind: input, shape index: {}]
  %s3 = inlined_call_operand.hbm [shape: f32[1,768], index: 3, kind: input, shape index: {}]
  %s4 = inlined_call_operand.hbm [shape: f32[768,128], index: 4, kind: input, shape index: {}]
  %s5 = inlined_call_operand.hbm [shape: f32[1,128], index: 5, kind: input, shape index: {}]
  %s6 = inlined_call_operand.hbm [shape: f32[2,128], index: 6, kind: output, shape index: {}]
  %s7 = sld [smem:[#allocation0]]
  $region58: #{tpu_custom_call.1} parent=0
    _
  %s9 = ssub.s32 1, %s7
  %s10 = scalar_select 0, %s9, %s7
  $region1: #{tpu_custom_call.1} parent=0
    #allocation2 [shape = 'u8[409600]{0}', space=vmem, size = 0x64000, scoped, tag = 'input window, operand 0, single buffered']
    #allocation3 [shape = 's32[1]{0}', space=sflag, size = 0x4, scoped, tag = 'scoped memory for tpu_custom_call.1']
    #allocation4 [shape = 's32[1]{0}', space=sflag, size = 0x4, scoped, tag = 'scoped memory for tpu_custom_call.1']
    #allocation5 [shape = 'u8[2048]{0}', space=vmem, size = 0x800, scoped, tag = 'input window, operand 1, single buffered']
    #allocation6 [shape = 's32[1]{0}', space=sflag, size = 0x4, scoped, tag = 'scoped memory for tpu_custom_call.1']
    #allocation7 [shape = 'u8[1572864]{0}', space=vmem, size = 0x180000, scoped, tag = 'input window, operand 2, single buffered']
    #allocation8 [shape = 'u8[3072]{0}', space=vmem, size = 0xc00, scoped, tag = 'input window, operand 3, single buffered']
    #allocation9 [shape = 's32[1]{0}', space=sflag, size = 0x4, scoped, tag = 'scoped memory for tpu_custom_call.1']
    #allocation10 [shape = 'u8[393216]{0}', space=vmem, size = 0x60000, scoped, tag = 'input window, operand 4, single buffered']
    #allocation11 [shape = 'u8[512]{0}', space=vmem, size = 0x400, scoped, tag = 'input window, operand 5, single buffered']
    #allocation12 [shape = 's32[1]{0}', space=sflag, size = 0x4, scoped, tag = 'scoped memory for tpu_custom_call.1']
    #allocation13 [shape = 'u8[1024]{0}', space=vmem, size = 0x400, scoped, tag = 'output window, operand 0, single buffered']
    %11 = vsyncpa [#allocation3], 0
    %12 = vsyncpa [#allocation6], 0
    %13 = vsyncpa [#allocation9], 0
    %14 = vsyncpa [#allocation12], 0
    %15 = vsyncpa [#allocation4], 0
    // Predicated region
    $region2: #{tpu_custom_call.1} parent=1 // pred_check
      _
    $region3: #{tpu_custom_call.1} parent=1 // pred_check_branch
      %17 = sbr.rel (0) target = $region5
    $region4: #{tpu_custom_call.1} parent=1 // pred_region
      %19 = vsyncadd [#allocation3], 0
      %s20 = sshll.u32 %s0, 4
      %s21 = int_to_ptr.hbm [resolvable:$true] %s20
      %s22 = sshll.u32 [#allocation2], 4
      %s23 = int_to_ptr.vmem [resolvable:$true] %s22
      %28 = dma.hbm_to_vmem [thread:$0]  %s21, 12800, %s23, [#allocation3], 512, 512, 32
    $region5: #{tpu_custom_call.1} parent=1 // pred_fallthru
      _
    // Predicated region
    $region6: #{tpu_custom_call.1} parent=1 // pred_check
      _
    $region7: #{tpu_custom_call.1} parent=1 // pred_check_branch
      %30 = sbr.rel (0) target = $region9
    $region8: #{tpu_custom_call.1} parent=1 // pred_region
      %32 = vsyncadd [#allocation6], 0
      %s34 = sshll.u32 %s1, 4
      %s35 = int_to_ptr.hbm [resolvable:$true] %s34
      %s36 = sshll.u32 [#allocation5], 4
      %s37 = int_to_ptr.vmem [resolvable:$true] %s36
      %39 = dma.hbm_to_vmem [thread:$0]  %s35, 64, %s37, [#allocation6]
    $region9: #{tpu_custom_call.1} parent=1 // pred_fallthru
      _
    // Predicated region
    $region10: #{tpu_custom_call.1} parent=1 // pred_check
      _
    $region11: #{tpu_custom_call.1} parent=1 // pred_check_branch
      %41 = sbr.rel (0) target = $region13
    $region12: #{tpu_custom_call.1} parent=1 // pred_region
      %43 = vsyncadd [#allocation6], 0
      %s44 = sshll.u32 %s2, 4
      %s45 = int_to_ptr.hbm [resolvable:$true] %s44
      %s46 = sshll.u32 [#allocation7], 4
      %s47 = int_to_ptr.vmem [resolvable:$true] %s46
      %52 = dma.hbm_to_vmem [thread:$0]  %s45, 49152, %s47, [#allocation6], 384, 384, 24
    $region13: #{tpu_custom_call.1} parent=1 // pred_fallthru
      _
    // Predicated region
    $region14: #{tpu_custom_call.1} parent=1 // pred_check
      _
    $region15: #{tpu_custom_call.1} parent=1 // pred_check_branch
      %54 = sbr.rel (0) target = $region17
    $region16: #{tpu_custom_call.1} parent=1 // pred_region
      %56 = vsyncadd [#allocation9], 0
      %s58 = sshll.u32 %s3, 4
      %s59 = int_to_ptr.hbm [resolvable:$true] %s58
      %s60 = sshll.u32 [#allocation8], 4
      %s61 = int_to_ptr.vmem [resolvable:$true] %s60
      %63 = dma.hbm_to_vmem [thread:$0]  %s59, 96, %s61, [#allocation9]
    $region17: #{tpu_custom_call.1} parent=1 // pred_fallthru
      _
    // Predicated region
    $region18: #{tpu_custom_call.1} parent=1 // pred_check
      _
    $region19: #{tpu_custom_call.1} parent=1 // pred_check_branch
      %65 = sbr.rel (0) target = $region21
    $region20: #{tpu_custom_call.1} parent=1 // pred_region
      %67 = vsyncadd [#allocation9], 0
      %s68 = sshll.u32 %s4, 4
      %s69 = int_to_ptr.hbm [resolvable:$true] %s68
      %s70 = sshll.u32 [#allocation10], 4
      %s71 = int_to_ptr.vmem [resolvable:$true] %s70
      %76 = dma.hbm_to_vmem [thread:$0]  %s69, 12288, %s71, [#allocation9], 128, 128, 8
    $region21: #{tpu_custom_call.1} parent=1 // pred_fallthru
      _
    // Predicated region
    $region22: #{tpu_custom_call.1} parent=1 // pred_check
      _
    $region23: #{tpu_custom_call.1} parent=1 // pred_check_branch
      %78 = sbr.rel (0) target = $region25
    $region24: #{tpu_custom_call.1} parent=1 // pred_region
      %80 = vsyncadd [#allocation12], 0
      %s82 = sshll.u32 %s5, 4
      %s83 = int_to_ptr.hbm [resolvable:$true] %s82
      %s84 = sshll.u32 [#allocation11], 4
      %s85 = int_to_ptr.vmem [resolvable:$true] %s84
      %87 = dma.hbm_to_vmem [thread:$0]  %s83, 16, %s85, [#allocation12]
    $region25: #{tpu_custom_call.1} parent=1 // pred_fallthru
      _
    // Predicated region
    $region26: #{tpu_custom_call.1} parent=1 // pred_check
      _
    $region27: #{tpu_custom_call.1} parent=1 // pred_check_branch
      %89 = sbr.rel (0) target = $region29
    $region28: #{tpu_custom_call.1} parent=1 // pred_region
      %91 = dma.done [#allocation3], 12800
    $region29: #{tpu_custom_call.1} parent=1 // pred_fallthru
      _
    // Predicated region
    $region30: #{tpu_custom_call.1} parent=1 // pred_check
      _
    $region31: #{tpu_custom_call.1} parent=1 // pred_check_branch
      %93 = sbr.rel (0) target = $region33
    $region32: #{tpu_custom_call.1} parent=1 // pred_region
      %95 = dma.done [#allocation6], 64
    $region33: #{tpu_custom_call.1} parent=1 // pred_fallthru
      _
    // Predicated region
    $region34: #{tpu_custom_call.1} parent=1 // pred_check
      _
    $region35: #{tpu_custom_call.1} parent=1 // pred_check_branch
      %97 = sbr.rel (0) target = $region37
    $region36: #{tpu_custom_call.1} parent=1 // pred_region
      %99 = dma.done [#allocation6], 49152
    $region37: #{tpu_custom_call.1} parent=1 // pred_fallthru
      _
    // Predicated region
    $region38: #{tpu_custom_call.1} parent=1 // pred_check
      _
    $region39: #{tpu_custom_call.1} parent=1 // pred_check_branch
      %101 = sbr.rel (0) target = $region41
    $region40: #{tpu_custom_call.1} parent=1 // pred_region
      %103 = dma.done [#allocation9], 96
    $region41: #{tpu_custom_call.1} parent=1 // pred_fallthru
      _
    // Predicated region
    $region42: #{tpu_custom_call.1} parent=1 // pred_check
      _
    $region43: #{tpu_custom_call.1} parent=1 // pred_check_branch
      %105 = sbr.rel (0) target = $region45
    $region44: #{tpu_custom_call.1} parent=1 // pred_region
      %107 = dma.done [#allocation9], 12288
    $region45: #{tpu_custom_call.1} parent=1 // pred_fallthru
      _
    // Predicated region
    $region46: #{tpu_custom_call.1} parent=1 // pred_check
      _
    $region47: #{tpu_custom_call.1} parent=1 // pred_check_branch
      %109 = sbr.rel (0) target = $region49
    $region48: #{tpu_custom_call.1} parent=1 // pred_region
      %111 = dma.done [#allocation12], 16
    $region49: #{tpu_custom_call.1} parent=1 // pred_fallthru
      _
    %v112 = vld [vmem:[#allocation2] sm:$0xff]
    %v113 = vld [vmem:[#allocation2 + $0x8] sm:$0xff]
    %v114 = vld [vmem:[#allocation2 + $0x10] sm:$0xff]
    %v115 = vld [vmem:[#allocation2 + $0x18] sm:$0xff]
    %v116 = vld [vmem:[#allocation2 + $0x20] sm:$0xff]
    %v117 = vld [vmem:[#allocation2 + $0x28] sm:$0xff]
    %v118 = vld [vmem:[#allocation2 + $0x30] sm:$0xff]
    %v119 = vld [vmem:[#allocation2 + $0x38] sm:$0xff]
    %v120 = vld [vmem:[#allocation2 + $0x40] sm:$0xff]
    %v121 = vld [vmem:[#allocation2 + $0x48] sm:$0xff]
    %v122 = vld [vmem:[#allocation2 + $0x50] sm:$0xff]
    %v123 = vld [vmem:[#allocation2 + $0x58] sm:$0xff]
    %v124 = vld [vmem:[#allocation2 + $0x60] sm:$0xff]
    %v125 = vld [vmem:[#allocation2 + $0x68] sm:$0xff]
    %v126 = vld [vmem:[#allocation2 + $0x70] sm:$0xff]
    %v127 = vld [vmem:[#allocation2 + $0x78] sm:$0xff]
    %v128 = vld [vmem:[#allocation2 + $0x80] sm:$0xff]
    %v129 = vld [vmem:[#allocation2 + $0x88] sm:$0xff]
    %v130 = vld [vmem:[#allocation2 + $0x90] sm:$0xff]
    %v131 = vld [vmem:[#allocation2 + $0x98] sm:$0xff]
    %v132 = vld [vmem:[#allocation2 + $0xa0] sm:$0xff]
    %v133 = vld [vmem:[#allocation2 + $0xa8] sm:$0xff]
    %v134 = vld [vmem:[#allocation2 + $0xb0] sm:$0xff]
    %v135 = vld [vmem:[#allocation2 + $0xb8] sm:$0xff]
    %v136 = vld [vmem:[#allocation2 + $0xc0] sm:$0xff]
    %v137 = vld [vmem:[#allocation2 + $0xc8] sm:$0xff]
    %v138 = vld [vmem:[#allocation2 + $0xd0] sm:$0xff]
    %v139 = vld [vmem:[#allocation2 + $0xd8] sm:$0xff]
    %v140 = vld [vmem:[#allocation2 + $0xe0] sm:$0xff]
    %v141 = vld [vmem:[#allocation2 + $0xe8] sm:$0xff]
    %v142 = vld [vmem:[#allocation2 + $0xf0] sm:$0xff]
    %v143 = vld [vmem:[#allocation2 + $0xf8] sm:$0xff]
    %v144 = vld [vmem:[#allocation2 + $0x100] sm:$0xff]
    %v145 = vld [vmem:[#allocation2 + $0x108] sm:$0xff]
    %v146 = vld [vmem:[#allocation2 + $0x110] sm:$0xff]
    %v147 = vld [vmem:[#allocation2 + $0x118] sm:$0xff]
    %v148 = vld [vmem:[#allocation2 + $0x120] sm:$0xff]
    %v149 = vld [vmem:[#allocation2 + $0x128] sm:$0xff]
    %v150 = vld [vmem:[#allocation2 + $0x130] sm:$0xff]
    %v151 = vld [vmem:[#allocation2 + $0x138] sm:$0xff]
    %v152 = vld [vmem:[#allocation2 + $0x140] sm:$0xff]
    %v153 = vld [vmem:[#allocation2 + $0x148] sm:$0xff]
    %v154 = vld [vmem:[#allocation2 + $0x150] sm:$0xff]
    %v155 = vld [vmem:[#allocation2 + $0x158] sm:$0xff]
    %v156 = vld [vmem:[#allocation2 + $0x160] sm:$0xff]
    %v157 = vld [vmem:[#allocation2 + $0x168] sm:$0xff]
    %v158 = vld [vmem:[#allocation2 + $0x170] sm:$0xff]
    %v159 = vld [vmem:[#allocation2 + $0x178] sm:$0xff]
    %v160 = vld [vmem:[#allocation2 + $0x180] sm:$0xff]
    %v161 = vld [vmem:[#allocation2 + $0x188] sm:$0xff]
    %v162 = vld [vmem:[#allocation2 + $0x190] sm:$0xff]
    %v163 = vld [vmem:[#allocation2 + $0x198] sm:$0xff]
    %v164 = vld [vmem:[#allocation2 + $0x1a0] sm:$0xff]
    %v165 = vld [vmem:[#allocation2 + $0x1a8] sm:$0xff]
    %v166 = vld [vmem:[#allocation2 + $0x1b0] sm:$0xff]
    %v167 = vld [vmem:[#allocation2 + $0x1b8] sm:$0xff]
    %v168 = vld [vmem:[#allocation2 + $0x1c0] sm:$0xff]
    %v169 = vld [vmem:[#allocation2 + $0x1c8] sm:$0xff]
    %v170 = vld [vmem:[#allocation2 + $0x1d0] sm:$0xff]
    %v171 = vld [vmem:[#allocation2 + $0x1d8] sm:$0xff]
    %v172 = vld [vmem:[#allocation2 + $0x1e0] sm:$0xff]
    %v173 = vld [vmem:[#allocation2 + $0x1e8] sm:$0xff]
    %v174 = vld [vmem:[#allocation2 + $0x1f0] sm:$0xff]
    %v175 = vld [vmem:[#allocation2 + $0x1f8] sm:$0xff]
    %v176 = vld [vmem:[#allocation2 + $0x200] sm:$0xff]
    %v177 = vld [vmem:[#allocation2 + $0x208] sm:$0xff]
    %v178 = vld [vmem:[#allocation2 + $0x210] sm:$0xff]
    %v179 = vld [vmem:[#allocation2 + $0x218] sm:$0xff]
    %v180 = vld [vmem:[#allocation2 + $0x220] sm:$0xff]
    %v181 = vld [vmem:[#allocation2 + $0x228] sm:$0xff]
    %v182 = vld [vmem:[#allocation2 + $0x230] sm:$0xff]
    %v183 = vld [vmem:[#allocation2 + $0x238] sm:$0xff]
    %v184 = vld [vmem:[#allocation2 + $0x240] sm:$0xff]
    %v185 = vld [vmem:[#allocation2 + $0x248] sm:$0xff]
    %v186 = vld [vmem:[#allocation2 + $0x250] sm:$0xff]
    %v187 = vld [vmem:[#allocation2 + $0x258] sm:$0xff]
    %v188 = vld [vmem:[#allocation2 + $0x260] sm:$0xff]
    %v189 = vld [vmem:[#allocation2 + $0x268] sm:$0xff]
    %v190 = vld [vmem:[#allocation2 + $0x270] sm:$0xff]
    %v191 = vld [vmem:[#allocation2 + $0x278] sm:$0xff]
    %v192 = vld [vmem:[#allocation2 + $0x280] sm:$0xff]
    %v193 = vld [vmem:[#allocation2 + $0x288] sm:$0xff]
    %v194 = vld [vmem:[#allocation2 + $0x290] sm:$0xff]
    %v195 = vld [vmem:[#allocation2 + $0x298] sm:$0xff]
    %v196 = vld [vmem:[#allocation2 + $0x2a0] sm:$0xff]
    %v197 = vld [vmem:[#allocation2 + $0x2a8] sm:$0xff]
    %v198 = vld [vmem:[#allocation2 + $0x2b0] sm:$0xff]
    %v199 = vld [vmem:[#allocation2 + $0x2b8] sm:$0xff]
    %v200 = vld [vmem:[#allocation2 + $0x2c0] sm:$0xff]
    %v201 = vld [vmem:[#allocation2 + $0x2c8] sm:$0xff]
    %v202 = vld [vmem:[#allocation2 + $0x2d0] sm:$0xff]
    %v203 = vld [vmem:[#allocation2 + $0x2d8] sm:$0xff]
    %v204 = vld [vmem:[#allocation2 + $0x2e0] sm:$0xff]
    %v205 = vld [vmem:[#allocation2 + $0x2e8] sm:$0xff]
    %v206 = vld [vmem:[#allocation2 + $0x2f0] sm:$0xff]
    %v207 = vld [vmem:[#allocation2 + $0x2f8] sm:$0xff]
    %v208 = vld [vmem:[#allocation2 + $0x300] sm:$0xff]
    %v209 = vld [vmem:[#allocation2 + $0x308] sm:$0xff]
    %v210 = vld [vmem:[#allocation2 + $0x310] sm:$0xff]
    %v211 = vld [vmem:[#allocation2 + $0x318] sm:$0xff]
    %v212 = vld [vmem:[#allocation7] sm:$0xff]
    %v213 = vld [vmem:[#allocation7 + $0x8] sm:$0xff]
    %v214 = vld [vmem:[#allocation7 + $0x10] sm:$0xff]
    %v215 = vld [vmem:[#allocation7 + $0x18] sm:$0xff]
    %v216 = vld [vmem:[#allocation7 + $0x20] sm:$0xff]
    %v217 = vld [vmem:[#allocation7 + $0x28] sm:$0xff]
    %v218 = vld [vmem:[#allocation7 + $0x30] sm:$0xff]
    %v219 = vld [vmem:[#allocation7 + $0x38] sm:$0xff]
    %v220 = vld [vmem:[#allocation7 + $0x40] sm:$0xff]
    %v221 = vld [vmem:[#allocation7 + $0x48] sm:$0xff]
    %v222 = vld [vmem:[#allocation7 + $0x50] sm:$0xff]
    %v223 = vld [vmem:[#allocation7 + $0x58] sm:$0xff]
    %v224 = vld [vmem:[#allocation7 + $0x60] sm:$0xff]
    %v225 = vld [vmem:[#allocation7 + $0x68] sm:$0xff]
    %v226 = vld [vmem:[#allocation7 + $0x70] sm:$0xff]
    %v227 = vld [vmem:[#allocation7 + $0x78] sm:$0xff]
    %v228 = vld [vmem:[#allocation7 + $0x80] sm:$0xff]
    %v229 = vld [vmem:[#allocation7 + $0x88] sm:$0xff]
    %v230 = vld [vmem:[#allocation7 + $0x90] sm:$0xff]
    %v231 = vld [vmem:[#allocation7 + $0x98] sm:$0xff]
    %v232 = vld [vmem:[#allocation7 + $0xa0] sm:$0xff]
    %v233 = vld [vmem:[#allocation7 + $0xa8] sm:$0xff]
    %v234 = vld [vmem:[#allocation7 + $0xb0] sm:$0xff]
    %v235 = vld [vmem:[#allocation7 + $0xb8] sm:$0xff]
    %v236 = vld [vmem:[#allocation7 + $0xc0] sm:$0xff]
    %v237 = vld [vmem:[#allocation7 + $0xc8] sm:$0xff]
    %v238 = vld [vmem:[#allocation7 + $0xd0] sm:$0xff]
    %v239 = vld [vmem:[#allocation7 + $0xd8] sm:$0xff]
    %v240 = vld [vmem:[#allocation7 + $0xe0] sm:$0xff]
    %v241 = vld [vmem:[#allocation7 + $0xe8] sm:$0xff]
    %v242 = vld [vmem:[#allocation7 + $0xf0] sm:$0xff]
    %v243 = vld [vmem:[#allocation7 + $0xf8] sm:$0xff]
    %v244 = vld [vmem:[#allocation7 + $0x100] sm:$0xff]
    %v245 = vld [vmem:[#allocation7 + $0x108] sm:$0xff]
    %v246 = vld [vmem:[#allocation7 + $0x110] sm:$0xff]
    %v247 = vld [vmem:[#allocation7 + $0x118] sm:$0xff]
    %v248 = vld [vmem:[#allocation7 + $0x120] sm:$0xff]
    %v249 = vld [vmem:[#allocation7 + $0x128] sm:$0xff]
    %v250 = vld [vmem:[#allocation7 + $0x130] sm:$0xff]
    %v251 = vld [vmem:[#allocation7 + $0x138] sm:$0xff]
    %v252 = vld [vmem:[#allocation7 + $0x140] sm:$0xff]
    %v253 = vld [vmem:[#allocation7 + $0x148] sm:$0xff]
    %v254 = vld [vmem:[#allocation7 + $0x150] sm:$0xff]
    %v255 = vld [vmem:[#allocation7 + $0x158] sm:$0xff]
    %v256 = vld [vmem:[#allocation7 + $0x160] sm:$0xff]
    %v257 = vld [vmem:[#allocation7 + $0x168] sm:$0xff]
    %v258 = vld [vmem:[#allocation7 + $0x170] sm:$0xff]
    %v259 = vld [vmem:[#allocation7 + $0x178] sm:$0xff]
    %v260 = vld [vmem:[#allocation7 + $0x180] sm:$0xff]
    %v261 = vld [vmem:[#allocation7 + $0x188] sm:$0xff]
    %v262 = vld [vmem:[#allocation7 + $0x190] sm:$0xff]
    %v263 = vld [vmem:[#allocation7 + $0x198] sm:$0xff]
    %v264 = vld [vmem:[#allocation7 + $0x1a0] sm:$0xff]
    %v265 = vld [vmem:[#allocation7 + $0x1a8] sm:$0xff]
    %v266 = vld [vmem:[#allocation7 + $0x1b0] sm:$0xff]
    %v267 = vld [vmem:[#allocation7 + $0x1b8] sm:$0xff]
    %v268 = vld [vmem:[#allocation7 + $0x1c0] sm:$0xff]
    %v269 = vld [vmem:[#allocation7 + $0x1c8] sm:$0xff]
    %v270 = vld [vmem:[#allocation7 + $0x1d0] sm:$0xff]
    %v271 = vld [vmem:[#allocation7 + $0x1d8] sm:$0xff]
    %v272 = vld [vmem:[#allocation7 + $0x1e0] sm:$0xff]
    %v273 = vld [vmem:[#allocation7 + $0x1e8] sm:$0xff]
    %v274 = vld [vmem:[#allocation7 + $0x1f0] sm:$0xff]
    %v275 = vld [vmem:[#allocation7 + $0x1f8] sm:$0xff]
    %v276 = vld [vmem:[#allocation7 + $0x200] sm:$0xff]
    %v277 = vld [vmem:[#allocation7 + $0x208] sm:$0xff]
    %v278 = vld [vmem:[#allocation7 + $0x210] sm:$0xff]
    %v279 = vld [vmem:[#allocation7 + $0x218] sm:$0xff]
    %v280 = vld [vmem:[#allocation7 + $0x220] sm:$0xff]
    %v281 = vld [vmem:[#allocation7 + $0x228] sm:$0xff]
    %v282 = vld [vmem:[#allocation7 + $0x230] sm:$0xff]
    %v283 = vld [vmem:[#allocation7 + $0x238] sm:$0xff]
    %v284 = vld [vmem:[#allocation7 + $0x240] sm:$0xff]
    %v285 = vld [vmem:[#allocation7 + $0x248] sm:$0xff]
    %v286 = vld [vmem:[#allocation7 + $0x250] sm:$0xff]
    %v287 = vld [vmem:[#allocation7 + $0x258] sm:$0xff]
    %v288 = vld [vmem:[#allocation7 + $0x260] sm:$0xff]
    %v289 = vld [vmem:[#allocation7 + $0x268] sm:$0xff]
    %v290 = vld [vmem:[#allocation7 + $0x270] sm:$0xff]
    %v291 = vld [vmem:[#allocation7 + $0x278] sm:$0xff]
    %v292 = vld [vmem:[#allocation7 + $0x280] sm:$0xff]
    %v293 = vld [vmem:[#allocation7 + $0x288] sm:$0xff]
    %v294 = vld [vmem:[#allocation7 + $0x290] sm:$0xff]
    %v295 = vld [vmem:[#allocation7 + $0x298] sm:$0xff]
    %v296 = vld [vmem:[#allocation7 + $0x2a0] sm:$0xff]
    %v297 = vld [vmem:[#allocation7 + $0x2a8] sm:$0xff]
    %v298 = vld [vmem:[#allocation7 + $0x2b0] sm:$0xff]
    %v299 = vld [vmem:[#allocation7 + $0x2b8] sm:$0xff]
    %v300 = vld [vmem:[#allocation7 + $0x2c0] sm:$0xff]
    %v301 = vld [vmem:[#allocation7 + $0x2c8] sm:$0xff]
    %v302 = vld [vmem:[#allocation7 + $0x2d0] sm:$0xff]
    %v303 = vld [vmem:[#allocation7 + $0x2d8] sm:$0xff]
    %v304 = vld [vmem:[#allocation7 + $0x2e0] sm:$0xff]
    %v305 = vld [vmem:[#allocation7 + $0x2e8] sm:$0xff]
    %v306 = vld [vmem:[#allocation7 + $0x2f0] sm:$0xff]
    %v307 = vld [vmem:[#allocation7 + $0x2f8] sm:$0xff]
    %v308 = vld [vmem:[#allocation7 + $0x300] sm:$0xff]
    %v309 = vld [vmem:[#allocation7 + $0x308] sm:$0xff]
    %v310 = vld [vmem:[#allocation7 + $0x310] sm:$0xff]
    %v311 = vld [vmem:[#allocation7 + $0x318] sm:$0xff]
    %v312 = vld [vmem:[#allocation7 + $0x320] sm:$0xff]
    %v313 = vld [vmem:[#allocation7 + $0x328] sm:$0xff]
    %v314 = vld [vmem:[#allocation7 + $0x330] sm:$0xff]
    %v315 = vld [vmem:[#allocation7 + $0x338] sm:$0xff]
    %v316 = vld [vmem:[#allocation7 + $0x340] sm:$0xff]
    %v317 = vld [vmem:[#allocation7 + $0x348] sm:$0xff]
    %v318 = vld [vmem:[#allocation7 + $0x350] sm:$0xff]
    %v319 = vld [vmem:[#allocation7 + $0x358] sm:$0xff]
    %v320 = vld [vmem:[#allocation7 + $0x360] sm:$0xff]
    %v321 = vld [vmem:[#allocation7 + $0x368] sm:$0xff]
    %v322 = vld [vmem:[#allocation7 + $0x370] sm:$0xff]
    %v323 = vld [vmem:[#allocation7 + $0x378] sm:$0xff]
    %v324 = vld [vmem:[#allocation7 + $0x380] sm:$0xff]
    %v325 = vld [vmem:[#allocation7 + $0x388] sm:$0xff]
    %v326 = vld [vmem:[#allocation7 + $0x390] sm:$0xff]
    %v327 = vld [vmem:[#allocation7 + $0x398] sm:$0xff]
    %v328 = vld [vmem:[#allocation7 + $0x3a0] sm:$0xff]
    %v329 = vld [vmem:[#allocation7 + $0x3a8] sm:$0xff]
    %v330 = vld [vmem:[#allocation7 + $0x3b0] sm:$0xff]
    %v331 = vld [vmem:[#allocation7 + $0x3b8] sm:$0xff]
    %v332 = vld [vmem:[#allocation7 + $0x3c0] sm:$0xff]
    %v333 = vld [vmem:[#allocation7 + $0x3c8] sm:$0xff]
    %v334 = vld [vmem:[#allocation7 + $0x3d0] sm:$0xff]
    %v335 = vld [vmem:[#allocation7 + $0x3d8] sm:$0xff]
    %v336 = vld [vmem:[#allocation7 + $0x3e0] sm:$0xff]
    %v337 = vld [vmem:[#allocation7 + $0x3e8] sm:$0xff]
    %v338 = vld [vmem:[#allocation7 + $0x3f0] sm:$0xff]
    %v339 = vld [vmem:[#allocation7 + $0x3f8] sm:$0xff]
    %v340 = vld [vmem:[#allocation7 + $0x400] sm:$0xff]
    %v341 = vld [vmem:[#allocation7 + $0x408] sm:$0xff]
    %v342 = vld [vmem:[#allocation7 + $0x410] sm:$0xff]
    %v343 = vld [vmem:[#allocation7 + $0x418] sm:$0xff]
    %v344 = vld [vmem:[#allocation7 + $0x420] sm:$0xff]
    %v345 = vld [vmem:[#allocation7 + $0x428] sm:$0xff]
    %v346 = vld [vmem:[#allocation7 + $0x430] sm:$0xff]
    %v347 = vld [vmem:[#allocation7 + $0x438] sm:$0xff]
    %v348 = vld [vmem:[#allocation7 + $0x440] sm:$0xff]
    %v349 = vld [vmem:[#allocation7 + $0x448] sm:$0xff]
    %v350 = vld [vmem:[#allocation7 + $0x450] sm:$0xff]
    %v351 = vld [vmem:[#allocation7 + $0x458] sm:$0xff]
    %v352 = vld [vmem:[#allocation7 + $0x460] sm:$0xff]
    %v353 = vld [vmem:[#allocation7 + $0x468] sm:$0xff]
    %v354 = vld [vmem:[#allocation7 + $0x470] sm:$0xff]
    %v355 = vld [vmem:[#allocation7 + $0x478] sm:$0xff]
    %v356 = vld [vmem:[#allocation7 + $0x480] sm:$0xff]
    %v357 = vld [vmem:[#allocation7 + $0x488] sm:$0xff]
    %v358 = vld [vmem:[#allocation7 + $0x490] sm:$0xff]
    %v359 = vld [vmem:[#allocation7 + $0x498] sm:$0xff]
    %v360 = vld [vmem:[#allocation7 + $0x4a0] sm:$0xff]
    %v361 = vld [vmem:[#allocation7 + $0x4a8] sm:$0xff]
    %v362 = vld [vmem:[#allocation7 + $0x4b0] sm:$0xff]
    %v363 = vld [vmem:[#allocation7 + $0x4b8] sm:$0xff]
    %v364 = vld [vmem:[#allocation7 + $0x4c0] sm:$0xff]
    %v365 = vld [vmem:[#allocation7 + $0x4c8] sm:$0xff]
    %v366 = vld [vmem:[#allocation7 + $0x4d0] sm:$0xff]
    %v367 = vld [vmem:[#allocation7 + $0x4d8] sm:$0xff]
    %v368 = vld [vmem:[#allocation7 + $0x4e0] sm:$0xff]
    %v369 = vld [vmem:[#allocation7 + $0x4e8] sm:$0xff]
    %v370 = vld [vmem:[#allocation7 + $0x4f0] sm:$0xff]
    %v371 = vld [vmem:[#allocation7 + $0x4f8] sm:$0xff]
    %v372 = vld [vmem:[#allocation7 + $0x500] sm:$0xff]
    %v373 = vld [vmem:[#allocation7 + $0x508] sm:$0xff]
    %v374 = vld [vmem:[#allocation7 + $0x510] sm:$0xff]
    %v375 = vld [vmem:[#allocation7 + $0x518] sm:$0xff]
    %v376 = vld [vmem:[#allocation7 + $0x520] sm:$0xff]
    %v377 = vld [vmem:[#allocation7 + $0x528] sm:$0xff]
    %v378 = vld [vmem:[#allocation7 + $0x530] sm:$0xff]
    %v379 = vld [vmem:[#allocation7 + $0x538] sm:$0xff]
    %v380 = vld [vmem:[#allocation7 + $0x540] sm:$0xff]
    %v381 = vld [vmem:[#allocation7 + $0x548] sm:$0xff]
    %v382 = vld [vmem:[#allocation7 + $0x550] sm:$0xff]
    %v383 = vld [vmem:[#allocation7 + $0x558] sm:$0xff]
    %v384 = vld [vmem:[#allocation7 + $0x560] sm:$0xff]
    %v385 = vld [vmem:[#allocation7 + $0x568] sm:$0xff]
    %v386 = vld [vmem:[#allocation7 + $0x570] sm:$0xff]
    %v387 = vld [vmem:[#allocation7 + $0x578] sm:$0xff]
    %v388 = vld [vmem:[#allocation7 + $0x580] sm:$0xff]
    %v389 = vld [vmem:[#allocation7 + $0x588] sm:$0xff]
    %v390 = vld [vmem:[#allocation7 + $0x590] sm:$0xff]
    %v391 = vld [vmem:[#allocation7 + $0x598] sm:$0xff]
    %v392 = vld [vmem:[#allocation7 + $0x5a0] sm:$0xff]
    %v393 = vld [vmem:[#allocation7 + $0x5a8] sm:$0xff]
    %v394 = vld [vmem:[#allocation7 + $0x5b0] sm:$0xff]
    %v395 = vld [vmem:[#allocation7 + $0x5b8] sm:$0xff]
    %v396 = vld [vmem:[#allocation7 + $0x5c0] sm:$0xff]
    %v397 = vld [vmem:[#allocation7 + $0x5c8] sm:$0xff]
    %v398 = vld [vmem:[#allocation7 + $0x5d0] sm:$0xff]
    %v399 = vld [vmem:[#allocation7 + $0x5d8] sm:$0xff]
    %v400 = vld [vmem:[#allocation7 + $0x5e0] sm:$0xff]
    %v401 = vld [vmem:[#allocation7 + $0x5e8] sm:$0xff]
    %v402 = vld [vmem:[#allocation7 + $0x5f0] sm:$0xff]
    %v403 = vld [vmem:[#allocation7 + $0x5f8] sm:$0xff]
    %v404 = vld [vmem:[#allocation7 + $0x600] sm:$0xff]
    %v405 = vld [vmem:[#allocation7 + $0x608] sm:$0xff]
    %v406 = vld [vmem:[#allocation7 + $0x610] sm:$0xff]
    %v407 = vld [vmem:[#allocation7 + $0x618] sm:$0xff]
    %v408 = vld [vmem:[#allocation7 + $0x620] sm:$0xff]
    %v409 = vld [vmem:[#allocation7 + $0x628] sm:$0xff]
    %v410 = vld [vmem:[#allocation7 + $0x630] sm:$0xff]
    %v411 = vld [vmem:[#allocation7 + $0x638] sm:$0xff]
    %v412 = vld [vmem:[#allocation7 + $0x640] sm:$0xff]
    %v413 = vld [vmem:[#allocation7 + $0x648] sm:$0xff]
    %v414 = vld [vmem:[#allocation7 + $0x650] sm:$0xff]
    %v415 = vld [vmem:[#allocation7 + $0x658] sm:$0xff]
    %v416 = vld [vmem:[#allocation7 + $0x660] sm:$0xff]
    %v417 = vld [vmem:[#allocation7 + $0x668] sm:$0xff]
    %v418 = vld [vmem:[#allocation7 + $0x670] sm:$0xff]
    %v419 = vld [vmem:[#allocation7 + $0x678] sm:$0xff]
    %v420 = vld [vmem:[#allocation7 + $0x680] sm:$0xff]
    %v421 = vld [vmem:[#allocation7 + $0x688] sm:$0xff]
    %v422 = vld [vmem:[#allocation7 + $0x690] sm:$0xff]
    %v423 = vld [vmem:[#allocation7 + $0x698] sm:$0xff]
    %v424 = vld [vmem:[#allocation7 + $0x6a0] sm:$0xff]
    %v425 = vld [vmem:[#allocation7 + $0x6a8] sm:$0xff]
    %v426 = vld [vmem:[#allocation7 + $0x6b0] sm:$0xff]
    %v427 = vld [vmem:[#allocation7 + $0x6b8] sm:$0xff]
    %v428 = vld [vmem:[#allocation7 + $0x6c0] sm:$0xff]
    %v429 = vld [vmem:[#allocation7 + $0x6c8] sm:$0xff]
    %v430 = vld [vmem:[#allocation7 + $0x6d0] sm:$0xff]
    %v431 = vld [vmem:[#allocation7 + $0x6d8] sm:$0xff]
    %v432 = vld [vmem:[#allocation7 + $0x6e0] sm:$0xff]
    %v433 = vld [vmem:[#allocation7 + $0x6e8] sm:$0xff]
    %v434 = vld [vmem:[#allocation7 + $0x6f0] sm:$0xff]
    %v435 = vld [vmem:[#allocation7 + $0x6f8] sm:$0xff]
    %v436 = vld [vmem:[#allocation7 + $0x700] sm:$0xff]
    %v437 = vld [vmem:[#allocation7 + $0x708] sm:$0xff]
    %v438 = vld [vmem:[#allocation7 + $0x710] sm:$0xff]
    %v439 = vld [vmem:[#allocation7 + $0x718] sm:$0xff]
    %v440 = vld [vmem:[#allocation7 + $0x720] sm:$0xff]
    %v441 = vld [vmem:[#allocation7 + $0x728] sm:$0xff]
    %v442 = vld [vmem:[#allocation7 + $0x730] sm:$0xff]
    %v443 = vld [vmem:[#allocation7 + $0x738] sm:$0xff]
    %v444 = vld [vmem:[#allocation7 + $0x740] sm:$0xff]
    %v445 = vld [vmem:[#allocation7 + $0x748] sm:$0xff]
    %v446 = vld [vmem:[#allocation7 + $0x750] sm:$0xff]
    %v447 = vld [vmem:[#allocation7 + $0x758] sm:$0xff]
    %v448 = vld [vmem:[#allocation7 + $0x760] sm:$0xff]
    %v449 = vld [vmem:[#allocation7 + $0x768] sm:$0xff]
    %v450 = vld [vmem:[#allocation7 + $0x770] sm:$0xff]
    %v451 = vld [vmem:[#allocation7 + $0x778] sm:$0xff]
    %v452 = vld [vmem:[#allocation7 + $0x780] sm:$0xff]
    %v453 = vld [vmem:[#allocation7 + $0x788] sm:$0xff]
    %v454 = vld [vmem:[#allocation7 + $0x790] sm:$0xff]
    %v455 = vld [vmem:[#allocation7 + $0x798] sm:$0xff]
    %v456 = vld [vmem:[#allocation7 + $0x7a0] sm:$0xff]
    %v457 = vld [vmem:[#allocation7 + $0x7a8] sm:$0xff]
    %v458 = vld [vmem:[#allocation7 + $0x7b0] sm:$0xff]
    %v459 = vld [vmem:[#allocation7 + $0x7b8] sm:$0xff]
    %v460 = vld [vmem:[#allocation7 + $0x7c0] sm:$0xff]
    %v461 = vld [vmem:[#allocation7 + $0x7c8] sm:$0xff]
    %v462 = vld [vmem:[#allocation7 + $0x7d0] sm:$0xff]
    %v463 = vld [vmem:[#allocation7 + $0x7d8] sm:$0xff]
    %v464 = vld [vmem:[#allocation7 + $0x7e0] sm:$0xff]
    %v465 = vld [vmem:[#allocation7 + $0x7e8] sm:$0xff]
    %v466 = vld [vmem:[#allocation7 + $0x7f0] sm:$0xff]
    %v467 = vld [vmem:[#allocation7 + $0x7f8] sm:$0xff]
    %v468 = vld [vmem:[#allocation7 + $0x800] sm:$0xff]
    %v469 = vld [vmem:[#allocation7 + $0x808] sm:$0xff]
    %v470 = vld [vmem:[#allocation7 + $0x810] sm:$0xff]
    %v471 = vld [vmem:[#allocation7 + $0x818] sm:$0xff]
    %v472 = vld [vmem:[#allocation7 + $0x820] sm:$0xff]
    %v473 = vld [vmem:[#allocation7 + $0x828] sm:$0xff]
    %v474 = vld [vmem:[#allocation7 + $0x830] sm:$0xff]
    %v475 = vld [vmem:[#allocation7 + $0x838] sm:$0xff]
    %v476 = vld [vmem:[#allocation7 + $0x840] sm:$0xff]
    %v477 = vld [vmem:[#allocation7 + $0x848] sm:$0xff]
    %v478 = vld [vmem:[#allocation7 + $0x850] sm:$0xff]
    %v479 = vld [vmem:[#allocation7 + $0x858] sm:$0xff]
    %v480 = vld [vmem:[#allocation7 + $0x860] sm:$0xff]
    %v481 = vld [vmem:[#allocation7 + $0x868] sm:$0xff]
    %v482 = vld [vmem:[#allocation7 + $0x870] sm:$0xff]
    %v483 = vld [vmem:[#allocation7 + $0x878] sm:$0xff]
    %v484 = vld [vmem:[#allocation7 + $0x880] sm:$0xff]
    %v485 = vld [vmem:[#allocation7 + $0x888] sm:$0xff]
    %v486 = vld [vmem:[#allocation7 + $0x890] sm:$0xff]
    %v487 = vld [vmem:[#allocation7 + $0x898] sm:$0xff]
    %v488 = vld [vmem:[#allocation7 + $0x8a0] sm:$0xff]
    %v489 = vld [vmem:[#allocation7 + $0x8a8] sm:$0xff]
    %v490 = vld [vmem:[#allocation7 + $0x8b0] sm:$0xff]
    %v491 = vld [vmem:[#allocation7 + $0x8b8] sm:$0xff]
    %v492 = vld [vmem:[#allocation7 + $0x8c0] sm:$0xff]
    %v493 = vld [vmem:[#allocation7 + $0x8c8] sm:$0xff]
    %v494 = vld [vmem:[#allocation7 + $0x8d0] sm:$0xff]
    %v495 = vld [vmem:[#allocation7 + $0x8d8] sm:$0xff]
    %v496 = vld [vmem:[#allocation7 + $0x8e0] sm:$0xff]
    %v497 = vld [vmem:[#allocation7 + $0x8e8] sm:$0xff]
    %v498 = vld [vmem:[#allocation7 + $0x8f0] sm:$0xff]
    %v499 = vld [vmem:[#allocation7 + $0x8f8] sm:$0xff]
    %v500 = vld [vmem:[#allocation7 + $0x900] sm:$0xff]
    %v501 = vld [vmem:[#allocation7 + $0x908] sm:$0xff]
    %v502 = vld [vmem:[#allocation7 + $0x910] sm:$0xff]
    %v503 = vld [vmem:[#allocation7 + $0x918] sm:$0xff]
    %v504 = vld [vmem:[#allocation7 + $0x920] sm:$0xff]
    %v505 = vld [vmem:[#allocation7 + $0x928] sm:$0xff]
    %v506 = vld [vmem:[#allocation7 + $0x930] sm:$0xff]
    %v507 = vld [vmem:[#allocation7 + $0x938] sm:$0xff]
    %v508 = vld [vmem:[#allocation7 + $0x940] sm:$0xff]
    %v509 = vld [vmem:[#allocation7 + $0x948] sm:$0xff]
    %v510 = vld [vmem:[#allocation7 + $0x950] sm:$0xff]
    %v511 = vld [vmem:[#allocation7 + $0x958] sm:$0xff]
    %v512 = vld [vmem:[#allocation7 + $0x960] sm:$0xff]
    %v513 = vld [vmem:[#allocation7 + $0x968] sm:$0xff]
    %v514 = vld [vmem:[#allocation7 + $0x970] sm:$0xff]
    %v515 = vld [vmem:[#allocation7 + $0x978] sm:$0xff]
    %v516 = vld [vmem:[#allocation7 + $0x980] sm:$0xff]
    %v517 = vld [vmem:[#allocation7 + $0x988] sm:$0xff]
    %v518 = vld [vmem:[#allocation7 + $0x990] sm:$0xff]
    %v519 = vld [vmem:[#allocation7 + $0x998] sm:$0xff]
    %v520 = vld [vmem:[#allocation7 + $0x9a0] sm:$0xff]
    %v521 = vld [vmem:[#allocation7 + $0x9a8] sm:$0xff]
    %v522 = vld [vmem:[#allocation7 + $0x9b0] sm:$0xff]
    %v523 = vld [vmem:[#allocation7 + $0x9b8] sm:$0xff]
    %v524 = vld [vmem:[#allocation7 + $0x9c0] sm:$0xff]
    %v525 = vld [vmem:[#allocation7 + $0x9c8] sm:$0xff]
    %v526 = vld [vmem:[#allocation7 + $0x9d0] sm:$0xff]
    %v527 = vld [vmem:[#allocation7 + $0x9d8] sm:$0xff]
    %v528 = vld [vmem:[#allocation7 + $0x9e0] sm:$0xff]
    %v529 = vld [vmem:[#allocation7 + $0x9e8] sm:$0xff]
    %v530 = vld [vmem:[#allocation7 + $0x9f0] sm:$0xff]
    %v531 = vld [vmem:[#allocation7 + $0x9f8] sm:$0xff]
    %v532 = vld [vmem:[#allocation7 + $0xa00] sm:$0xff]
    %v533 = vld [vmem:[#allocation7 + $0xa08] sm:$0xff]
    %v534 = vld [vmem:[#allocation7 + $0xa10] sm:$0xff]
    %v535 = vld [vmem:[#allocation7 + $0xa18] sm:$0xff]
    %v536 = vld [vmem:[#allocation7 + $0xa20] sm:$0xff]
    %v537 = vld [vmem:[#allocation7 + $0xa28] sm:$0xff]
    %v538 = vld [vmem:[#allocation7 + $0xa30] sm:$0xff]
    %v539 = vld [vmem:[#allocation7 + $0xa38] sm:$0xff]
    %v540 = vld [vmem:[#allocation7 + $0xa40] sm:$0xff]
    %v541 = vld [vmem:[#allocation7 + $0xa48] sm:$0xff]
    %v542 = vld [vmem:[#allocation7 + $0xa50] sm:$0xff]
    %v543 = vld [vmem:[#allocation7 + $0xa58] sm:$0xff]
    %v544 = vld [vmem:[#allocation7 + $0xa60] sm:$0xff]
    %v545 = vld [vmem:[#allocation7 + $0xa68] sm:$0xff]
    %v546 = vld [vmem:[#allocation7 + $0xa70] sm:$0xff]
    %v547 = vld [vmem:[#allocation7 + $0xa78] sm:$0xff]
    %v548 = vld [vmem:[#allocation7 + $0xa80] sm:$0xff]
    %v549 = vld [vmem:[#allocation7 + $0xa88] sm:$0xff]
    %v550 = vld [vmem:[#allocation7 + $0xa90] sm:$0xff]
    %v551 = vld [vmem:[#allocation7 + $0xa98] sm:$0xff]
    %v552 = vld [vmem:[#allocation7 + $0xaa0] sm:$0xff]
    %v553 = vld [vmem:[#allocation7 + $0xaa8] sm:$0xff]
    %v554 = vld [vmem:[#allocation7 + $0xab0] sm:$0xff]
    %v555 = vld [vmem:[#allocation7 + $0xab8] sm:$0xff]
    %v556 = vld [vmem:[#allocation7 + $0xac0] sm:$0xff]
    %v557 = vld [vmem:[#allocation7 + $0xac8] sm:$0xff]
    %v558 = vld [vmem:[#allocation7 + $0xad0] sm:$0xff]
    %v559 = vld [vmem:[#allocation7 + $0xad8] sm:$0xff]
    %v560 = vld [vmem:[#allocation7 + $0xae0] sm:$0xff]
    %v561 = vld [vmem:[#allocation7 + $0xae8] sm:$0xff]
    %v562 = vld [vmem:[#allocation7 + $0xaf0] sm:$0xff]
    %v563 = vld [vmem:[#allocation7 + $0xaf8] sm:$0xff]
    %v564 = vld [vmem:[#allocation7 + $0xb00] sm:$0xff]
    %v565 = vld [vmem:[#allocation7 + $0xb08] sm:$0xff]
    %v566 = vld [vmem:[#allocation7 + $0xb10] sm:$0xff]
    %v567 = vld [vmem:[#allocation7 + $0xb18] sm:$0xff]
    %v568 = vld [vmem:[#allocation7 + $0xb20] sm:$0xff]
    %v569 = vld [vmem:[#allocation7 + $0xb28] sm:$0xff]
    %v570 = vld [vmem:[#allocation7 + $0xb30] sm:$0xff]
    %v571 = vld [vmem:[#allocation7 + $0xb38] sm:$0xff]
    %v572 = vld [vmem:[#allocation7 + $0xb40] sm:$0xff]
    %v573 = vld [vmem:[#allocation7 + $0xb48] sm:$0xff]
    %v574 = vld [vmem:[#allocation7 + $0xb50] sm:$0xff]
    %v575 = vld [vmem:[#allocation7 + $0xb58] sm:$0xff]
    %v576 = vld [vmem:[#allocation7 + $0xb60] sm:$0xff]
    %v577 = vld [vmem:[#allocation7 + $0xb68] sm:$0xff]
    %v578 = vld [vmem:[#allocation7 + $0xb70] sm:$0xff]
    %v579 = vld [vmem:[#allocation7 + $0xb78] sm:$0xff]
    %v580 = vld [vmem:[#allocation7 + $0xb80] sm:$0xff]
    %v581 = vld [vmem:[#allocation7 + $0xb88] sm:$0xff]
    %v582 = vld [vmem:[#allocation7 + $0xb90] sm:$0xff]
    %v583 = vld [vmem:[#allocation7 + $0xb98] sm:$0xff]
    %v584 = vld [vmem:[#allocation7 + $0xba0] sm:$0xff]
    %v585 = vld [vmem:[#allocation7 + $0xba8] sm:$0xff]
    %v586 = vld [vmem:[#allocation7 + $0xbb0] sm:$0xff]
    %v587 = vld [vmem:[#allocation7 + $0xbb8] sm:$0xff]
    %v588 = vld [vmem:[#allocation7 + $0xbc0] sm:$0xff]
    %v589 = vld [vmem:[#allocation7 + $0xbc8] sm:$0xff]
    %v590 = vld [vmem:[#allocation7 + $0xbd0] sm:$0xff]
    %v591 = vld [vmem:[#allocation7 + $0xbd8] sm:$0xff]
    %v592 = vld [vmem:[#allocation7 + $0xbe0] sm:$0xff]
    %v593 = vld [vmem:[#allocation7 + $0xbe8] sm:$0xff]
    %v594 = vld [vmem:[#allocation7 + $0xbf0] sm:$0xff]
    %v595 = vld [vmem:[#allocation7 + $0xbf8] sm:$0xff]
    %v696 = vunpack.c.l.b16 %v112
    %v697 = vunpack.c.h.b16 %v112
    %v698 = vunpack.c.l.b16 %v113
    %v699 = vunpack.c.h.b16 %v113
    %v700 = vunpack.c.l.b16 %v114
    %v701 = vunpack.c.h.b16 %v114
    %v702 = vunpack.c.l.b16 %v115
    %v703 = vunpack.c.h.b16 %v115
    %v704 = vunpack.c.l.b16 %v116
    %v705 = vunpack.c.h.b16 %v116
    %v706 = vunpack.c.l.b16 %v117
    %v707 = vunpack.c.h.b16 %v117
    %v708 = vunpack.c.l.b16 %v118
    %v709 = vunpack.c.h.b16 %v118
    %v710 = vunpack.c.l.b16 %v119
    %v711 = vunpack.c.h.b16 %v119
    %v712 = vunpack.c.l.b16 %v120
    %v713 = vunpack.c.h.b16 %v120
    %v714 = vunpack.c.l.b16 %v121
    %v715 = vunpack.c.h.b16 %v121
    %v716 = vunpack.c.l.b16 %v122
    %v717 = vunpack.c.h.b16 %v122
    %v718 = vunpack.c.l.b16 %v123
    %v719 = vunpack.c.h.b16 %v123
    %v720 = vunpack.c.l.b16 %v124
    %v721 = vunpack.c.h.b16 %v124
    %v722 = vunpack.c.l.b16 %v125
    %v723 = vunpack.c.h.b16 %v125
    %v724 = vunpack.c.l.b16 %v126
    %v725 = vunpack.c.h.b16 %v126
    %v726 = vunpack.c.l.b16 %v127
    %v727 = vunpack.c.h.b16 %v127
    %v728 = vunpack.c.l.b16 %v128
    %v729 = vunpack.c.h.b16 %v128
    %v730 = vunpack.c.l.b16 %v129
    %v731 = vunpack.c.h.b16 %v129
    %v732 = vunpack.c.l.b16 %v130
    %v733 = vunpack.c.h.b16 %v130
    %v734 = vunpack.c.l.b16 %v131
    %v735 = vunpack.c.h.b16 %v131
    %v736 = vunpack.c.l.b16 %v132
    %v737 = vunpack.c.h.b16 %v132
    %v738 = vunpack.c.l.b16 %v133
    %v739 = vunpack.c.h.b16 %v133
    %v740 = vunpack.c.l.b16 %v134
    %v741 = vunpack.c.h.b16 %v134
    %v742 = vunpack.c.l.b16 %v135
    %v743 = vunpack.c.h.b16 %v135
    %v744 = vunpack.c.l.b16 %v136
    %v745 = vunpack.c.h.b16 %v136
    %v746 = vunpack.c.l.b16 %v137
    %v747 = vunpack.c.h.b16 %v137
    %v748 = vunpack.c.l.b16 %v138
    %v749 = vunpack.c.h.b16 %v138
    %v750 = vunpack.c.l.b16 %v139
    %v751 = vunpack.c.h.b16 %v139
    %v752 = vunpack.c.l.b16 %v140
    %v753 = vunpack.c.h.b16 %v140
    %v754 = vunpack.c.l.b16 %v141
    %v755 = vunpack.c.h.b16 %v141
    %v756 = vunpack.c.l.b16 %v142
    %v757 = vunpack.c.h.b16 %v142
    %v758 = vunpack.c.l.b16 %v143
    %v759 = vunpack.c.h.b16 %v143
    %v760 = vunpack.c.l.b16 %v144
    %v761 = vunpack.c.h.b16 %v144
    %v762 = vunpack.c.l.b16 %v145
    %v763 = vunpack.c.h.b16 %v145
    %v764 = vunpack.c.l.b16 %v146
    %v765 = vunpack.c.h.b16 %v146
    %v766 = vunpack.c.l.b16 %v147
    %v767 = vunpack.c.h.b16 %v147
    %v768 = vunpack.c.l.b16 %v148
    %v769 = vunpack.c.h.b16 %v148
    %v770 = vunpack.c.l.b16 %v149
    %v771 = vunpack.c.h.b16 %v149
    %v772 = vunpack.c.l.b16 %v150
    %v773 = vunpack.c.h.b16 %v150
    %v774 = vunpack.c.l.b16 %v151
    %v775 = vunpack.c.h.b16 %v151
    %v776 = vunpack.c.l.b16 %v152
    %v777 = vunpack.c.h.b16 %v152
    %v778 = vunpack.c.l.b16 %v153
    %v779 = vunpack.c.h.b16 %v153
    %v780 = vunpack.c.l.b16 %v154
    %v781 = vunpack.c.h.b16 %v154
    %v782 = vunpack.c.l.b16 %v155
    %v783 = vunpack.c.h.b16 %v155
    %v784 = vunpack.c.l.b16 %v156
    %v785 = vunpack.c.h.b16 %v156
    %v786 = vunpack.c.l.b16 %v157
    %v787 = vunpack.c.h.b16 %v157
    %v788 = vunpack.c.l.b16 %v158
    %v789 = vunpack.c.h.b16 %v158
    %v790 = vunpack.c.l.b16 %v159
    %v791 = vunpack.c.h.b16 %v159
    %v792 = vunpack.c.l.b16 %v160
    %v793 = vunpack.c.h.b16 %v160
    %v794 = vunpack.c.l.b16 %v161
    %v795 = vunpack.c.h.b16 %v161
    %v796 = vunpack.c.l.b16 %v162
    %v797 = vunpack.c.h.b16 %v162
    %v798 = vunpack.c.l.b16 %v163
    %v799 = vunpack.c.h.b16 %v163
    %v800 = vunpack.c.l.b16 %v164
    %v801 = vunpack.c.h.b16 %v164
    %v802 = vunpack.c.l.b16 %v165
    %v803 = vunpack.c.h.b16 %v165
    %v804 = vunpack.c.l.b16 %v166
    %v805 = vunpack.c.h.b16 %v166
    %v806 = vunpack.c.l.b16 %v167
    %v807 = vunpack.c.h.b16 %v167
    %v808 = vunpack.c.l.b16 %v168
    %v809 = vunpack.c.h.b16 %v168
    %v810 = vunpack.c.l.b16 %v169
    %v811 = vunpack.c.h.b16 %v169
    %v812 = vunpack.c.l.b16 %v170
    %v813 = vunpack.c.h.b16 %v170
    %v814 = vunpack.c.l.b16 %v171
    %v815 = vunpack.c.h.b16 %v171
    %v816 = vunpack.c.l.b16 %v172
    %v817 = vunpack.c.h.b16 %v172
    %v818 = vunpack.c.l.b16 %v173
    %v819 = vunpack.c.h.b16 %v173
    %v820 = vunpack.c.l.b16 %v174
    %v821 = vunpack.c.h.b16 %v174
    %v822 = vunpack.c.l.b16 %v175
    %v823 = vunpack.c.h.b16 %v175
    %v824 = vunpack.c.l.b16 %v176
    %v825 = vunpack.c.h.b16 %v176
    %v826 = vunpack.c.l.b16 %v177
    %v827 = vunpack.c.h.b16 %v177
    %v828 = vunpack.c.l.b16 %v178
    %v829 = vunpack.c.h.b16 %v178
    %v830 = vunpack.c.l.b16 %v179
    %v831 = vunpack.c.h.b16 %v179
    %v832 = vunpack.c.l.b16 %v180
    %v833 = vunpack.c.h.b16 %v180
    %v834 = vunpack.c.l.b16 %v181
    %v835 = vunpack.c.h.b16 %v181
    %v836 = vunpack.c.l.b16 %v182
    %v837 = vunpack.c.h.b16 %v182
    %v838 = vunpack.c.l.b16 %v183
    %v839 = vunpack.c.h.b16 %v183
    %v840 = vunpack.c.l.b16 %v184
    %v841 = vunpack.c.h.b16 %v184
    %v842 = vunpack.c.l.b16 %v185
    %v843 = vunpack.c.h.b16 %v185
    %v844 = vunpack.c.l.b16 %v186
    %v845 = vunpack.c.h.b16 %v186
    %v846 = vunpack.c.l.b16 %v187
    %v847 = vunpack.c.h.b16 %v187
    %v848 = vunpack.c.l.b16 %v188
    %v849 = vunpack.c.h.b16 %v188
    %v850 = vunpack.c.l.b16 %v189
    %v851 = vunpack.c.h.b16 %v189
    %v852 = vunpack.c.l.b16 %v190
    %v853 = vunpack.c.h.b16 %v190
    %v854 = vunpack.c.l.b16 %v191
    %v855 = vunpack.c.h.b16 %v191
    %v856 = vunpack.c.l.b16 %v192
    %v857 = vunpack.c.h.b16 %v192
    %v858 = vunpack.c.l.b16 %v193
    %v859 = vunpack.c.h.b16 %v193
    %v860 = vunpack.c.l.b16 %v194
    %v861 = vunpack.c.h.b16 %v194
    %v862 = vunpack.c.l.b16 %v195
    %v863 = vunpack.c.h.b16 %v195
    %v864 = vunpack.c.l.b16 %v196
    %v865 = vunpack.c.h.b16 %v196
    %v866 = vunpack.c.l.b16 %v197
    %v867 = vunpack.c.h.b16 %v197
    %v868 = vunpack.c.l.b16 %v198
    %v869 = vunpack.c.h.b16 %v198
    %v870 = vunpack.c.l.b16 %v199
    %v871 = vunpack.c.h.b16 %v199
    %v872 = vunpack.c.l.b16 %v200
    %v873 = vunpack.c.h.b16 %v200
    %v874 = vunpack.c.l.b16 %v201
    %v875 = vunpack.c.h.b16 %v201
    %v876 = vunpack.c.l.b16 %v202
    %v877 = vunpack.c.h.b16 %v202
    %v878 = vunpack.c.l.b16 %v203
    %v879 = vunpack.c.h.b16 %v203
    %v880 = vunpack.c.l.b16 %v204
    %v881 = vunpack.c.h.b16 %v204
    %v882 = vunpack.c.l.b16 %v205
    %v883 = vunpack.c.h.b16 %v205
    %v884 = vunpack.c.l.b16 %v206
    %v885 = vunpack.c.h.b16 %v206
    %v886 = vunpack.c.l.b16 %v207
    %v887 = vunpack.c.h.b16 %v207
    %v888 = vunpack.c.l.b16 %v208
    %v889 = vunpack.c.h.b16 %v208
    %v890 = vunpack.c.l.b16 %v209
    %v891 = vunpack.c.h.b16 %v209
    %v892 = vunpack.c.l.b16 %v210
    %v893 = vunpack.c.h.b16 %v210
    %v894 = vunpack.c.l.b16 %v211
    %v895 = vunpack.c.h.b16 %v211
    %v896 = vpack.c.b16 %v704, %v696
    %v897 = vpack.c.b16 %v705, %v697
    %v898 = vpack.c.b16 %v706, %v698
    %v899 = vpack.c.b16 %v707, %v699
    %v900 = vpack.c.b16 %v708, %v700
    %v901 = vpack.c.b16 %v709, %v701
    %v902 = vpack.c.b16 %v710, %v702
    %v903 = vpack.c.b16 %v711, %v703
    %v904 = vpack.c.b16 %v720, %v712
    %v905 = vpack.c.b16 %v721, %v713
    %v906 = vpack.c.b16 %v722, %v714
    %v907 = vpack.c.b16 %v723, %v715
    %v908 = vpack.c.b16 %v724, %v716
    %v909 = vpack.c.b16 %v725, %v717
    %v910 = vpack.c.b16 %v726, %v718
    %v911 = vpack.c.b16 %v727, %v719
    %v912 = vpack.c.b16 %v736, %v728
    %v913 = vpack.c.b16 %v737, %v729
    %v914 = vpack.c.b16 %v738, %v730
    %v915 = vpack.c.b16 %v739, %v731
    %v916 = vpack.c.b16 %v740, %v732
    %v917 = vpack.c.b16 %v741, %v733
    %v918 = vpack.c.b16 %v742, %v734
    %v919 = vpack.c.b16 %v743, %v735
    %v920 = vpack.c.b16 %v752, %v744
    %v921 = vpack.c.b16 %v753, %v745
    %v922 = vpack.c.b16 %v754, %v746
    %v923 = vpack.c.b16 %v755, %v747
    %v924 = vpack.c.b16 %v756, %v748
    %v925 = vpack.c.b16 %v757, %v749
    %v926 = vpack.c.b16 %v758, %v750
    %v927 = vpack.c.b16 %v759, %v751
    %v928 = vpack.c.b16 %v768, %v760
    %v929 = vpack.c.b16 %v769, %v761
    %v930 = vpack.c.b16 %v770, %v762
    %v931 = vpack.c.b16 %v771, %v763
    %v932 = vpack.c.b16 %v772, %v764
    %v933 = vpack.c.b16 %v773, %v765
    %v934 = vpack.c.b16 %v774, %v766
    %v935 = vpack.c.b16 %v775, %v767
    %v936 = vpack.c.b16 %v784, %v776
    %v937 = vpack.c.b16 %v785, %v777
    %v938 = vpack.c.b16 %v786, %v778
    %v939 = vpack.c.b16 %v787, %v779
    %v940 = vpack.c.b16 %v788, %v780
    %v941 = vpack.c.b16 %v789, %v781
    %v942 = vpack.c.b16 %v790, %v782
    %v943 = vpack.c.b16 %v791, %v783
    %v944 = vpack.c.b16 %v800, %v792
    %v945 = vpack.c.b16 %v801, %v793
    %v946 = vpack.c.b16 %v802, %v794
    %v947 = vpack.c.b16 %v803, %v795
    %v948 = vpack.c.b16 %v804, %v796
    %v949 = vpack.c.b16 %v805, %v797
    %v950 = vpack.c.b16 %v806, %v798
    %v951 = vpack.c.b16 %v807, %v799
    %v952 = vpack.c.b16 %v816, %v808
    %v953 = vpack.c.b16 %v817, %v809
    %v954 = vpack.c.b16 %v818, %v810
    %v955 = vpack.c.b16 %v819, %v811
    %v956 = vpack.c.b16 %v820, %v812
    %v957 = vpack.c.b16 %v821, %v813
    %v958 = vpack.c.b16 %v822, %v814
    %v959 = vpack.c.b16 %v823, %v815
    %v960 = vpack.c.b16 %v832, %v824
    %v961 = vpack.c.b16 %v833, %v825
    %v962 = vpack.c.b16 %v834, %v826
    %v963 = vpack.c.b16 %v835, %v827
    %v964 = vpack.c.b16 %v836, %v828
    %v965 = vpack.c.b16 %v837, %v829
    %v966 = vpack.c.b16 %v838, %v830
    %v967 = vpack.c.b16 %v839, %v831
    %v968 = vpack.c.b16 %v848, %v840
    %v969 = vpack.c.b16 %v849, %v841
    %v970 = vpack.c.b16 %v850, %v842
    %v971 = vpack.c.b16 %v851, %v843
    %v972 = vpack.c.b16 %v852, %v844
    %v973 = vpack.c.b16 %v853, %v845
    %v974 = vpack.c.b16 %v854, %v846
    %v975 = vpack.c.b16 %v855, %v847
    %v976 = vpack.c.b16 %v864, %v856
    %v977 = vpack.c.b16 %v865, %v857
    %v978 = vpack.c.b16 %v866, %v858
    %v979 = vpack.c.b16 %v867, %v859
    %v980 = vpack.c.b16 %v868, %v860
    %v981 = vpack.c.b16 %v869, %v861
    %v982 = vpack.c.b16 %v870, %v862
    %v983 = vpack.c.b16 %v871, %v863
    %v984 = vpack.c.b16 %v880, %v872
    %v985 = vpack.c.b16 %v881, %v873
    %v986 = vpack.c.b16 %v882, %v874
    %v987 = vpack.c.b16 %v883, %v875
    %v988 = vpack.c.b16 %v884, %v876
    %v989 = vpack.c.b16 %v885, %v877
    %v990 = vpack.c.b16 %v886, %v878
    %v991 = vpack.c.b16 %v887, %v879
    %v992 = vpack.c.b16 %v888, %v888
    %v993 = vpack.c.b16 %v889, %v889
    %v994 = vpack.c.b16 %v890, %v890
    %v995 = vpack.c.b16 %v891, %v891
    %v996 = vpack.c.b16 %v892, %v892
    %v997 = vpack.c.b16 %v893, %v893
    %v998 = vpack.c.b16 %v894, %v894
    %v999 = vpack.c.b16 %v895, %v895
    %v1488 = vunpack.c.l.b16 %v212
    %v1489 = vunpack.c.h.b16 %v212
    %v1490 = vunpack.c.l.b16 %v213
    %v1491 = vunpack.c.h.b16 %v213
    %v1492 = vunpack.c.l.b16 %v214
    %v1493 = vunpack.c.h.b16 %v214
    %v1494 = vunpack.c.l.b16 %v215
    %v1495 = vunpack.c.h.b16 %v215
    %v1496 = vunpack.c.l.b16 %v216
    %v1497 = vunpack.c.h.b16 %v216
    %v1498 = vunpack.c.l.b16 %v217
    %v1499 = vunpack.c.h.b16 %v217
    %v1500 = vunpack.c.l.b16 %v218
    %v1501 = vunpack.c.h.b16 %v218
    %v1502 = vunpack.c.l.b16 %v219
    %v1503 = vunpack.c.h.b16 %v219
    %v1504 = vunpack.c.l.b16 %v220
    %v1505 = vunpack.c.h.b16 %v220
    %v1506 = vunpack.c.l.b16 %v221
    %v1507 = vunpack.c.h.b16 %v221
    %v1508 = vunpack.c.l.b16 %v222
    %v1509 = vunpack.c.h.b16 %v222
    %v1510 = vunpack.c.l.b16 %v223
    %v1511 = vunpack.c.h.b16 %v223
    %v1512 = vunpack.c.l.b16 %v224
    %v1513 = vunpack.c.h.b16 %v224
    %v1514 = vunpack.c.l.b16 %v225
    %v1515 = vunpack.c.h.b16 %v225
    %v1516 = vunpack.c.l.b16 %v226
    %v1517 = vunpack.c.h.b16 %v226
    %v1518 = vunpack.c.l.b16 %v227
    %v1519 = vunpack.c.h.b16 %v227
    %v1520 = vunpack.c.l.b16 %v228
    %v1521 = vunpack.c.h.b16 %v228
    %v1522 = vunpack.c.l.b16 %v229
    %v1523 = vunpack.c.h.b16 %v229
    %v1524 = vunpack.c.l.b16 %v230
    %v1525 = vunpack.c.h.b16 %v230
    %v1526 = vunpack.c.l.b16 %v231
    %v1527 = vunpack.c.h.b16 %v231
    %v1528 = vunpack.c.l.b16 %v232
    %v1529 = vunpack.c.h.b16 %v232
    %v1530 = vunpack.c.l.b16 %v233
    %v1531 = vunpack.c.h.b16 %v233
    %v1532 = vunpack.c.l.b16 %v234
    %v1533 = vunpack.c.h.b16 %v234
    %v1534 = vunpack.c.l.b16 %v235
    %v1535 = vunpack.c.h.b16 %v235
    %v1536 = vunpack.c.l.b16 %v236
    %v1537 = vunpack.c.h.b16 %v236
    %v1538 = vunpack.c.l.b16 %v237
    %v1539 = vunpack.c.h.b16 %v237
    %v1540 = vunpack.c.l.b16 %v238
    %v1541 = vunpack.c.h.b16 %v238
    %v1542 = vunpack.c.l.b16 %v239
    %v1543 = vunpack.c.h.b16 %v239
    %v1544 = vunpack.c.l.b16 %v240
    %v1545 = vunpack.c.h.b16 %v240
    %v1546 = vunpack.c.l.b16 %v241
    %v1547 = vunpack.c.h.b16 %v241
    %v1548 = vunpack.c.l.b16 %v242
    %v1549 = vunpack.c.h.b16 %v242
    %v1550 = vunpack.c.l.b16 %v243
    %v1551 = vunpack.c.h.b16 %v243
    %v1552 = vunpack.c.l.b16 %v244
    %v1553 = vunpack.c.h.b16 %v244
    %v1554 = vunpack.c.l.b16 %v245
    %v1555 = vunpack.c.h.b16 %v245
    %v1556 = vunpack.c.l.b16 %v246
    %v1557 = vunpack.c.h.b16 %v246
    %v1558 = vunpack.c.l.b16 %v247
    %v1559 = vunpack.c.h.b16 %v247
    %v1560 = vunpack.c.l.b16 %v248
    %v1561 = vunpack.c.h.b16 %v248
    %v1562 = vunpack.c.l.b16 %v249
    %v1563 = vunpack.c.h.b16 %v249
    %v1564 = vunpack.c.l.b16 %v250
    %v1565 = vunpack.c.h.b16 %v250
    %v1566 = vunpack.c.l.b16 %v251
    %v1567 = vunpack.c.h.b16 %v251
    %v1568 = vunpack.c.l.b16 %v252
    %v1569 = vunpack.c.h.b16 %v252
    %v1570 = vunpack.c.l.b16 %v253
    %v1571 = vunpack.c.h.b16 %v253
    %v1572 = vunpack.c.l.b16 %v254
    %v1573 = vunpack.c.h.b16 %v254
    %v1574 = vunpack.c.l.b16 %v255
    %v1575 = vunpack.c.h.b16 %v255
    %v1576 = vunpack.c.l.b16 %v256
    %v1577 = vunpack.c.h.b16 %v256
    %v1578 = vunpack.c.l.b16 %v257
    %v1579 = vunpack.c.h.b16 %v257
    %v1580 = vunpack.c.l.b16 %v258
    %v1581 = vunpack.c.h.b16 %v258
    %v1582 = vunpack.c.l.b16 %v259
    %v1583 = vunpack.c.h.b16 %v259
    %v1584 = vunpack.c.l.b16 %v260
    %v1585 = vunpack.c.h.b16 %v260
    %v1586 = vunpack.c.l.b16 %v261
    %v1587 = vunpack.c.h.b16 %v261
    %v1588 = vunpack.c.l.b16 %v262
    %v1589 = vunpack.c.h.b16 %v262
    %v1590 = vunpack.c.l.b16 %v263
    %v1591 = vunpack.c.h.b16 %v263
    %v1592 = vunpack.c.l.b16 %v264
    %v1593 = vunpack.c.h.b16 %v264
    %v1594 = vunpack.c.l.b16 %v265
    %v1595 = vunpack.c.h.b16 %v265
    %v1596 = vunpack.c.l.b16 %v266
    %v1597 = vunpack.c.h.b16 %v266
    %v1598 = vunpack.c.l.b16 %v267
    %v1599 = vunpack.c.h.b16 %v267
    %v1600 = vunpack.c.l.b16 %v268
    %v1601 = vunpack.c.h.b16 %v268
    %v1602 = vunpack.c.l.b16 %v269
    %v1603 = vunpack.c.h.b16 %v269
    %v1604 = vunpack.c.l.b16 %v270
    %v1605 = vunpack.c.h.b16 %v270
    %v1606 = vunpack.c.l.b16 %v271
    %v1607 = vunpack.c.h.b16 %v271
    %v1608 = vunpack.c.l.b16 %v272
    %v1609 = vunpack.c.h.b16 %v272
    %v1610 = vunpack.c.l.b16 %v273
    %v1611 = vunpack.c.h.b16 %v273
    %v1612 = vunpack.c.l.b16 %v274
    %v1613 = vunpack.c.h.b16 %v274
    %v1614 = vunpack.c.l.b16 %v275
    %v1615 = vunpack.c.h.b16 %v275
    %v1616 = vunpack.c.l.b16 %v276
    %v1617 = vunpack.c.h.b16 %v276
    %v1618 = vunpack.c.l.b16 %v277
    %v1619 = vunpack.c.h.b16 %v277
    %v1620 = vunpack.c.l.b16 %v278
    %v1621 = vunpack.c.h.b16 %v278
    %v1622 = vunpack.c.l.b16 %v279
    %v1623 = vunpack.c.h.b16 %v279
    %v1624 = vunpack.c.l.b16 %v280
    %v1625 = vunpack.c.h.b16 %v280
    %v1626 = vunpack.c.l.b16 %v281
    %v1627 = vunpack.c.h.b16 %v281
    %v1628 = vunpack.c.l.b16 %v282
    %v1629 = vunpack.c.h.b16 %v282
    %v1630 = vunpack.c.l.b16 %v283
    %v1631 = vunpack.c.h.b16 %v283
    %v1632 = vunpack.c.l.b16 %v284
    %v1633 = vunpack.c.h.b16 %v284
    %v1634 = vunpack.c.l.b16 %v285
    %v1635 = vunpack.c.h.b16 %v285
    %v1636 = vunpack.c.l.b16 %v286
    %v1637 = vunpack.c.h.b16 %v286
    %v1638 = vunpack.c.l.b16 %v287
    %v1639 = vunpack.c.h.b16 %v287
    %v1640 = vunpack.c.l.b16 %v288
    %v1641 = vunpack.c.h.b16 %v288
    %v1642 = vunpack.c.l.b16 %v289
    %v1643 = vunpack.c.h.b16 %v289
    %v1644 = vunpack.c.l.b16 %v290
    %v1645 = vunpack.c.h.b16 %v290
    %v1646 = vunpack.c.l.b16 %v291
    %v1647 = vunpack.c.h.b16 %v291
    %v1648 = vunpack.c.l.b16 %v292
    %v1649 = vunpack.c.h.b16 %v292
    %v1650 = vunpack.c.l.b16 %v293
    %v1651 = vunpack.c.h.b16 %v293
    %v1652 = vunpack.c.l.b16 %v294
    %v1653 = vunpack.c.h.b16 %v294
    %v1654 = vunpack.c.l.b16 %v295
    %v1655 = vunpack.c.h.b16 %v295
    %v1656 = vunpack.c.l.b16 %v296
    %v1657 = vunpack.c.h.b16 %v296
    %v1658 = vunpack.c.l.b16 %v297
    %v1659 = vunpack.c.h.b16 %v297
    %v1660 = vunpack.c.l.b16 %v298
    %v1661 = vunpack.c.h.b16 %v298
    %v1662 = vunpack.c.l.b16 %v299
    %v1663 = vunpack.c.h.b16 %v299
    %v1664 = vunpack.c.l.b16 %v300
    %v1665 = vunpack.c.h.b16 %v300
    %v1666 = vunpack.c.l.b16 %v301
    %v1667 = vunpack.c.h.b16 %v301
    %v1668 = vunpack.c.l.b16 %v302
    %v1669 = vunpack.c.h.b16 %v302
    %v1670 = vunpack.c.l.b16 %v303
    %v1671 = vunpack.c.h.b16 %v303
    %v1672 = vunpack.c.l.b16 %v304
    %v1673 = vunpack.c.h.b16 %v304
    %v1674 = vunpack.c.l.b16 %v305
    %v1675 = vunpack.c.h.b16 %v305
    %v1676 = vunpack.c.l.b16 %v306
    %v1677 = vunpack.c.h.b16 %v306
    %v1678 = vunpack.c.l.b16 %v307
    %v1679 = vunpack.c.h.b16 %v307
    %v1680 = vunpack.c.l.b16 %v308
    %v1681 = vunpack.c.h.b16 %v308
    %v1682 = vunpack.c.l.b16 %v309
    %v1683 = vunpack.c.h.b16 %v309
    %v1684 = vunpack.c.l.b16 %v310
    %v1685 = vunpack.c.h.b16 %v310
    %v1686 = vunpack.c.l.b16 %v311
    %v1687 = vunpack.c.h.b16 %v311
    %v1688 = vunpack.c.l.b16 %v312
    %v1689 = vunpack.c.h.b16 %v312
    %v1690 = vunpack.c.l.b16 %v313
    %v1691 = vunpack.c.h.b16 %v313
    %v1692 = vunpack.c.l.b16 %v314
    %v1693 = vunpack.c.h.b16 %v314
    %v1694 = vunpack.c.l.b16 %v315
    %v1695 = vunpack.c.h.b16 %v315
    %v1696 = vunpack.c.l.b16 %v316
    %v1697 = vunpack.c.h.b16 %v316
    %v1698 = vunpack.c.l.b16 %v317
    %v1699 = vunpack.c.h.b16 %v317
    %v1700 = vunpack.c.l.b16 %v318
    %v1701 = vunpack.c.h.b16 %v318
    %v1702 = vunpack.c.l.b16 %v319
    %v1703 = vunpack.c.h.b16 %v319
    %v1704 = vunpack.c.l.b16 %v320
    %v1705 = vunpack.c.h.b16 %v320
    %v1706 = vunpack.c.l.b16 %v321
    %v1707 = vunpack.c.h.b16 %v321
    %v1708 = vunpack.c.l.b16 %v322
    %v1709 = vunpack.c.h.b16 %v322
    %v1710 = vunpack.c.l.b16 %v323
    %v1711 = vunpack.c.h.b16 %v323
    %v1712 = vunpack.c.l.b16 %v324
    %v1713 = vunpack.c.h.b16 %v324
    %v1714 = vunpack.c.l.b16 %v325
    %v1715 = vunpack.c.h.b16 %v325
    %v1716 = vunpack.c.l.b16 %v326
    %v1717 = vunpack.c.h.b16 %v326
    %v1718 = vunpack.c.l.b16 %v327
    %v1719 = vunpack.c.h.b16 %v327
    %v1720 = vunpack.c.l.b16 %v328
    %v1721 = vunpack.c.h.b16 %v328
    %v1722 = vunpack.c.l.b16 %v329
    %v1723 = vunpack.c.h.b16 %v329
    %v1724 = vunpack.c.l.b16 %v330
    %v1725 = vunpack.c.h.b16 %v330
    %v1726 = vunpack.c.l.b16 %v331
    %v1727 = vunpack.c.h.b16 %v331
    %v1728 = vunpack.c.l.b16 %v332
    %v1729 = vunpack.c.h.b16 %v332
    %v1730 = vunpack.c.l.b16 %v333
    %v1731 = vunpack.c.h.b16 %v333
    %v1732 = vunpack.c.l.b16 %v334
    %v1733 = vunpack.c.h.b16 %v334
    %v1734 = vunpack.c.l.b16 %v335
    %v1735 = vunpack.c.h.b16 %v335
    %v1736 = vunpack.c.l.b16 %v336
    %v1737 = vunpack.c.h.b16 %v336
    %v1738 = vunpack.c.l.b16 %v337
    %v1739 = vunpack.c.h.b16 %v337
    %v1740 = vunpack.c.l.b16 %v338
    %v1741 = vunpack.c.h.b16 %v338
    %v1742 = vunpack.c.l.b16 %v339
    %v1743 = vunpack.c.h.b16 %v339
    %v1744 = vunpack.c.l.b16 %v340
    %v1745 = vunpack.c.h.b16 %v340
    %v1746 = vunpack.c.l.b16 %v341
    %v1747 = vunpack.c.h.b16 %v341
    %v1748 = vunpack.c.l.b16 %v342
    %v1749 = vunpack.c.h.b16 %v342
    %v1750 = vunpack.c.l.b16 %v343
    %v1751 = vunpack.c.h.b16 %v343
    %v1752 = vunpack.c.l.b16 %v344
    %v1753 = vunpack.c.h.b16 %v344
    %v1754 = vunpack.c.l.b16 %v345
    %v1755 = vunpack.c.h.b16 %v345
    %v1756 = vunpack.c.l.b16 %v346
    %v1757 = vunpack.c.h.b16 %v346
    %v1758 = vunpack.c.l.b16 %v347
    %v1759 = vunpack.c.h.b16 %v347
    %v1760 = vunpack.c.l.b16 %v348
    %v1761 = vunpack.c.h.b16 %v348
    %v1762 = vunpack.c.l.b16 %v349
    %v1763 = vunpack.c.h.b16 %v349
    %v1764 = vunpack.c.l.b16 %v350
    %v1765 = vunpack.c.h.b16 %v350
    %v1766 = vunpack.c.l.b16 %v351
    %v1767 = vunpack.c.h.b16 %v351
    %v1768 = vunpack.c.l.b16 %v352
    %v1769 = vunpack.c.h.b16 %v352
    %v1770 = vunpack.c.l.b16 %v353
    %v1771 = vunpack.c.h.b16 %v353
    %v1772 = vunpack.c.l.b16 %v354
    %v1773 = vunpack.c.h.b16 %v354
    %v1774 = vunpack.c.l.b16 %v355
    %v1775 = vunpack.c.h.b16 %v355
    %v1776 = vunpack.c.l.b16 %v356
    %v1777 = vunpack.c.h.b16 %v356
    %v1778 = vunpack.c.l.b16 %v357
    %v1779 = vunpack.c.h.b16 %v357
    %v1780 = vunpack.c.l.b16 %v358
    %v1781 = vunpack.c.h.b16 %v358
    %v1782 = vunpack.c.l.b16 %v359
    %v1783 = vunpack.c.h.b16 %v359
    %v1784 = vunpack.c.l.b16 %v360
    %v1785 = vunpack.c.h.b16 %v360
    %v1786 = vunpack.c.l.b16 %v361
    %v1787 = vunpack.c.h.b16 %v361
    %v1788 = vunpack.c.l.b16 %v362
    %v1789 = vunpack.c.h.b16 %v362
    %v1790 = vunpack.c.l.b16 %v363
    %v1791 = vunpack.c.h.b16 %v363
    %v1792 = vunpack.c.l.b16 %v364
    %v1793 = vunpack.c.h.b16 %v364
    %v1794 = vunpack.c.l.b16 %v365
    %v1795 = vunpack.c.h.b16 %v365
    %v1796 = vunpack.c.l.b16 %v366
    %v1797 = vunpack.c.h.b16 %v366
    %v1798 = vunpack.c.l.b16 %v367
    %v1799 = vunpack.c.h.b16 %v367
    %v1800 = vunpack.c.l.b16 %v368
    %v1801 = vunpack.c.h.b16 %v368
    %v1802 = vunpack.c.l.b16 %v369
    %v1803 = vunpack.c.h.b16 %v369
    %v1804 = vunpack.c.l.b16 %v370
    %v1805 = vunpack.c.h.b16 %v370
    %v1806 = vunpack.c.l.b16 %v371
    %v1807 = vunpack.c.h.b16 %v371
    %v1808 = vunpack.c.l.b16 %v372
    %v1809 = vunpack.c.h.b16 %v372
    %v1810 = vunpack.c.l.b16 %v373
    %v1811 = vunpack.c.h.b16 %v373
    %v1812 = vunpack.c.l.b16 %v374
    %v1813 = vunpack.c.h.b16 %v374
    %v1814 = vunpack.c.l.b16 %v375
    %v1815 = vunpack.c.h.b16 %v375
    %v1816 = vunpack.c.l.b16 %v376
    %v1817 = vunpack.c.h.b16 %v376
    %v1818 = vunpack.c.l.b16 %v377
    %v1819 = vunpack.c.h.b16 %v377
    %v1820 = vunpack.c.l.b16 %v378
    %v1821 = vunpack.c.h.b16 %v378
    %v1822 = vunpack.c.l.b16 %v379
    %v1823 = vunpack.c.h.b16 %v379
    %v1824 = vunpack.c.l.b16 %v380
    %v1825 = vunpack.c.h.b16 %v380
    %v1826 = vunpack.c.l.b16 %v381
    %v1827 = vunpack.c.h.b16 %v381
    %v1828 = vunpack.c.l.b16 %v382
    %v1829 = vunpack.c.h.b16 %v382
    %v1830 = vunpack.c.l.b16 %v383
    %v1831 = vunpack.c.h.b16 %v383
    %v1832 = vunpack.c.l.b16 %v384
    %v1833 = vunpack.c.h.b16 %v384
    %v1834 = vunpack.c.l.b16 %v385
    %v1835 = vunpack.c.h.b16 %v385
    %v1836 = vunpack.c.l.b16 %v386
    %v1837 = vunpack.c.h.b16 %v386
    %v1838 = vunpack.c.l.b16 %v387
    %v1839 = vunpack.c.h.b16 %v387
    %v1840 = vunpack.c.l.b16 %v388
    %v1841 = vunpack.c.h.b16 %v388
    %v1842 = vunpack.c.l.b16 %v389
    %v1843 = vunpack.c.h.b16 %v389
    %v1844 = vunpack.c.l.b16 %v390
    %v1845 = vunpack.c.h.b16 %v390
    %v1846 = vunpack.c.l.b16 %v391
    %v1847 = vunpack.c.h.b16 %v391
    %v1848 = vunpack.c.l.b16 %v392
    %v1849 = vunpack.c.h.b16 %v392
    %v1850 = vunpack.c.l.b16 %v393
    %v1851 = vunpack.c.h.b16 %v393
    %v1852 = vunpack.c.l.b16 %v394
    %v1853 = vunpack.c.h.b16 %v394
    %v1854 = vunpack.c.l.b16 %v395
    %v1855 = vunpack.c.h.b16 %v395
    %v1856 = vunpack.c.l.b16 %v396
    %v1857 = vunpack.c.h.b16 %v396
    %v1858 = vunpack.c.l.b16 %v397
    %v1859 = vunpack.c.h.b16 %v397
    %v1860 = vunpack.c.l.b16 %v398
    %v1861 = vunpack.c.h.b16 %v398
    %v1862 = vunpack.c.l.b16 %v399
    %v1863 = vunpack.c.h.b16 %v399
    %v1864 = vunpack.c.l.b16 %v400
    %v1865 = vunpack.c.h.b16 %v400
    %v1866 = vunpack.c.l.b16 %v401
    %v1867 = vunpack.c.h.b16 %v401
    %v1868 = vunpack.c.l.b16 %v402
    %v1869 = vunpack.c.h.b16 %v402
    %v1870 = vunpack.c.l.b16 %v403
    %v1871 = vunpack.c.h.b16 %v403
    %v1872 = vunpack.c.l.b16 %v404
    %v1873 = vunpack.c.h.b16 %v404
    %v1874 = vunpack.c.l.b16 %v405
    %v1875 = vunpack.c.h.b16 %v405
    %v1876 = vunpack.c.l.b16 %v406
    %v1877 = vunpack.c.h.b16 %v406
    %v1878 = vunpack.c.l.b16 %v407
    %v1879 = vunpack.c.h.b16 %v407
    %v1880 = vunpack.c.l.b16 %v408
    %v1881 = vunpack.c.h.b16 %v408
    %v1882 = vunpack.c.l.b16 %v409
    %v1883 = vunpack.c.h.b16 %v409
    %v1884 = vunpack.c.l.b16 %v410
    %v1885 = vunpack.c.h.b16 %v410
    %v1886 = vunpack.c.l.b16 %v411
    %v1887 = vunpack.c.h.b16 %v411
    %v1888 = vunpack.c.l.b16 %v412
    %v1889 = vunpack.c.h.b16 %v412
    %v1890 = vunpack.c.l.b16 %v413
    %v1891 = vunpack.c.h.b16 %v413
    %v1892 = vunpack.c.l.b16 %v414
    %v1893 = vunpack.c.h.b16 %v414
    %v1894 = vunpack.c.l.b16 %v415
    %v1895 = vunpack.c.h.b16 %v415
    %v1896 = vunpack.c.l.b16 %v416
    %v1897 = vunpack.c.h.b16 %v416
    %v1898 = vunpack.c.l.b16 %v417
    %v1899 = vunpack.c.h.b16 %v417
    %v1900 = vunpack.c.l.b16 %v418
    %v1901 = vunpack.c.h.b16 %v418
    %v1902 = vunpack.c.l.b16 %v419
    %v1903 = vunpack.c.h.b16 %v419
    %v1904 = vunpack.c.l.b16 %v420
    %v1905 = vunpack.c.h.b16 %v420
    %v1906 = vunpack.c.l.b16 %v421
    %v1907 = vunpack.c.h.b16 %v421
    %v1908 = vunpack.c.l.b16 %v422
    %v1909 = vunpack.c.h.b16 %v422
    %v1910 = vunpack.c.l.b16 %v423
    %v1911 = vunpack.c.h.b16 %v423
    %v1912 = vunpack.c.l.b16 %v424
    %v1913 = vunpack.c.h.b16 %v424
    %v1914 = vunpack.c.l.b16 %v425
    %v1915 = vunpack.c.h.b16 %v425
    %v1916 = vunpack.c.l.b16 %v426
    %v1917 = vunpack.c.h.b16 %v426
    %v1918 = vunpack.c.l.b16 %v427
    %v1919 = vunpack.c.h.b16 %v427
    %v1920 = vunpack.c.l.b16 %v428
    %v1921 = vunpack.c.h.b16 %v428
    %v1922 = vunpack.c.l.b16 %v429
    %v1923 = vunpack.c.h.b16 %v429
    %v1924 = vunpack.c.l.b16 %v430
    %v1925 = vunpack.c.h.b16 %v430
    %v1926 = vunpack.c.l.b16 %v431
    %v1927 = vunpack.c.h.b16 %v431
    %v1928 = vunpack.c.l.b16 %v432
    %v1929 = vunpack.c.h.b16 %v432
    %v1930 = vunpack.c.l.b16 %v433
    %v1931 = vunpack.c.h.b16 %v433
    %v1932 = vunpack.c.l.b16 %v434
    %v1933 = vunpack.c.h.b16 %v434
    %v1934 = vunpack.c.l.b16 %v435
    %v1935 = vunpack.c.h.b16 %v435
    %v1936 = vunpack.c.l.b16 %v436
    %v1937 = vunpack.c.h.b16 %v436
    %v1938 = vunpack.c.l.b16 %v437
    %v1939 = vunpack.c.h.b16 %v437
    %v1940 = vunpack.c.l.b16 %v438
    %v1941 = vunpack.c.h.b16 %v438
    %v1942 = vunpack.c.l.b16 %v439
    %v1943 = vunpack.c.h.b16 %v439
    %v1944 = vunpack.c.l.b16 %v440
    %v1945 = vunpack.c.h.b16 %v440
    %v1946 = vunpack.c.l.b16 %v441
    %v1947 = vunpack.c.h.b16 %v441
    %v1948 = vunpack.c.l.b16 %v442
    %v1949 = vunpack.c.h.b16 %v442
    %v1950 = vunpack.c.l.b16 %v443
    %v1951 = vunpack.c.h.b16 %v443
    %v1952 = vunpack.c.l.b16 %v444
    %v1953 = vunpack.c.h.b16 %v444
    %v1954 = vunpack.c.l.b16 %v445
    %v1955 = vunpack.c.h.b16 %v445
    %v1956 = vunpack.c.l.b16 %v446
    %v1957 = vunpack.c.h.b16 %v446
    %v1958 = vunpack.c.l.b16 %v447
    %v1959 = vunpack.c.h.b16 %v447
    %v1960 = vunpack.c.l.b16 %v448
    %v1961 = vunpack.c.h.b16 %v448
    %v1962 = vunpack.c.l.b16 %v449
    %v1963 = vunpack.c.h.b16 %v449
    %v1964 = vunpack.c.l.b16 %v450
    %v1965 = vunpack.c.h.b16 %v450
    %v1966 = vunpack.c.l.b16 %v451
    %v1967 = vunpack.c.h.b16 %v451
    %v1968 = vunpack.c.l.b16 %v452
    %v1969 = vunpack.c.h.b16 %v452
    %v1970 = vunpack.c.l.b16 %v453
    %v1971 = vunpack.c.h.b16 %v453
    %v1972 = vunpack.c.l.b16 %v454
    %v1973 = vunpack.c.h.b16 %v454
    %v1974 = vunpack.c.l.b16 %v455
    %v1975 = vunpack.c.h.b16 %v455
    %v1976 = vunpack.c.l.b16 %v456
    %v1977 = vunpack.c.h.b16 %v456
    %v1978 = vunpack.c.l.b16 %v457
    %v1979 = vunpack.c.h.b16 %v457
    %v1980 = vunpack.c.l.b16 %v458
    %v1981 = vunpack.c.h.b16 %v458
    %v1982 = vunpack.c.l.b16 %v459
    %v1983 = vunpack.c.h.b16 %v459
    %v1984 = vunpack.c.l.b16 %v460
    %v1985 = vunpack.c.h.b16 %v460
    %v1986 = vunpack.c.l.b16 %v461
    %v1987 = vunpack.c.h.b16 %v461
    %v1988 = vunpack.c.l.b16 %v462
    %v1989 = vunpack.c.h.b16 %v462
    %v1990 = vunpack.c.l.b16 %v463
    %v1991 = vunpack.c.h.b16 %v463
    %v1992 = vunpack.c.l.b16 %v464
    %v1993 = vunpack.c.h.b16 %v464
    %v1994 = vunpack.c.l.b16 %v465
    %v1995 = vunpack.c.h.b16 %v465
    %v1996 = vunpack.c.l.b16 %v466
    %v1997 = vunpack.c.h.b16 %v466
    %v1998 = vunpack.c.l.b16 %v467
    %v1999 = vunpack.c.h.b16 %v467
    %v2000 = vunpack.c.l.b16 %v468
    %v2001 = vunpack.c.h.b16 %v468
    %v2002 = vunpack.c.l.b16 %v469
    %v2003 = vunpack.c.h.b16 %v469
    %v2004 = vunpack.c.l.b16 %v470
    %v2005 = vunpack.c.h.b16 %v470
    %v2006 = vunpack.c.l.b16 %v471
    %v2007 = vunpack.c.h.b16 %v471
    %v2008 = vunpack.c.l.b16 %v472
    %v2009 = vunpack.c.h.b16 %v472
    %v2010 = vunpack.c.l.b16 %v473
    %v2011 = vunpack.c.h.b16 %v473
    %v2012 = vunpack.c.l.b16 %v474
    %v2013 = vunpack.c.h.b16 %v474
    %v2014 = vunpack.c.l.b16 %v475
    %v2015 = vunpack.c.h.b16 %v475
    %v2016 = vunpack.c.l.b16 %v476
    %v2017 = vunpack.c.h.b16 %v476
    %v2018 = vunpack.c.l.b16 %v477
    %v2019 = vunpack.c.h.b16 %v477
    %v2020 = vunpack.c.l.b16 %v478
    %v2021 = vunpack.c.h.b16 %v478
    %v2022 = vunpack.c.l.b16 %v479
    %v2023 = vunpack.c.h.b16 %v479
    %v2024 = vunpack.c.l.b16 %v480
    %v2025 = vunpack.c.h.b16 %v480
    %v2026 = vunpack.c.l.b16 %v481
    %v2027 = vunpack.c.h.b16 %v481
    %v2028 = vunpack.c.l.b16 %v482
    %v2029 = vunpack.c.h.b16 %v482
    %v2030 = vunpack.c.l.b16 %v483
    %v2031 = vunpack.c.h.b16 %v483
    %v2032 = vunpack.c.l.b16 %v484
    %v2033 = vunpack.c.h.b16 %v484
    %v2034 = vunpack.c.l.b16 %v485
    %v2035 = vunpack.c.h.b16 %v485
    %v2036 = vunpack.c.l.b16 %v486
    %v2037 = vunpack.c.h.b16 %v486
    %v2038 = vunpack.c.l.b16 %v487
    %v2039 = vunpack.c.h.b16 %v487
    %v2040 = vunpack.c.l.b16 %v488
    %v2041 = vunpack.c.h.b16 %v488
    %v2042 = vunpack.c.l.b16 %v489
    %v2043 = vunpack.c.h.b16 %v489
    %v2044 = vunpack.c.l.b16 %v490
    %v2045 = vunpack.c.h.b16 %v490
    %v2046 = vunpack.c.l.b16 %v491
    %v2047 = vunpack.c.h.b16 %v491
    %v2048 = vunpack.c.l.b16 %v492
    %v2049 = vunpack.c.h.b16 %v492
    %v2050 = vunpack.c.l.b16 %v493
    %v2051 = vunpack.c.h.b16 %v493
    %v2052 = vunpack.c.l.b16 %v494
    %v2053 = vunpack.c.h.b16 %v494
    %v2054 = vunpack.c.l.b16 %v495
    %v2055 = vunpack.c.h.b16 %v495
    %v2056 = vunpack.c.l.b16 %v496
    %v2057 = vunpack.c.h.b16 %v496
    %v2058 = vunpack.c.l.b16 %v497
    %v2059 = vunpack.c.h.b16 %v497
    %v2060 = vunpack.c.l.b16 %v498
    %v2061 = vunpack.c.h.b16 %v498
    %v2062 = vunpack.c.l.b16 %v499
    %v2063 = vunpack.c.h.b16 %v499
    %v2064 = vunpack.c.l.b16 %v500
    %v2065 = vunpack.c.h.b16 %v500
    %v2066 = vunpack.c.l.b16 %v501
    %v2067 = vunpack.c.h.b16 %v501
    %v2068 = vunpack.c.l.b16 %v502
    %v2069 = vunpack.c.h.b16 %v502
    %v2070 = vunpack.c.l.b16 %v503
    %v2071 = vunpack.c.h.b16 %v503
    %v2072 = vunpack.c.l.b16 %v504
    %v2073 = vunpack.c.h.b16 %v504
    %v2074 = vunpack.c.l.b16 %v505
    %v2075 = vunpack.c.h.b16 %v505
    %v2076 = vunpack.c.l.b16 %v506
    %v2077 = vunpack.c.h.b16 %v506
    %v2078 = vunpack.c.l.b16 %v507
    %v2079 = vunpack.c.h.b16 %v507
    %v2080 = vunpack.c.l.b16 %v508
    %v2081 = vunpack.c.h.b16 %v508
    %v2082 = vunpack.c.l.b16 %v509
    %v2083 = vunpack.c.h.b16 %v509
    %v2084 = vunpack.c.l.b16 %v510
    %v2085 = vunpack.c.h.b16 %v510
    %v2086 = vunpack.c.l.b16 %v511
    %v2087 = vunpack.c.h.b16 %v511
    %v2088 = vunpack.c.l.b16 %v512
    %v2089 = vunpack.c.h.b16 %v512
    %v2090 = vunpack.c.l.b16 %v513
    %v2091 = vunpack.c.h.b16 %v513
    %v2092 = vunpack.c.l.b16 %v514
    %v2093 = vunpack.c.h.b16 %v514
    %v2094 = vunpack.c.l.b16 %v515
    %v2095 = vunpack.c.h.b16 %v515
    %v2096 = vunpack.c.l.b16 %v516
    %v2097 = vunpack.c.h.b16 %v516
    %v2098 = vunpack.c.l.b16 %v517
    %v2099 = vunpack.c.h.b16 %v517
    %v2100 = vunpack.c.l.b16 %v518
    %v2101 = vunpack.c.h.b16 %v518
    %v2102 = vunpack.c.l.b16 %v519
    %v2103 = vunpack.c.h.b16 %v519
    %v2104 = vunpack.c.l.b16 %v520
    %v2105 = vunpack.c.h.b16 %v520
    %v2106 = vunpack.c.l.b16 %v521
    %v2107 = vunpack.c.h.b16 %v521
    %v2108 = vunpack.c.l.b16 %v522
    %v2109 = vunpack.c.h.b16 %v522
    %v2110 = vunpack.c.l.b16 %v523
    %v2111 = vunpack.c.h.b16 %v523
    %v2112 = vunpack.c.l.b16 %v524
    %v2113 = vunpack.c.h.b16 %v524
    %v2114 = vunpack.c.l.b16 %v525
    %v2115 = vunpack.c.h.b16 %v525
    %v2116 = vunpack.c.l.b16 %v526
    %v2117 = vunpack.c.h.b16 %v526
    %v2118 = vunpack.c.l.b16 %v527
    %v2119 = vunpack.c.h.b16 %v527
    %v2120 = vunpack.c.l.b16 %v528
    %v2121 = vunpack.c.h.b16 %v528
    %v2122 = vunpack.c.l.b16 %v529
    %v2123 = vunpack.c.h.b16 %v529
    %v2124 = vunpack.c.l.b16 %v530
    %v2125 = vunpack.c.h.b16 %v530
    %v2126 = vunpack.c.l.b16 %v531
    %v2127 = vunpack.c.h.b16 %v531
    %v2128 = vunpack.c.l.b16 %v532
    %v2129 = vunpack.c.h.b16 %v532
    %v2130 = vunpack.c.l.b16 %v533
    %v2131 = vunpack.c.h.b16 %v533
    %v2132 = vunpack.c.l.b16 %v534
    %v2133 = vunpack.c.h.b16 %v534
    %v2134 = vunpack.c.l.b16 %v535
    %v2135 = vunpack.c.h.b16 %v535
    %v2136 = vunpack.c.l.b16 %v536
    %v2137 = vunpack.c.h.b16 %v536
    %v2138 = vunpack.c.l.b16 %v537
    %v2139 = vunpack.c.h.b16 %v537
    %v2140 = vunpack.c.l.b16 %v538
    %v2141 = vunpack.c.h.b16 %v538
    %v2142 = vunpack.c.l.b16 %v539
    %v2143 = vunpack.c.h.b16 %v539
    %v2144 = vunpack.c.l.b16 %v540
    %v2145 = vunpack.c.h.b16 %v540
    %v2146 = vunpack.c.l.b16 %v541
    %v2147 = vunpack.c.h.b16 %v541
    %v2148 = vunpack.c.l.b16 %v542
    %v2149 = vunpack.c.h.b16 %v542
    %v2150 = vunpack.c.l.b16 %v543
    %v2151 = vunpack.c.h.b16 %v543
    %v2152 = vunpack.c.l.b16 %v544
    %v2153 = vunpack.c.h.b16 %v544
    %v2154 = vunpack.c.l.b16 %v545
    %v2155 = vunpack.c.h.b16 %v545
    %v2156 = vunpack.c.l.b16 %v546
    %v2157 = vunpack.c.h.b16 %v546
    %v2158 = vunpack.c.l.b16 %v547
    %v2159 = vunpack.c.h.b16 %v547
    %v2160 = vunpack.c.l.b16 %v548
    %v2161 = vunpack.c.h.b16 %v548
    %v2162 = vunpack.c.l.b16 %v549
    %v2163 = vunpack.c.h.b16 %v549
    %v2164 = vunpack.c.l.b16 %v550
    %v2165 = vunpack.c.h.b16 %v550
    %v2166 = vunpack.c.l.b16 %v551
    %v2167 = vunpack.c.h.b16 %v551
    %v2168 = vunpack.c.l.b16 %v552
    %v2169 = vunpack.c.h.b16 %v552
    %v2170 = vunpack.c.l.b16 %v553
    %v2171 = vunpack.c.h.b16 %v553
    %v2172 = vunpack.c.l.b16 %v554
    %v2173 = vunpack.c.h.b16 %v554
    %v2174 = vunpack.c.l.b16 %v555
    %v2175 = vunpack.c.h.b16 %v555
    %v2176 = vunpack.c.l.b16 %v556
    %v2177 = vunpack.c.h.b16 %v556
    %v2178 = vunpack.c.l.b16 %v557
    %v2179 = vunpack.c.h.b16 %v557
    %v2180 = vunpack.c.l.b16 %v558
    %v2181 = vunpack.c.h.b16 %v558
    %v2182 = vunpack.c.l.b16 %v559
    %v2183 = vunpack.c.h.b16 %v559
    %v2184 = vunpack.c.l.b16 %v560
    %v2185 = vunpack.c.h.b16 %v560
    %v2186 = vunpack.c.l.b16 %v561
    %v2187 = vunpack.c.h.b16 %v561
    %v2188 = vunpack.c.l.b16 %v562
    %v2189 = vunpack.c.h.b16 %v562
    %v2190 = vunpack.c.l.b16 %v563
    %v2191 = vunpack.c.h.b16 %v563
    %v2192 = vunpack.c.l.b16 %v564
    %v2193 = vunpack.c.h.b16 %v564
    %v2194 = vunpack.c.l.b16 %v565
    %v2195 = vunpack.c.h.b16 %v565
    %v2196 = vunpack.c.l.b16 %v566
    %v2197 = vunpack.c.h.b16 %v566
    %v2198 = vunpack.c.l.b16 %v567
    %v2199 = vunpack.c.h.b16 %v567
    %v2200 = vunpack.c.l.b16 %v568
    %v2201 = vunpack.c.h.b16 %v568
    %v2202 = vunpack.c.l.b16 %v569
    %v2203 = vunpack.c.h.b16 %v569
    %v2204 = vunpack.c.l.b16 %v570
    %v2205 = vunpack.c.h.b16 %v570
    %v2206 = vunpack.c.l.b16 %v571
    %v2207 = vunpack.c.h.b16 %v571
    %v2208 = vunpack.c.l.b16 %v572
    %v2209 = vunpack.c.h.b16 %v572
    %v2210 = vunpack.c.l.b16 %v573
    %v2211 = vunpack.c.h.b16 %v573
    %v2212 = vunpack.c.l.b16 %v574
    %v2213 = vunpack.c.h.b16 %v574
    %v2214 = vunpack.c.l.b16 %v575
    %v2215 = vunpack.c.h.b16 %v575
    %v2216 = vunpack.c.l.b16 %v576
    %v2217 = vunpack.c.h.b16 %v576
    %v2218 = vunpack.c.l.b16 %v577
    %v2219 = vunpack.c.h.b16 %v577
    %v2220 = vunpack.c.l.b16 %v578
    %v2221 = vunpack.c.h.b16 %v578
    %v2222 = vunpack.c.l.b16 %v579
    %v2223 = vunpack.c.h.b16 %v579
    %v2224 = vunpack.c.l.b16 %v580
    %v2225 = vunpack.c.h.b16 %v580
    %v2226 = vunpack.c.l.b16 %v581
    %v2227 = vunpack.c.h.b16 %v581
    %v2228 = vunpack.c.l.b16 %v582
    %v2229 = vunpack.c.h.b16 %v582
    %v2230 = vunpack.c.l.b16 %v583
    %v2231 = vunpack.c.h.b16 %v583
    %v2232 = vunpack.c.l.b16 %v584
    %v2233 = vunpack.c.h.b16 %v584
    %v2234 = vunpack.c.l.b16 %v585
    %v2235 = vunpack.c.h.b16 %v585
    %v2236 = vunpack.c.l.b16 %v586
    %v2237 = vunpack.c.h.b16 %v586
    %v2238 = vunpack.c.l.b16 %v587
    %v2239 = vunpack.c.h.b16 %v587
    %v2240 = vunpack.c.l.b16 %v588
    %v2241 = vunpack.c.h.b16 %v588
    %v2242 = vunpack.c.l.b16 %v589
    %v2243 = vunpack.c.h.b16 %v589
    %v2244 = vunpack.c.l.b16 %v590
    %v2245 = vunpack.c.h.b16 %v590
    %v2246 = vunpack.c.l.b16 %v591
    %v2247 = vunpack.c.h.b16 %v591
    %v2248 = vunpack.c.l.b16 %v592
    %v2249 = vunpack.c.h.b16 %v592
    %v2250 = vunpack.c.l.b16 %v593
    %v2251 = vunpack.c.h.b16 %v593
    %v2252 = vunpack.c.l.b16 %v594
    %v2253 = vunpack.c.h.b16 %v594
    %v2254 = vunpack.c.l.b16 %v595
    %v2255 = vunpack.c.h.b16 %v595
    %v2256 = vpack.c.b16 %v1494, %v1488
    %v2257 = vpack.c.b16 %v1495, %v1489
    %v2258 = vpack.c.b16 %v1496, %v1490
    %v2259 = vpack.c.b16 %v1497, %v1491
    %v2260 = vpack.c.b16 %v1498, %v1492
    %v2261 = vpack.c.b16 %v1499, %v1493
    %v2262 = vpack.c.b16 %v1506, %v1500
    %v2263 = vpack.c.b16 %v1507, %v1501
    %v2264 = vpack.c.b16 %v1508, %v1502
    %v2265 = vpack.c.b16 %v1509, %v1503
    %v2266 = vpack.c.b16 %v1510, %v1504
    %v2267 = vpack.c.b16 %v1511, %v1505
    %v2268 = vpack.c.b16 %v1518, %v1512
    %v2269 = vpack.c.b16 %v1519, %v1513
    %v2270 = vpack.c.b16 %v1520, %v1514
    %v2271 = vpack.c.b16 %v1521, %v1515
    %v2272 = vpack.c.b16 %v1522, %v1516
    %v2273 = vpack.c.b16 %v1523, %v1517
    %v2274 = vpack.c.b16 %v1530, %v1524
    %v2275 = vpack.c.b16 %v1531, %v1525
    %v2276 = vpack.c.b16 %v1532, %v1526
    %v2277 = vpack.c.b16 %v1533, %v1527
    %v2278 = vpack.c.b16 %v1534, %v1528
    %v2279 = vpack.c.b16 %v1535, %v1529
    %v2280 = vpack.c.b16 %v1542, %v1536
    %v2281 = vpack.c.b16 %v1543, %v1537
    %v2282 = vpack.c.b16 %v1544, %v1538
    %v2283 = vpack.c.b16 %v1545, %v1539
    %v2284 = vpack.c.b16 %v1546, %v1540
    %v2285 = vpack.c.b16 %v1547, %v1541
    %v2286 = vpack.c.b16 %v1554, %v1548
    %v2287 = vpack.c.b16 %v1555, %v1549
    %v2288 = vpack.c.b16 %v1556, %v1550
    %v2289 = vpack.c.b16 %v1557, %v1551
    %v2290 = vpack.c.b16 %v1558, %v1552
    %v2291 = vpack.c.b16 %v1559, %v1553
    %v2292 = vpack.c.b16 %v1566, %v1560
    %v2293 = vpack.c.b16 %v1567, %v1561
    %v2294 = vpack.c.b16 %v1568, %v1562
    %v2295 = vpack.c.b16 %v1569, %v1563
    %v2296 = vpack.c.b16 %v1570, %v1564
    %v2297 = vpack.c.b16 %v1571, %v1565
    %v2298 = vpack.c.b16 %v1578, %v1572
    %v2299 = vpack.c.b16 %v1579, %v1573
    %v2300 = vpack.c.b16 %v1580, %v1574
    %v2301 = vpack.c.b16 %v1581, %v1575
    %v2302 = vpack.c.b16 %v1582, %v1576
    %v2303 = vpack.c.b16 %v1583, %v1577
    %v2304 = vpack.c.b16 %v1590, %v1584
    %v2305 = vpack.c.b16 %v1591, %v1585
    %v2306 = vpack.c.b16 %v1592, %v1586
    %v2307 = vpack.c.b16 %v1593, %v1587
    %v2308 = vpack.c.b16 %v1594, %v1588
    %v2309 = vpack.c.b16 %v1595, %v1589
    %v2310 = vpack.c.b16 %v1602, %v1596
    %v2311 = vpack.c.b16 %v1603, %v1597
    %v2312 = vpack.c.b16 %v1604, %v1598
    %v2313 = vpack.c.b16 %v1605, %v1599
    %v2314 = vpack.c.b16 %v1606, %v1600
    %v2315 = vpack.c.b16 %v1607, %v1601
    %v2316 = vpack.c.b16 %v1614, %v1608
    %v2317 = vpack.c.b16 %v1615, %v1609
    %v2318 = vpack.c.b16 %v1616, %v1610
    %v2319 = vpack.c.b16 %v1617, %v1611
    %v2320 = vpack.c.b16 %v1618, %v1612
    %v2321 = vpack.c.b16 %v1619, %v1613
    %v2322 = vpack.c.b16 %v1626, %v1620
    %v2323 = vpack.c.b16 %v1627, %v1621
    %v2324 = vpack.c.b16 %v1628, %v1622
    %v2325 = vpack.c.b16 %v1629, %v1623
    %v2326 = vpack.c.b16 %v1630, %v1624
    %v2327 = vpack.c.b16 %v1631, %v1625
    %v2328 = vpack.c.b16 %v1638, %v1632
    %v2329 = vpack.c.b16 %v1639, %v1633
    %v2330 = vpack.c.b16 %v1640, %v1634
    %v2331 = vpack.c.b16 %v1641, %v1635
    %v2332 = vpack.c.b16 %v1642, %v1636
    %v2333 = vpack.c.b16 %v1643, %v1637
    %v2334 = vpack.c.b16 %v1650, %v1644
    %v2335 = vpack.c.b16 %v1651, %v1645
    %v2336 = vpack.c.b16 %v1652, %v1646
    %v2337 = vpack.c.b16 %v1653, %v1647
    %v2338 = vpack.c.b16 %v1654, %v1648
    %v2339 = vpack.c.b16 %v1655, %v1649
    %v2340 = vpack.c.b16 %v1662, %v1656
    %v2341 = vpack.c.b16 %v1663, %v1657
    %v2342 = vpack.c.b16 %v1664, %v1658
    %v2343 = vpack.c.b16 %v1665, %v1659
    %v2344 = vpack.c.b16 %v1666, %v1660
    %v2345 = vpack.c.b16 %v1667, %v1661
    %v2346 = vpack.c.b16 %v1674, %v1668
    %v2347 = vpack.c.b16 %v1675, %v1669
    %v2348 = vpack.c.b16 %v1676, %v1670
    %v2349 = vpack.c.b16 %v1677, %v1671
    %v2350 = vpack.c.b16 %v1678, %v1672
    %v2351 = vpack.c.b16 %v1679, %v1673
    %v2352 = vpack.c.b16 %v1686, %v1680
    %v2353 = vpack.c.b16 %v1687, %v1681
    %v2354 = vpack.c.b16 %v1688, %v1682
    %v2355 = vpack.c.b16 %v1689, %v1683
    %v2356 = vpack.c.b16 %v1690, %v1684
    %v2357 = vpack.c.b16 %v1691, %v1685
    %v2358 = vpack.c.b16 %v1698, %v1692
    %v2359 = vpack.c.b16 %v1699, %v1693
    %v2360 = vpack.c.b16 %v1700, %v1694
    %v2361 = vpack.c.b16 %v1701, %v1695
    %v2362 = vpack.c.b16 %v1702, %v1696
    %v2363 = vpack.c.b16 %v1703, %v1697
    %v2364 = vpack.c.b16 %v1710, %v1704
    %v2365 = vpack.c.b16 %v1711, %v1705
    %v2366 = vpack.c.b16 %v1712, %v1706
    %v2367 = vpack.c.b16 %v1713, %v1707
    %v2368 = vpack.c.b16 %v1714, %v1708
    %v2369 = vpack.c.b16 %v1715, %v1709
    %v2370 = vpack.c.b16 %v1722, %v1716
    %v2371 = vpack.c.b16 %v1723, %v1717
    %v2372 = vpack.c.b16 %v1724, %v1718
    %v2373 = vpack.c.b16 %v1725, %v1719
    %v2374 = vpack.c.b16 %v1726, %v1720
    %v2375 = vpack.c.b16 %v1727, %v1721
    %v2376 = vpack.c.b16 %v1734, %v1728
    %v2377 = vpack.c.b16 %v1735, %v1729
    %v2378 = vpack.c.b16 %v1736, %v1730
    %v2379 = vpack.c.b16 %v1737, %v1731
    %v2380 = vpack.c.b16 %v1738, %v1732
    %v2381 = vpack.c.b16 %v1739, %v1733
    %v2382 = vpack.c.b16 %v1746, %v1740
    %v2383 = vpack.c.b16 %v1747, %v1741
    %v2384 = vpack.c.b16 %v1748, %v1742
    %v2385 = vpack.c.b16 %v1749, %v1743
    %v2386 = vpack.c.b16 %v1750, %v1744
    %v2387 = vpack.c.b16 %v1751, %v1745
    %v2388 = vpack.c.b16 %v1758, %v1752
    %v2389 = vpack.c.b16 %v1759, %v1753
    %v2390 = vpack.c.b16 %v1760, %v1754
    %v2391 = vpack.c.b16 %v1761, %v1755
    %v2392 = vpack.c.b16 %v1762, %v1756
    %v2393 = vpack.c.b16 %v1763, %v1757
    %v2394 = vpack.c.b16 %v1770, %v1764
    %v2395 = vpack.c.b16 %v1771, %v1765
    %v2396 = vpack.c.b16 %v1772, %v1766
    %v2397 = vpack.c.b16 %v1773, %v1767
    %v2398 = vpack.c.b16 %v1774, %v1768
    %v2399 = vpack.c.b16 %v1775, %v1769
    %v2400 = vpack.c.b16 %v1782, %v1776
    %v2401 = vpack.c.b16 %v1783, %v1777
    %v2402 = vpack.c.b16 %v1784, %v1778
    %v2403 = vpack.c.b16 %v1785, %v1779
    %v2404 = vpack.c.b16 %v1786, %v1780
    %v2405 = vpack.c.b16 %v1787, %v1781
    %v2406 = vpack.c.b16 %v1794, %v1788
    %v2407 = vpack.c.b16 %v1795, %v1789
    %v2408 = vpack.c.b16 %v1796, %v1790
    %v2409 = vpack.c.b16 %v1797, %v1791
    %v2410 = vpack.c.b16 %v1798, %v1792
    %v2411 = vpack.c.b16 %v1799, %v1793
    %v2412 = vpack.c.b16 %v1806, %v1800
    %v2413 = vpack.c.b16 %v1807, %v1801
    %v2414 = vpack.c.b16 %v1808, %v1802
    %v2415 = vpack.c.b16 %v1809, %v1803
    %v2416 = vpack.c.b16 %v1810, %v1804
    %v2417 = vpack.c.b16 %v1811, %v1805
    %v2418 = vpack.c.b16 %v1818, %v1812
    %v2419 = vpack.c.b16 %v1819, %v1813
    %v2420 = vpack.c.b16 %v1820, %v1814
    %v2421 = vpack.c.b16 %v1821, %v1815
    %v2422 = vpack.c.b16 %v1822, %v1816
    %v2423 = vpack.c.b16 %v1823, %v1817
    %v2424 = vpack.c.b16 %v1830, %v1824
    %v2425 = vpack.c.b16 %v1831, %v1825
    %v2426 = vpack.c.b16 %v1832, %v1826
    %v2427 = vpack.c.b16 %v1833, %v1827
    %v2428 = vpack.c.b16 %v1834, %v1828
    %v2429 = vpack.c.b16 %v1835, %v1829
    %v2430 = vpack.c.b16 %v1842, %v1836
    %v2431 = vpack.c.b16 %v1843, %v1837
    %v2432 = vpack.c.b16 %v1844, %v1838
    %v2433 = vpack.c.b16 %v1845, %v1839
    %v2434 = vpack.c.b16 %v1846, %v1840
    %v2435 = vpack.c.b16 %v1847, %v1841
    %v2436 = vpack.c.b16 %v1854, %v1848
    %v2437 = vpack.c.b16 %v1855, %v1849
    %v2438 = vpack.c.b16 %v1856, %v1850
    %v2439 = vpack.c.b16 %v1857, %v1851
    %v2440 = vpack.c.b16 %v1858, %v1852
    %v2441 = vpack.c.b16 %v1859, %v1853
    %v2442 = vpack.c.b16 %v1866, %v1860
    %v2443 = vpack.c.b16 %v1867, %v1861
    %v2444 = vpack.c.b16 %v1868, %v1862
    %v2445 = vpack.c.b16 %v1869, %v1863
    %v2446 = vpack.c.b16 %v1870, %v1864
    %v2447 = vpack.c.b16 %v1871, %v1865
    %v2448 = vpack.c.b16 %v1878, %v1872
    %v2449 = vpack.c.b16 %v1879, %v1873
    %v2450 = vpack.c.b16 %v1880, %v1874
    %v2451 = vpack.c.b16 %v1881, %v1875
    %v2452 = vpack.c.b16 %v1882, %v1876
    %v2453 = vpack.c.b16 %v1883, %v1877
    %v2454 = vpack.c.b16 %v1890, %v1884
    %v2455 = vpack.c.b16 %v1891, %v1885
    %v2456 = vpack.c.b16 %v1892, %v1886
    %v2457 = vpack.c.b16 %v1893, %v1887
    %v2458 = vpack.c.b16 %v1894, %v1888
    %v2459 = vpack.c.b16 %v1895, %v1889
    %v2460 = vpack.c.b16 %v1902, %v1896
    %v2461 = vpack.c.b16 %v1903, %v1897
    %v2462 = vpack.c.b16 %v1904, %v1898
    %v2463 = vpack.c.b16 %v1905, %v1899
    %v2464 = vpack.c.b16 %v1906, %v1900
    %v2465 = vpack.c.b16 %v1907, %v1901
    %v2466 = vpack.c.b16 %v1914, %v1908
    %v2467 = vpack.c.b16 %v1915, %v1909
    %v2468 = vpack.c.b16 %v1916, %v1910
    %v2469 = vpack.c.b16 %v1917, %v1911
    %v2470 = vpack.c.b16 %v1918, %v1912
    %v2471 = vpack.c.b16 %v1919, %v1913
    %v2472 = vpack.c.b16 %v1926, %v1920
    %v2473 = vpack.c.b16 %v1927, %v1921
    %v2474 = vpack.c.b16 %v1928, %v1922
    %v2475 = vpack.c.b16 %v1929, %v1923
    %v2476 = vpack.c.b16 %v1930, %v1924
    %v2477 = vpack.c.b16 %v1931, %v1925
    %v2478 = vpack.c.b16 %v1938, %v1932
    %v2479 = vpack.c.b16 %v1939, %v1933
    %v2480 = vpack.c.b16 %v1940, %v1934
    %v2481 = vpack.c.b16 %v1941, %v1935
    %v2482 = vpack.c.b16 %v1942, %v1936
    %v2483 = vpack.c.b16 %v1943, %v1937
    %v2484 = vpack.c.b16 %v1950, %v1944
    %v2485 = vpack.c.b16 %v1951, %v1945
    %v2486 = vpack.c.b16 %v1952, %v1946
    %v2487 = vpack.c.b16 %v1953, %v1947
    %v2488 = vpack.c.b16 %v1954, %v1948
    %v2489 = vpack.c.b16 %v1955, %v1949
    %v2490 = vpack.c.b16 %v1962, %v1956
    %v2491 = vpack.c.b16 %v1963, %v1957
    %v2492 = vpack.c.b16 %v1964, %v1958
    %v2493 = vpack.c.b16 %v1965, %v1959
    %v2494 = vpack.c.b16 %v1966, %v1960
    %v2495 = vpack.c.b16 %v1967, %v1961
    %v2496 = vpack.c.b16 %v1974, %v1968
    %v2497 = vpack.c.b16 %v1975, %v1969
    %v2498 = vpack.c.b16 %v1976, %v1970
    %v2499 = vpack.c.b16 %v1977, %v1971
    %v2500 = vpack.c.b16 %v1978, %v1972
    %v2501 = vpack.c.b16 %v1979, %v1973
    %v2502 = vpack.c.b16 %v1986, %v1980
    %v2503 = vpack.c.b16 %v1987, %v1981
    %v2504 = vpack.c.b16 %v1988, %v1982
    %v2505 = vpack.c.b16 %v1989, %v1983
    %v2506 = vpack.c.b16 %v1990, %v1984
    %v2507 = vpack.c.b16 %v1991, %v1985
    %v2508 = vpack.c.b16 %v1998, %v1992
    %v2509 = vpack.c.b16 %v1999, %v1993
    %v2510 = vpack.c.b16 %v2000, %v1994
    %v2511 = vpack.c.b16 %v2001, %v1995
    %v2512 = vpack.c.b16 %v2002, %v1996
    %v2513 = vpack.c.b16 %v2003, %v1997
    %v2514 = vpack.c.b16 %v2010, %v2004
    %v2515 = vpack.c.b16 %v2011, %v2005
    %v2516 = vpack.c.b16 %v2012, %v2006
    %v2517 = vpack.c.b16 %v2013, %v2007
    %v2518 = vpack.c.b16 %v2014, %v2008
    %v2519 = vpack.c.b16 %v2015, %v2009
    %v2520 = vpack.c.b16 %v2022, %v2016
    %v2521 = vpack.c.b16 %v2023, %v2017
    %v2522 = vpack.c.b16 %v2024, %v2018
    %v2523 = vpack.c.b16 %v2025, %v2019
    %v2524 = vpack.c.b16 %v2026, %v2020
    %v2525 = vpack.c.b16 %v2027, %v2021
    %v2526 = vpack.c.b16 %v2034, %v2028
    %v2527 = vpack.c.b16 %v2035, %v2029
    %v2528 = vpack.c.b16 %v2036, %v2030
    %v2529 = vpack.c.b16 %v2037, %v2031
    %v2530 = vpack.c.b16 %v2038, %v2032
    %v2531 = vpack.c.b16 %v2039, %v2033
    %v2532 = vpack.c.b16 %v2046, %v2040
    %v2533 = vpack.c.b16 %v2047, %v2041
    %v2534 = vpack.c.b16 %v2048, %v2042
    %v2535 = vpack.c.b16 %v2049, %v2043
    %v2536 = vpack.c.b16 %v2050, %v2044
    %v2537 = vpack.c.b16 %v2051, %v2045
    %v2538 = vpack.c.b16 %v2058, %v2052
    %v2539 = vpack.c.b16 %v2059, %v2053
    %v2540 = vpack.c.b16 %v2060, %v2054
    %v2541 = vpack.c.b16 %v2061, %v2055
    %v2542 = vpack.c.b16 %v2062, %v2056
    %v2543 = vpack.c.b16 %v2063, %v2057
    %v2544 = vpack.c.b16 %v2070, %v2064
    %v2545 = vpack.c.b16 %v2071, %v2065
    %v2546 = vpack.c.b16 %v2072, %v2066
    %v2547 = vpack.c.b16 %v2073, %v2067
    %v2548 = vpack.c.b16 %v2074, %v2068
    %v2549 = vpack.c.b16 %v2075, %v2069
    %v2550 = vpack.c.b16 %v2082, %v2076
    %v2551 = vpack.c.b16 %v2083, %v2077
    %v2552 = vpack.c.b16 %v2084, %v2078
    %v2553 = vpack.c.b16 %v2085, %v2079
    %v2554 = vpack.c.b16 %v2086, %v2080
    %v2555 = vpack.c.b16 %v2087, %v2081
    %v2556 = vpack.c.b16 %v2094, %v2088
    %v2557 = vpack.c.b16 %v2095, %v2089
    %v2558 = vpack.c.b16 %v2096, %v2090
    %v2559 = vpack.c.b16 %v2097, %v2091
    %v2560 = vpack.c.b16 %v2098, %v2092
    %v2561 = vpack.c.b16 %v2099, %v2093
    %v2562 = vpack.c.b16 %v2106, %v2100
    %v2563 = vpack.c.b16 %v2107, %v2101
    %v2564 = vpack.c.b16 %v2108, %v2102
    %v2565 = vpack.c.b16 %v2109, %v2103
    %v2566 = vpack.c.b16 %v2110, %v2104
    %v2567 = vpack.c.b16 %v2111, %v2105
    %v2568 = vpack.c.b16 %v2118, %v2112
    %v2569 = vpack.c.b16 %v2119, %v2113
    %v2570 = vpack.c.b16 %v2120, %v2114
    %v2571 = vpack.c.b16 %v2121, %v2115
    %v2572 = vpack.c.b16 %v2122, %v2116
    %v2573 = vpack.c.b16 %v2123, %v2117
    %v2574 = vpack.c.b16 %v2130, %v2124
    %v2575 = vpack.c.b16 %v2131, %v2125
    %v2576 = vpack.c.b16 %v2132, %v2126
    %v2577 = vpack.c.b16 %v2133, %v2127
    %v2578 = vpack.c.b16 %v2134, %v2128
    %v2579 = vpack.c.b16 %v2135, %v2129
    %v2580 = vpack.c.b16 %v2142, %v2136
    %v2581 = vpack.c.b16 %v2143, %v2137
    %v2582 = vpack.c.b16 %v2144, %v2138
    %v2583 = vpack.c.b16 %v2145, %v2139
    %v2584 = vpack.c.b16 %v2146, %v2140
    %v2585 = vpack.c.b16 %v2147, %v2141
    %v2586 = vpack.c.b16 %v2154, %v2148
    %v2587 = vpack.c.b16 %v2155, %v2149
    %v2588 = vpack.c.b16 %v2156, %v2150
    %v2589 = vpack.c.b16 %v2157, %v2151
    %v2590 = vpack.c.b16 %v2158, %v2152
    %v2591 = vpack.c.b16 %v2159, %v2153
    %v2592 = vpack.c.b16 %v2166, %v2160
    %v2593 = vpack.c.b16 %v2167, %v2161
    %v2594 = vpack.c.b16 %v2168, %v2162
    %v2595 = vpack.c.b16 %v2169, %v2163
    %v2596 = vpack.c.b16 %v2170, %v2164
    %v2597 = vpack.c.b16 %v2171, %v2165
    %v2598 = vpack.c.b16 %v2178, %v2172
    %v2599 = vpack.c.b16 %v2179, %v2173
    %v2600 = vpack.c.b16 %v2180, %v2174
    %v2601 = vpack.c.b16 %v2181, %v2175
    %v2602 = vpack.c.b16 %v2182, %v2176
    %v2603 = vpack.c.b16 %v2183, %v2177
    %v2604 = vpack.c.b16 %v2190, %v2184
    %v2605 = vpack.c.b16 %v2191, %v2185
    %v2606 = vpack.c.b16 %v2192, %v2186
    %v2607 = vpack.c.b16 %v2193, %v2187
    %v2608 = vpack.c.b16 %v2194, %v2188
    %v2609 = vpack.c.b16 %v2195, %v2189
    %v2610 = vpack.c.b16 %v2202, %v2196
    %v2611 = vpack.c.b16 %v2203, %v2197
    %v2612 = vpack.c.b16 %v2204, %v2198
    %v2613 = vpack.c.b16 %v2205, %v2199
    %v2614 = vpack.c.b16 %v2206, %v2200
    %v2615 = vpack.c.b16 %v2207, %v2201
    %v2616 = vpack.c.b16 %v2214, %v2208
    %v2617 = vpack.c.b16 %v2215, %v2209
    %v2618 = vpack.c.b16 %v2216, %v2210
    %v2619 = vpack.c.b16 %v2217, %v2211
    %v2620 = vpack.c.b16 %v2218, %v2212
    %v2621 = vpack.c.b16 %v2219, %v2213
    %v2622 = vpack.c.b16 %v2226, %v2220
    %v2623 = vpack.c.b16 %v2227, %v2221
    %v2624 = vpack.c.b16 %v2228, %v2222
    %v2625 = vpack.c.b16 %v2229, %v2223
    %v2626 = vpack.c.b16 %v2230, %v2224
    %v2627 = vpack.c.b16 %v2231, %v2225
    %v2628 = vpack.c.b16 %v2238, %v2232
    %v2629 = vpack.c.b16 %v2239, %v2233
    %v2630 = vpack.c.b16 %v2240, %v2234
    %v2631 = vpack.c.b16 %v2241, %v2235
    %v2632 = vpack.c.b16 %v2242, %v2236
    %v2633 = vpack.c.b16 %v2243, %v2237
    %v2634 = vpack.c.b16 %v2250, %v2244
    %v2635 = vpack.c.b16 %v2251, %v2245
    %v2636 = vpack.c.b16 %v2252, %v2246
    %v2637 = vpack.c.b16 %v2253, %v2247
    %v2638 = vpack.c.b16 %v2254, %v2248
    %v2639 = vpack.c.b16 %v2255, %v2249
    %3024 = vmatpush.bf16.msra.mxu0 %v2298
    %3025 = vmatpush.bf16.msra.mxu0 %v2292
    %3026 = vmatpush.bf16.msra.mxu0 %v2286
    %3027 = vmatpush.bf16.msra.mxu0 %v2280
    %3028 = vmatpush.bf16.msra.mxu0 %v2274
    %3029 = vmatpush.bf16.msra.mxu0 %v2268
    %3030 = vmatpush.bf16.msra.mxu0 %v2262
    %3031 = vmatpush.bf16.msra.mxu0 %v2256
    %3032 = vmatmul.bf16.gmra.mxu0 %v896
    %v3033 = vpop.f32.mrf.mxu0
    %v3034 = vadd.f32 0.0, %v3033
    %v3035 = vpop.f32.mrf.mxu0
    %v3036 = vadd.f32 0.0, %v3035
    %3037 = vmatmul.bf16.gmra.mxu0 %v904
    %v3038 = vpop.f32.mrf.mxu0
    %v3039 = vadd.f32 0.0, %v3038
    %v3040 = vpop.f32.mrf.mxu0
    %v3041 = vadd.f32 0.0, %v3040
    %3042 = vmatmul.bf16.gmra.mxu0 %v912
    %v3043 = vpop.f32.mrf.mxu0
    %v3044 = vadd.f32 0.0, %v3043
    %v3045 = vpop.f32.mrf.mxu0
    %v3046 = vadd.f32 0.0, %v3045
    %3047 = vmatmul.bf16.gmra.mxu0 %v920
    %v3048 = vpop.f32.mrf.mxu0
    %v3049 = vadd.f32 0.0, %v3048
    %v3050 = vpop.f32.mrf.mxu0
    %v3051 = vadd.f32 0.0, %v3050
    %3052 = vmatmul.bf16.gmra.mxu0 %v928
    %v3053 = vpop.f32.mrf.mxu0
    %v3054 = vadd.f32 0.0, %v3053
    %v3055 = vpop.f32.mrf.mxu0
    %v3056 = vadd.f32 0.0, %v3055
    %3057 = vmatmul.bf16.gmra.mxu0 %v936
    %v3058 = vpop.f32.mrf.mxu0
    %v3059 = vadd.f32 0.0, %v3058
    %v3060 = vpop.f32.mrf.mxu0
    %v3061 = vadd.f32 0.0, %v3060
    %3062 = vmatmul.bf16.gmra.mxu0 %v944
    %v3063 = vpop.f32.mrf.mxu0
    %v3064 = vadd.f32 0.0, %v3063
    %v3065 = vpop.f32.mrf.mxu0
    %v3066 = vadd.f32 0.0, %v3065
    %3067 = vmatmul.bf16.gmra.mxu0 %v952
    %v3068 = vpop.f32.mrf.mxu0
    %v3069 = vadd.f32 0.0, %v3068
    %v3070 = vpop.f32.mrf.mxu0
    %v3071 = vadd.f32 0.0, %v3070
    %3072 = vmatmul.bf16.gmra.mxu0 %v960
    %v3073 = vpop.f32.mrf.mxu0
    %v3074 = vadd.f32 0.0, %v3073
    %v3075 = vpop.f32.mrf.mxu0
    %v3076 = vadd.f32 0.0, %v3075
    %3077 = vmatmul.bf16.gmra.mxu0 %v968
    %v3078 = vpop.f32.mrf.mxu0
    %v3079 = vadd.f32 0.0, %v3078
    %v3080 = vpop.f32.mrf.mxu0
    %v3081 = vadd.f32 0.0, %v3080
    %3082 = vmatmul.bf16.gmra.mxu0 %v976
    %v3083 = vpop.f32.mrf.mxu0
    %v3084 = vadd.f32 0.0, %v3083
    %v3085 = vpop.f32.mrf.mxu0
    %v3086 = vadd.f32 0.0, %v3085
    %3087 = vmatmul.bf16.gmra.mxu0 %v984
    %v3088 = vpop.f32.mrf.mxu0
    %v3089 = vadd.f32 0.0, %v3088
    %v3090 = vpop.f32.mrf.mxu0
    %v3091 = vadd.f32 0.0, %v3090
    %3092 = vmatmul.bf16.gmra.mxu0 %v992
    %v3093 = vpop.f32.mrf.mxu0
    %v3094 = vadd.f32 0.0, %v3093
    %v3095 = vpop.f32.mrf.mxu0
    %3096 = vdwg.mxu0
    %3097 = vmatpush.bf16.msra.mxu0 %v2346
    %3098 = vmatpush.bf16.msra.mxu0 %v2340
    %3099 = vmatpush.bf16.msra.mxu0 %v2334
    %3100 = vmatpush.bf16.msra.mxu0 %v2328
    %3101 = vmatpush.bf16.msra.mxu0 %v2322
    %3102 = vmatpush.bf16.msra.mxu0 %v2316
    %3103 = vmatpush.bf16.msra.mxu0 %v2310
    %3104 = vmatpush.bf16.msra.mxu0 %v2304
    %3105 = vmatmul.bf16.gmra.mxu0 %v897
    %v3106 = vpop.f32.mrf.mxu0
    %v3107 = vadd.f32 %v3034, %v3106
    %v3108 = vpop.f32.mrf.mxu0
    %v3109 = vadd.f32 %v3036, %v3108
    %3110 = vmatmul.bf16.gmra.mxu0 %v905
    %v3111 = vpop.f32.mrf.mxu0
    %v3112 = vadd.f32 %v3039, %v3111
    %v3113 = vpop.f32.mrf.mxu0
    %v3114 = vadd.f32 %v3041, %v3113
    %3115 = vmatmul.bf16.gmra.mxu0 %v913
    %v3116 = vpop.f32.mrf.mxu0
    %v3117 = vadd.f32 %v3044, %v3116
    %v3118 = vpop.f32.mrf.mxu0
    %v3119 = vadd.f32 %v3046, %v3118
    %3120 = vmatmul.bf16.gmra.mxu0 %v921
    %v3121 = vpop.f32.mrf.mxu0
    %v3122 = vadd.f32 %v3049, %v3121
    %v3123 = vpop.f32.mrf.mxu0
    %v3124 = vadd.f32 %v3051, %v3123
    %3125 = vmatmul.bf16.gmra.mxu0 %v929
    %v3126 = vpop.f32.mrf.mxu0
    %v3127 = vadd.f32 %v3054, %v3126
    %v3128 = vpop.f32.mrf.mxu0
    %v3129 = vadd.f32 %v3056, %v3128
    %3130 = vmatmul.bf16.gmra.mxu0 %v937
    %v3131 = vpop.f32.mrf.mxu0
    %v3132 = vadd.f32 %v3059, %v3131
    %v3133 = vpop.f32.mrf.mxu0
    %v3134 = vadd.f32 %v3061, %v3133
    %3135 = vmatmul.bf16.gmra.mxu0 %v945
    %v3136 = vpop.f32.mrf.mxu0
    %v3137 = vadd.f32 %v3064, %v3136
    %v3138 = vpop.f32.mrf.mxu0
    %v3139 = vadd.f32 %v3066, %v3138
    %3140 = vmatmul.bf16.gmra.mxu0 %v953
    %v3141 = vpop.f32.mrf.mxu0
    %v3142 = vadd.f32 %v3069, %v3141
    %v3143 = vpop.f32.mrf.mxu0
    %v3144 = vadd.f32 %v3071, %v3143
    %3145 = vmatmul.bf16.gmra.mxu0 %v961
    %v3146 = vpop.f32.mrf.mxu0
    %v3147 = vadd.f32 %v3074, %v3146
    %v3148 = vpop.f32.mrf.mxu0
    %v3149 = vadd.f32 %v3076, %v3148
    %3150 = vmatmul.bf16.gmra.mxu0 %v969
    %v3151 = vpop.f32.mrf.mxu0
    %v3152 = vadd.f32 %v3079, %v3151
    %v3153 = vpop.f32.mrf.mxu0
    %v3154 = vadd.f32 %v3081, %v3153
    %3155 = vmatmul.bf16.gmra.mxu0 %v977
    %v3156 = vpop.f32.mrf.mxu0
    %v3157 = vadd.f32 %v3084, %v3156
    %v3158 = vpop.f32.mrf.mxu0
    %v3159 = vadd.f32 %v3086, %v3158
    %3160 = vmatmul.bf16.gmra.mxu0 %v985
    %v3161 = vpop.f32.mrf.mxu0
    %v3162 = vadd.f32 %v3089, %v3161
    %v3163 = vpop.f32.mrf.mxu0
    %v3164 = vadd.f32 %v3091, %v3163
    %3165 = vmatmul.bf16.gmra.mxu0 %v993
    %v3166 = vpop.f32.mrf.mxu0
    %v3167 = vadd.f32 %v3094, %v3166
    %v3168 = vpop.f32.mrf.mxu0
    %3169 = vdwg.mxu0
    %3170 = vmatpush.bf16.msra.mxu0 %v2394
    %3171 = vmatpush.bf16.msra.mxu0 %v2388
    %3172 = vmatpush.bf16.msra.mxu0 %v2382
    %3173 = vmatpush.bf16.msra.mxu0 %v2376
    %3174 = vmatpush.bf16.msra.mxu0 %v2370
    %3175 = vmatpush.bf16.msra.mxu0 %v2364
    %3176 = vmatpush.bf16.msra.mxu0 %v2358
    %3177 = vmatpush.bf16.msra.mxu0 %v2352
    %3178 = vmatmul.bf16.gmra.mxu0 %v898
    %v3179 = vpop.f32.mrf.mxu0
    %v3180 = vadd.f32 %v3107, %v3179
    %v3181 = vpop.f32.mrf.mxu0
    %v3182 = vadd.f32 %v3109, %v3181
    %3183 = vmatmul.bf16.gmra.mxu0 %v906
    %v3184 = vpop.f32.mrf.mxu0
    %v3185 = vadd.f32 %v3112, %v3184
    %v3186 = vpop.f32.mrf.mxu0
    %v3187 = vadd.f32 %v3114, %v3186
    %3188 = vmatmul.bf16.gmra.mxu0 %v914
    %v3189 = vpop.f32.mrf.mxu0
    %v3190 = vadd.f32 %v3117, %v3189
    %v3191 = vpop.f32.mrf.mxu0
    %v3192 = vadd.f32 %v3119, %v3191
    %3193 = vmatmul.bf16.gmra.mxu0 %v922
    %v3194 = vpop.f32.mrf.mxu0
    %v3195 = vadd.f32 %v3122, %v3194
    %v3196 = vpop.f32.mrf.mxu0
    %v3197 = vadd.f32 %v3124, %v3196
    %3198 = vmatmul.bf16.gmra.mxu0 %v930
    %v3199 = vpop.f32.mrf.mxu0
    %v3200 = vadd.f32 %v3127, %v3199
    %v3201 = vpop.f32.mrf.mxu0
    %v3202 = vadd.f32 %v3129, %v3201
    %3203 = vmatmul.bf16.gmra.mxu0 %v938
    %v3204 = vpop.f32.mrf.mxu0
    %v3205 = vadd.f32 %v3132, %v3204
    %v3206 = vpop.f32.mrf.mxu0
    %v3207 = vadd.f32 %v3134, %v3206
    %3208 = vmatmul.bf16.gmra.mxu0 %v946
    %v3209 = vpop.f32.mrf.mxu0
    %v3210 = vadd.f32 %v3137, %v3209
    %v3211 = vpop.f32.mrf.mxu0
    %v3212 = vadd.f32 %v3139, %v3211
    %3213 = vmatmul.bf16.gmra.mxu0 %v954
    %v3214 = vpop.f32.mrf.mxu0
    %v3215 = vadd.f32 %v3142, %v3214
    %v3216 = vpop.f32.mrf.mxu0
    %v3217 = vadd.f32 %v3144, %v3216
    %3218 = vmatmul.bf16.gmra.mxu0 %v962
    %v3219 = vpop.f32.mrf.mxu0
    %v3220 = vadd.f32 %v3147, %v3219
    %v3221 = vpop.f32.mrf.mxu0
    %v3222 = vadd.f32 %v3149, %v3221
    %3223 = vmatmul.bf16.gmra.mxu0 %v970
    %v3224 = vpop.f32.mrf.mxu0
    %v3225 = vadd.f32 %v3152, %v3224
    %v3226 = vpop.f32.mrf.mxu0
    %v3227 = vadd.f32 %v3154, %v3226
    %3228 = vmatmul.bf16.gmra.mxu0 %v978
    %v3229 = vpop.f32.mrf.mxu0
    %v3230 = vadd.f32 %v3157, %v3229
    %v3231 = vpop.f32.mrf.mxu0
    %v3232 = vadd.f32 %v3159, %v3231
    %3233 = vmatmul.bf16.gmra.mxu0 %v986
    %v3234 = vpop.f32.mrf.mxu0
    %v3235 = vadd.f32 %v3162, %v3234
    %v3236 = vpop.f32.mrf.mxu0
    %v3237 = vadd.f32 %v3164, %v3236
    %3238 = vmatmul.bf16.gmra.mxu0 %v994
    %v3239 = vpop.f32.mrf.mxu0
    %v3240 = vadd.f32 %v3167, %v3239
    %v3241 = vpop.f32.mrf.mxu0
    %3242 = vdwg.mxu0
    %3243 = vmatpush.bf16.msra.mxu0 %v2442
    %3244 = vmatpush.bf16.msra.mxu0 %v2436
    %3245 = vmatpush.bf16.msra.mxu0 %v2430
    %3246 = vmatpush.bf16.msra.mxu0 %v2424
    %3247 = vmatpush.bf16.msra.mxu0 %v2418
    %3248 = vmatpush.bf16.msra.mxu0 %v2412
    %3249 = vmatpush.bf16.msra.mxu0 %v2406
    %3250 = vmatpush.bf16.msra.mxu0 %v2400
    %3251 = vmatmul.bf16.gmra.mxu0 %v899
    %v3252 = vpop.f32.mrf.mxu0
    %v3253 = vadd.f32 %v3180, %v3252
    %v3254 = vpop.f32.mrf.mxu0
    %v3255 = vadd.f32 %v3182, %v3254
    %3256 = vmatmul.bf16.gmra.mxu0 %v907
    %v3257 = vpop.f32.mrf.mxu0
    %v3258 = vadd.f32 %v3185, %v3257
    %v3259 = vpop.f32.mrf.mxu0
    %v3260 = vadd.f32 %v3187, %v3259
    %3261 = vmatmul.bf16.gmra.mxu0 %v915
    %v3262 = vpop.f32.mrf.mxu0
    %v3263 = vadd.f32 %v3190, %v3262
    %v3264 = vpop.f32.mrf.mxu0
    %v3265 = vadd.f32 %v3192, %v3264
    %3266 = vmatmul.bf16.gmra.mxu0 %v923
    %v3267 = vpop.f32.mrf.mxu0
    %v3268 = vadd.f32 %v3195, %v3267
    %v3269 = vpop.f32.mrf.mxu0
    %v3270 = vadd.f32 %v3197, %v3269
    %3271 = vmatmul.bf16.gmra.mxu0 %v931
    %v3272 = vpop.f32.mrf.mxu0
    %v3273 = vadd.f32 %v3200, %v3272
    %v3274 = vpop.f32.mrf.mxu0
    %v3275 = vadd.f32 %v3202, %v3274
    %3276 = vmatmul.bf16.gmra.mxu0 %v939
    %v3277 = vpop.f32.mrf.mxu0
    %v3278 = vadd.f32 %v3205, %v3277
    %v3279 = vpop.f32.mrf.mxu0
    %v3280 = vadd.f32 %v3207, %v3279
    %3281 = vmatmul.bf16.gmra.mxu0 %v947
    %v3282 = vpop.f32.mrf.mxu0
    %v3283 = vadd.f32 %v3210, %v3282
    %v3284 = vpop.f32.mrf.mxu0
    %v3285 = vadd.f32 %v3212, %v3284
    %3286 = vmatmul.bf16.gmra.mxu0 %v955
    %v3287 = vpop.f32.mrf.mxu0
    %v3288 = vadd.f32 %v3215, %v3287
    %v3289 = vpop.f32.mrf.mxu0
    %v3290 = vadd.f32 %v3217, %v3289
    %3291 = vmatmul.bf16.gmra.mxu0 %v963
    %v3292 = vpop.f32.mrf.mxu0
    %v3293 = vadd.f32 %v3220, %v3292
    %v3294 = vpop.f32.mrf.mxu0
    %v3295 = vadd.f32 %v3222, %v3294
    %3296 = vmatmul.bf16.gmra.mxu0 %v971
    %v3297 = vpop.f32.mrf.mxu0
    %v3298 = vadd.f32 %v3225, %v3297
    %v3299 = vpop.f32.mrf.mxu0
    %v3300 = vadd.f32 %v3227, %v3299
    %3301 = vmatmul.bf16.gmra.mxu0 %v979
    %v3302 = vpop.f32.mrf.mxu0
    %v3303 = vadd.f32 %v3230, %v3302
    %v3304 = vpop.f32.mrf.mxu0
    %v3305 = vadd.f32 %v3232, %v3304
    %3306 = vmatmul.bf16.gmra.mxu0 %v987
    %v3307 = vpop.f32.mrf.mxu0
    %v3308 = vadd.f32 %v3235, %v3307
    %v3309 = vpop.f32.mrf.mxu0
    %v3310 = vadd.f32 %v3237, %v3309
    %3311 = vmatmul.bf16.gmra.mxu0 %v995
    %v3312 = vpop.f32.mrf.mxu0
    %v3313 = vadd.f32 %v3240, %v3312
    %v3314 = vpop.f32.mrf.mxu0
    %3315 = vdwg.mxu0
    %3316 = vmatpush.bf16.msra.mxu0 %v2490
    %3317 = vmatpush.bf16.msra.mxu0 %v2484
    %3318 = vmatpush.bf16.msra.mxu0 %v2478
    %3319 = vmatpush.bf16.msra.mxu0 %v2472
    %3320 = vmatpush.bf16.msra.mxu0 %v2466
    %3321 = vmatpush.bf16.msra.mxu0 %v2460
    %3322 = vmatpush.bf16.msra.mxu0 %v2454
    %3323 = vmatpush.bf16.msra.mxu0 %v2448
    %3324 = vmatmul.bf16.gmra.mxu0 %v900
    %v3325 = vpop.f32.mrf.mxu0
    %v3326 = vadd.f32 %v3253, %v3325
    %v3327 = vpop.f32.mrf.mxu0
    %v3328 = vadd.f32 %v3255, %v3327
    %3329 = vmatmul.bf16.gmra.mxu0 %v908
    %v3330 = vpop.f32.mrf.mxu0
    %v3331 = vadd.f32 %v3258, %v3330
    %v3332 = vpop.f32.mrf.mxu0
    %v3333 = vadd.f32 %v3260, %v3332
    %3334 = vmatmul.bf16.gmra.mxu0 %v916
    %v3335 = vpop.f32.mrf.mxu0
    %v3336 = vadd.f32 %v3263, %v3335
    %v3337 = vpop.f32.mrf.mxu0
    %v3338 = vadd.f32 %v3265, %v3337
    %3339 = vmatmul.bf16.gmra.mxu0 %v924
    %v3340 = vpop.f32.mrf.mxu0
    %v3341 = vadd.f32 %v3268, %v3340
    %v3342 = vpop.f32.mrf.mxu0
    %v3343 = vadd.f32 %v3270, %v3342
    %3344 = vmatmul.bf16.gmra.mxu0 %v932
    %v3345 = vpop.f32.mrf.mxu0
    %v3346 = vadd.f32 %v3273, %v3345
    %v3347 = vpop.f32.mrf.mxu0
    %v3348 = vadd.f32 %v3275, %v3347
    %3349 = vmatmul.bf16.gmra.mxu0 %v940
    %v3350 = vpop.f32.mrf.mxu0
    %v3351 = vadd.f32 %v3278, %v3350
    %v3352 = vpop.f32.mrf.mxu0
    %v3353 = vadd.f32 %v3280, %v3352
    %3354 = vmatmul.bf16.gmra.mxu0 %v948
    %v3355 = vpop.f32.mrf.mxu0
    %v3356 = vadd.f32 %v3283, %v3355
    %v3357 = vpop.f32.mrf.mxu0
    %v3358 = vadd.f32 %v3285, %v3357
    %3359 = vmatmul.bf16.gmra.mxu0 %v956
    %v3360 = vpop.f32.mrf.mxu0
    %v3361 = vadd.f32 %v3288, %v3360
    %v3362 = vpop.f32.mrf.mxu0
    %v3363 = vadd.f32 %v3290, %v3362
    %3364 = vmatmul.bf16.gmra.mxu0 %v964
    %v3365 = vpop.f32.mrf.mxu0
    %v3366 = vadd.f32 %v3293, %v3365
    %v3367 = vpop.f32.mrf.mxu0
    %v3368 = vadd.f32 %v3295, %v3367
    %3369 = vmatmul.bf16.gmra.mxu0 %v972
    %v3370 = vpop.f32.mrf.mxu0
    %v3371 = vadd.f32 %v3298, %v3370
    %v3372 = vpop.f32.mrf.mxu0
    %v3373 = vadd.f32 %v3300, %v3372
    %3374 = vmatmul.bf16.gmra.mxu0 %v980
    %v3375 = vpop.f32.mrf.mxu0
    %v3376 = vadd.f32 %v3303, %v3375
    %v3377 = vpop.f32.mrf.mxu0
    %v3378 = vadd.f32 %v3305, %v3377
    %3379 = vmatmul.bf16.gmra.mxu0 %v988
    %v3380 = vpop.f32.mrf.mxu0
    %v3381 = vadd.f32 %v3308, %v3380
    %v3382 = vpop.f32.mrf.mxu0
    %v3383 = vadd.f32 %v3310, %v3382
    %3384 = vmatmul.bf16.gmra.mxu0 %v996
    %v3385 = vpop.f32.mrf.mxu0
    %v3386 = vadd.f32 %v3313, %v3385
    %v3387 = vpop.f32.mrf.mxu0
    %3388 = vdwg.mxu0
    %3389 = vmatpush.bf16.msra.mxu0 %v2538
    %3390 = vmatpush.bf16.msra.mxu0 %v2532
    %3391 = vmatpush.bf16.msra.mxu0 %v2526
    %3392 = vmatpush.bf16.msra.mxu0 %v2520
    %3393 = vmatpush.bf16.msra.mxu0 %v2514
    %3394 = vmatpush.bf16.msra.mxu0 %v2508
    %3395 = vmatpush.bf16.msra.mxu0 %v2502
    %3396 = vmatpush.bf16.msra.mxu0 %v2496
    %3397 = vmatmul.bf16.gmra.mxu0 %v901
    %v3398 = vpop.f32.mrf.mxu0
    %v3399 = vadd.f32 %v3326, %v3398
    %v3400 = vpop.f32.mrf.mxu0
    %v3401 = vadd.f32 %v3328, %v3400
    %3402 = vmatmul.bf16.gmra.mxu0 %v909
    %v3403 = vpop.f32.mrf.mxu0
    %v3404 = vadd.f32 %v3331, %v3403
    %v3405 = vpop.f32.mrf.mxu0
    %v3406 = vadd.f32 %v3333, %v3405
    %3407 = vmatmul.bf16.gmra.mxu0 %v917
    %v3408 = vpop.f32.mrf.mxu0
    %v3409 = vadd.f32 %v3336, %v3408
    %v3410 = vpop.f32.mrf.mxu0
    %v3411 = vadd.f32 %v3338, %v3410
    %3412 = vmatmul.bf16.gmra.mxu0 %v925
    %v3413 = vpop.f32.mrf.mxu0
    %v3414 = vadd.f32 %v3341, %v3413
    %v3415 = vpop.f32.mrf.mxu0
    %v3416 = vadd.f32 %v3343, %v3415
    %3417 = vmatmul.bf16.gmra.mxu0 %v933
    %v3418 = vpop.f32.mrf.mxu0
    %v3419 = vadd.f32 %v3346, %v3418
    %v3420 = vpop.f32.mrf.mxu0
    %v3421 = vadd.f32 %v3348, %v3420
    %3422 = vmatmul.bf16.gmra.mxu0 %v941
    %v3423 = vpop.f32.mrf.mxu0
    %v3424 = vadd.f32 %v3351, %v3423
    %v3425 = vpop.f32.mrf.mxu0
    %v3426 = vadd.f32 %v3353, %v3425
    %3427 = vmatmul.bf16.gmra.mxu0 %v949
    %v3428 = vpop.f32.mrf.mxu0
    %v3429 = vadd.f32 %v3356, %v3428
    %v3430 = vpop.f32.mrf.mxu0
    %v3431 = vadd.f32 %v3358, %v3430
    %3432 = vmatmul.bf16.gmra.mxu0 %v957
    %v3433 = vpop.f32.mrf.mxu0
    %v3434 = vadd.f32 %v3361, %v3433
    %v3435 = vpop.f32.mrf.mxu0
    %v3436 = vadd.f32 %v3363, %v3435
    %3437 = vmatmul.bf16.gmra.mxu0 %v965
    %v3438 = vpop.f32.mrf.mxu0
    %v3439 = vadd.f32 %v3366, %v3438
    %v3440 = vpop.f32.mrf.mxu0
    %v3441 = vadd.f32 %v3368, %v3440
    %3442 = vmatmul.bf16.gmra.mxu0 %v973
    %v3443 = vpop.f32.mrf.mxu0
    %v3444 = vadd.f32 %v3371, %v3443
    %v3445 = vpop.f32.mrf.mxu0
    %v3446 = vadd.f32 %v3373, %v3445
    %3447 = vmatmul.bf16.gmra.mxu0 %v981
    %v3448 = vpop.f32.mrf.mxu0
    %v3449 = vadd.f32 %v3376, %v3448
    %v3450 = vpop.f32.mrf.mxu0
    %v3451 = vadd.f32 %v3378, %v3450
    %3452 = vmatmul.bf16.gmra.mxu0 %v989
    %v3453 = vpop.f32.mrf.mxu0
    %v3454 = vadd.f32 %v3381, %v3453
    %v3455 = vpop.f32.mrf.mxu0
    %v3456 = vadd.f32 %v3383, %v3455
    %3457 = vmatmul.bf16.gmra.mxu0 %v997
    %v3458 = vpop.f32.mrf.mxu0
    %v3459 = vadd.f32 %v3386, %v3458
    %v3460 = vpop.f32.mrf.mxu0
    %3461 = vdwg.mxu0
    %3462 = vmatpush.bf16.msra.mxu0 %v2586
    %3463 = vmatpush.bf16.msra.mxu0 %v2580
    %3464 = vmatpush.bf16.msra.mxu0 %v2574
    %3465 = vmatpush.bf16.msra.mxu0 %v2568
    %3466 = vmatpush.bf16.msra.mxu0 %v2562
    %3467 = vmatpush.bf16.msra.mxu0 %v2556
    %3468 = vmatpush.bf16.msra.mxu0 %v2550
    %3469 = vmatpush.bf16.msra.mxu0 %v2544
    %3470 = vmatmul.bf16.gmra.mxu0 %v902
    %v3471 = vpop.f32.mrf.mxu0
    %v3472 = vadd.f32 %v3399, %v3471
    %v3473 = vpop.f32.mrf.mxu0
    %v3474 = vadd.f32 %v3401, %v3473
    %3475 = vmatmul.bf16.gmra.mxu0 %v910
    %v3476 = vpop.f32.mrf.mxu0
    %v3477 = vadd.f32 %v3404, %v3476
    %v3478 = vpop.f32.mrf.mxu0
    %v3479 = vadd.f32 %v3406, %v3478
    %3480 = vmatmul.bf16.gmra.mxu0 %v918
    %v3481 = vpop.f32.mrf.mxu0
    %v3482 = vadd.f32 %v3409, %v3481
    %v3483 = vpop.f32.mrf.mxu0
    %v3484 = vadd.f32 %v3411, %v3483
    %3485 = vmatmul.bf16.gmra.mxu0 %v926
    %v3486 = vpop.f32.mrf.mxu0
    %v3487 = vadd.f32 %v3414, %v3486
    %v3488 = vpop.f32.mrf.mxu0
    %v3489 = vadd.f32 %v3416, %v3488
    %3490 = vmatmul.bf16.gmra.mxu0 %v934
    %v3491 = vpop.f32.mrf.mxu0
    %v3492 = vadd.f32 %v3419, %v3491
    %v3493 = vpop.f32.mrf.mxu0
    %v3494 = vadd.f32 %v3421, %v3493
    %3495 = vmatmul.bf16.gmra.mxu0 %v942
    %v3496 = vpop.f32.mrf.mxu0
    %v3497 = vadd.f32 %v3424, %v3496
    %v3498 = vpop.f32.mrf.mxu0
    %v3499 = vadd.f32 %v3426, %v3498
    %3500 = vmatmul.bf16.gmra.mxu0 %v950
    %v3501 = vpop.f32.mrf.mxu0
    %v3502 = vadd.f32 %v3429, %v3501
    %v3503 = vpop.f32.mrf.mxu0
    %v3504 = vadd.f32 %v3431, %v3503
    %3505 = vmatmul.bf16.gmra.mxu0 %v958
    %v3506 = vpop.f32.mrf.mxu0
    %v3507 = vadd.f32 %v3434, %v3506
    %v3508 = vpop.f32.mrf.mxu0
    %v3509 = vadd.f32 %v3436, %v3508
    %3510 = vmatmul.bf16.gmra.mxu0 %v966
    %v3511 = vpop.f32.mrf.mxu0
    %v3512 = vadd.f32 %v3439, %v3511
    %v3513 = vpop.f32.mrf.mxu0
    %v3514 = vadd.f32 %v3441, %v3513
    %3515 = vmatmul.bf16.gmra.mxu0 %v974
    %v3516 = vpop.f32.mrf.mxu0
    %v3517 = vadd.f32 %v3444, %v3516
    %v3518 = vpop.f32.mrf.mxu0
    %v3519 = vadd.f32 %v3446, %v3518
    %3520 = vmatmul.bf16.gmra.mxu0 %v982
    %v3521 = vpop.f32.mrf.mxu0
    %v3522 = vadd.f32 %v3449, %v3521
    %v3523 = vpop.f32.mrf.mxu0
    %v3524 = vadd.f32 %v3451, %v3523
    %3525 = vmatmul.bf16.gmra.mxu0 %v990
    %v3526 = vpop.f32.mrf.mxu0
    %v3527 = vadd.f32 %v3454, %v3526
    %v3528 = vpop.f32.mrf.mxu0
    %v3529 = vadd.f32 %v3456, %v3528
    %3530 = vmatmul.bf16.gmra.mxu0 %v998
    %v3531 = vpop.f32.mrf.mxu0
    %v3532 = vadd.f32 %v3459, %v3531
    %v3533 = vpop.f32.mrf.mxu0
    %3534 = vdwg.mxu0
    %3535 = vmatpush.bf16.msra.mxu0 %v2634
    %3536 = vmatpush.bf16.msra.mxu0 %v2628
    %3537 = vmatpush.bf16.msra.mxu0 %v2622
    %3538 = vmatpush.bf16.msra.mxu0 %v2616
    %3539 = vmatpush.bf16.msra.mxu0 %v2610
    %3540 = vmatpush.bf16.msra.mxu0 %v2604
    %3541 = vmatpush.bf16.msra.mxu0 %v2598
    %3542 = vmatpush.bf16.msra.mxu0 %v2592
    %3543 = vmatmul.bf16.gmra.mxu0 %v903
    %v3544 = vpop.f32.mrf.mxu0
    %v3545 = vadd.f32 %v3472, %v3544
    %v3546 = vpop.f32.mrf.mxu0
    %v3547 = vadd.f32 %v3474, %v3546
    %3548 = vmatmul.bf16.gmra.mxu0 %v911
    %v3549 = vpop.f32.mrf.mxu0
    %v3550 = vadd.f32 %v3477, %v3549
    %v3551 = vpop.f32.mrf.mxu0
    %v3552 = vadd.f32 %v3479, %v3551
    %3553 = vmatmul.bf16.gmra.mxu0 %v919
    %v3554 = vpop.f32.mrf.mxu0
    %v3555 = vadd.f32 %v3482, %v3554
    %v3556 = vpop.f32.mrf.mxu0
    %v3557 = vadd.f32 %v3484, %v3556
    %3558 = vmatmul.bf16.gmra.mxu0 %v927
    %v3559 = vpop.f32.mrf.mxu0
    %v3560 = vadd.f32 %v3487, %v3559
    %v3561 = vpop.f32.mrf.mxu0
    %v3562 = vadd.f32 %v3489, %v3561
    %3563 = vmatmul.bf16.gmra.mxu0 %v935
    %v3564 = vpop.f32.mrf.mxu0
    %v3565 = vadd.f32 %v3492, %v3564
    %v3566 = vpop.f32.mrf.mxu0
    %v3567 = vadd.f32 %v3494, %v3566
    %3568 = vmatmul.bf16.gmra.mxu0 %v943
    %v3569 = vpop.f32.mrf.mxu0
    %v3570 = vadd.f32 %v3497, %v3569
    %v3571 = vpop.f32.mrf.mxu0
    %v3572 = vadd.f32 %v3499, %v3571
    %3573 = vmatmul.bf16.gmra.mxu0 %v951
    %v3574 = vpop.f32.mrf.mxu0
    %v3575 = vadd.f32 %v3502, %v3574
    %v3576 = vpop.f32.mrf.mxu0
    %v3577 = vadd.f32 %v3504, %v3576
    %3578 = vmatmul.bf16.gmra.mxu0 %v959
    %v3579 = vpop.f32.mrf.mxu0
    %v3580 = vadd.f32 %v3507, %v3579
    %v3581 = vpop.f32.mrf.mxu0
    %v3582 = vadd.f32 %v3509, %v3581
    %3583 = vmatmul.bf16.gmra.mxu0 %v967
    %v3584 = vpop.f32.mrf.mxu0
    %v3585 = vadd.f32 %v3512, %v3584
    %v3586 = vpop.f32.mrf.mxu0
    %v3587 = vadd.f32 %v3514, %v3586
    %3588 = vmatmul.bf16.gmra.mxu0 %v975
    %v3589 = vpop.f32.mrf.mxu0
    %v3590 = vadd.f32 %v3517, %v3589
    %v3591 = vpop.f32.mrf.mxu0
    %v3592 = vadd.f32 %v3519, %v3591
    %3593 = vmatmul.bf16.gmra.mxu0 %v983
    %v3594 = vpop.f32.mrf.mxu0
    %v3595 = vadd.f32 %v3522, %v3594
    %v3596 = vpop.f32.mrf.mxu0
    %v3597 = vadd.f32 %v3524, %v3596
    %3598 = vmatmul.bf16.gmra.mxu0 %v991
    %v3599 = vpop.f32.mrf.mxu0
    %v3600 = vadd.f32 %v3527, %v3599
    %v3601 = vpop.f32.mrf.mxu0
    %v3602 = vadd.f32 %v3529, %v3601
    %3603 = vmatmul.bf16.gmra.mxu0 %v999
    %v3604 = vpop.f32.mrf.mxu0
    %v3605 = vadd.f32 %v3532, %v3604
    %v3606 = vpop.f32.mrf.mxu0
    %3607 = vdwg.mxu0
    %3608 = vmatpush.bf16.msra.mxu0 %v2299
    %3609 = vmatpush.bf16.msra.mxu0 %v2293
    %3610 = vmatpush.bf16.msra.mxu0 %v2287
    %3611 = vmatpush.bf16.msra.mxu0 %v2281
    %3612 = vmatpush.bf16.msra.mxu0 %v2275
    %3613 = vmatpush.bf16.msra.mxu0 %v2269
    %3614 = vmatpush.bf16.msra.mxu0 %v2263
    %3615 = vmatpush.bf16.msra.mxu0 %v2257
    %3616 = vmatmul.bf16.gmra.mxu0 %v896
    %v3617 = vpop.f32.mrf.mxu0
    %v3618 = vadd.f32 0.0, %v3617
    %v3619 = vpop.f32.mrf.mxu0
    %v3620 = vadd.f32 0.0, %v3619
    %3621 = vmatmul.bf16.gmra.mxu0 %v904
    %v3622 = vpop.f32.mrf.mxu0
    %v3623 = vadd.f32 0.0, %v3622
    %v3624 = vpop.f32.mrf.mxu0
    %v3625 = vadd.f32 0.0, %v3624
    %3626 = vmatmul.bf16.gmra.mxu0 %v912
    %v3627 = vpop.f32.mrf.mxu0
    %v3628 = vadd.f32 0.0, %v3627
    %v3629 = vpop.f32.mrf.mxu0
    %v3630 = vadd.f32 0.0, %v3629
    %3631 = vmatmul.bf16.gmra.mxu0 %v920
    %v3632 = vpop.f32.mrf.mxu0
    %v3633 = vadd.f32 0.0, %v3632
    %v3634 = vpop.f32.mrf.mxu0
    %v3635 = vadd.f32 0.0, %v3634
    %3636 = vmatmul.bf16.gmra.mxu0 %v928
    %v3637 = vpop.f32.mrf.mxu0
    %v3638 = vadd.f32 0.0, %v3637
    %v3639 = vpop.f32.mrf.mxu0
    %v3640 = vadd.f32 0.0, %v3639
    %3641 = vmatmul.bf16.gmra.mxu0 %v936
    %v3642 = vpop.f32.mrf.mxu0
    %v3643 = vadd.f32 0.0, %v3642
    %v3644 = vpop.f32.mrf.mxu0
    %v3645 = vadd.f32 0.0, %v3644
    %3646 = vmatmul.bf16.gmra.mxu0 %v944
    %v3647 = vpop.f32.mrf.mxu0
    %v3648 = vadd.f32 0.0, %v3647
    %v3649 = vpop.f32.mrf.mxu0
    %v3650 = vadd.f32 0.0, %v3649
    %3651 = vmatmul.bf16.gmra.mxu0 %v952
    %v3652 = vpop.f32.mrf.mxu0
    %v3653 = vadd.f32 0.0, %v3652
    %v3654 = vpop.f32.mrf.mxu0
    %v3655 = vadd.f32 0.0, %v3654
    %3656 = vmatmul.bf16.gmra.mxu0 %v960
    %v3657 = vpop.f32.mrf.mxu0
    %v3658 = vadd.f32 0.0, %v3657
    %v3659 = vpop.f32.mrf.mxu0
    %v3660 = vadd.f32 0.0, %v3659
    %3661 = vmatmul.bf16.gmra.mxu0 %v968
    %v3662 = vpop.f32.mrf.mxu0
    %v3663 = vadd.f32 0.0, %v3662
    %v3664 = vpop.f32.mrf.mxu0
    %v3665 = vadd.f32 0.0, %v3664
    %3666 = vmatmul.bf16.gmra.mxu0 %v976
    %v3667 = vpop.f32.mrf.mxu0
    %v3668 = vadd.f32 0.0, %v3667
    %v3669 = vpop.f32.mrf.mxu0
    %v3670 = vadd.f32 0.0, %v3669
    %3671 = vmatmul.bf16.gmra.mxu0 %v984
    %v3672 = vpop.f32.mrf.mxu0
    %v3673 = vadd.f32 0.0, %v3672
    %v3674 = vpop.f32.mrf.mxu0
    %v3675 = vadd.f32 0.0, %v3674
    %3676 = vmatmul.bf16.gmra.mxu0 %v992
    %v3677 = vpop.f32.mrf.mxu0
    %v3678 = vadd.f32 0.0, %v3677
    %v3679 = vpop.f32.mrf.mxu0
    %3680 = vdwg.mxu0
    %3681 = vmatpush.bf16.msra.mxu0 %v2347
    %3682 = vmatpush.bf16.msra.mxu0 %v2341
    %3683 = vmatpush.bf16.msra.mxu0 %v2335
    %3684 = vmatpush.bf16.msra.mxu0 %v2329
    %3685 = vmatpush.bf16.msra.mxu0 %v2323
    %3686 = vmatpush.bf16.msra.mxu0 %v2317
    %3687 = vmatpush.bf16.msra.mxu0 %v2311
    %3688 = vmatpush.bf16.msra.mxu0 %v2305
    %3689 = vmatmul.bf16.gmra.mxu0 %v897
    %v3690 = vpop.f32.mrf.mxu0
    %v3691 = vadd.f32 %v3618, %v3690
    %v3692 = vpop.f32.mrf.mxu0
    %v3693 = vadd.f32 %v3620, %v3692
    %3694 = vmatmul.bf16.gmra.mxu0 %v905
    %v3695 = vpop.f32.mrf.mxu0
    %v3696 = vadd.f32 %v3623, %v3695
    %v3697 = vpop.f32.mrf.mxu0
    %v3698 = vadd.f32 %v3625, %v3697
    %3699 = vmatmul.bf16.gmra.mxu0 %v913
    %v3700 = vpop.f32.mrf.mxu0
    %v3701 = vadd.f32 %v3628, %v3700
    %v3702 = vpop.f32.mrf.mxu0
    %v3703 = vadd.f32 %v3630, %v3702
    %3704 = vmatmul.bf16.gmra.mxu0 %v921
    %v3705 = vpop.f32.mrf.mxu0
    %v3706 = vadd.f32 %v3633, %v3705
    %v3707 = vpop.f32.mrf.mxu0
    %v3708 = vadd.f32 %v3635, %v3707
    %3709 = vmatmul.bf16.gmra.mxu0 %v929
    %v3710 = vpop.f32.mrf.mxu0
    %v3711 = vadd.f32 %v3638, %v3710
    %v3712 = vpop.f32.mrf.mxu0
    %v3713 = vadd.f32 %v3640, %v3712
    %3714 = vmatmul.bf16.gmra.mxu0 %v937
    %v3715 = vpop.f32.mrf.mxu0
    %v3716 = vadd.f32 %v3643, %v3715
    %v3717 = vpop.f32.mrf.mxu0
    %v3718 = vadd.f32 %v3645, %v3717
    %3719 = vmatmul.bf16.gmra.mxu0 %v945
    %v3720 = vpop.f32.mrf.mxu0
    %v3721 = vadd.f32 %v3648, %v3720
    %v3722 = vpop.f32.mrf.mxu0
    %v3723 = vadd.f32 %v3650, %v3722
    %3724 = vmatmul.bf16.gmra.mxu0 %v953
    %v3725 = vpop.f32.mrf.mxu0
    %v3726 = vadd.f32 %v3653, %v3725
    %v3727 = vpop.f32.mrf.mxu0
    %v3728 = vadd.f32 %v3655, %v3727
    %3729 = vmatmul.bf16.gmra.mxu0 %v961
    %v3730 = vpop.f32.mrf.mxu0
    %v3731 = vadd.f32 %v3658, %v3730
    %v3732 = vpop.f32.mrf.mxu0
    %v3733 = vadd.f32 %v3660, %v3732
    %3734 = vmatmul.bf16.gmra.mxu0 %v969
    %v3735 = vpop.f32.mrf.mxu0
    %v3736 = vadd.f32 %v3663, %v3735
    %v3737 = vpop.f32.mrf.mxu0
    %v3738 = vadd.f32 %v3665, %v3737
    %3739 = vmatmul.bf16.gmra.mxu0 %v977
    %v3740 = vpop.f32.mrf.mxu0
    %v3741 = vadd.f32 %v3668, %v3740
    %v3742 = vpop.f32.mrf.mxu0
    %v3743 = vadd.f32 %v3670, %v3742
    %3744 = vmatmul.bf16.gmra.mxu0 %v985
    %v3745 = vpop.f32.mrf.mxu0
    %v3746 = vadd.f32 %v3673, %v3745
    %v3747 = vpop.f32.mrf.mxu0
    %v3748 = vadd.f32 %v3675, %v3747
    %3749 = vmatmul.bf16.gmra.mxu0 %v993
    %v3750 = vpop.f32.mrf.mxu0
    %v3751 = vadd.f32 %v3678, %v3750
    %v3752 = vpop.f32.mrf.mxu0
    %3753 = vdwg.mxu0
    %3754 = vmatpush.bf16.msra.mxu0 %v2395
    %3755 = vmatpush.bf16.msra.mxu0 %v2389
    %3756 = vmatpush.bf16.msra.mxu0 %v2383
    %3757 = vmatpush.bf16.msra.mxu0 %v2377
    %3758 = vmatpush.bf16.msra.mxu0 %v2371
    %3759 = vmatpush.bf16.msra.mxu0 %v2365
    %3760 = vmatpush.bf16.msra.mxu0 %v2359
    %3761 = vmatpush.bf16.msra.mxu0 %v2353
    %3762 = vmatmul.bf16.gmra.mxu0 %v898
    %v3763 = vpop.f32.mrf.mxu0
    %v3764 = vadd.f32 %v3691, %v3763
    %v3765 = vpop.f32.mrf.mxu0
    %v3766 = vadd.f32 %v3693, %v3765
    %3767 = vmatmul.bf16.gmra.mxu0 %v906
    %v3768 = vpop.f32.mrf.mxu0
    %v3769 = vadd.f32 %v3696, %v3768
    %v3770 = vpop.f32.mrf.mxu0
    %v3771 = vadd.f32 %v3698, %v3770
    %3772 = vmatmul.bf16.gmra.mxu0 %v914
    %v3773 = vpop.f32.mrf.mxu0
    %v3774 = vadd.f32 %v3701, %v3773
    %v3775 = vpop.f32.mrf.mxu0
    %v3776 = vadd.f32 %v3703, %v3775
    %3777 = vmatmul.bf16.gmra.mxu0 %v922
    %v3778 = vpop.f32.mrf.mxu0
    %v3779 = vadd.f32 %v3706, %v3778
    %v3780 = vpop.f32.mrf.mxu0
    %v3781 = vadd.f32 %v3708, %v3780
    %3782 = vmatmul.bf16.gmra.mxu0 %v930
    %v3783 = vpop.f32.mrf.mxu0
    %v3784 = vadd.f32 %v3711, %v3783
    %v3785 = vpop.f32.mrf.mxu0
    %v3786 = vadd.f32 %v3713, %v3785
    %3787 = vmatmul.bf16.gmra.mxu0 %v938
    %v3788 = vpop.f32.mrf.mxu0
    %v3789 = vadd.f32 %v3716, %v3788
    %v3790 = vpop.f32.mrf.mxu0
    %v3791 = vadd.f32 %v3718, %v3790
    %3792 = vmatmul.bf16.gmra.mxu0 %v946
    %v3793 = vpop.f32.mrf.mxu0
    %v3794 = vadd.f32 %v3721, %v3793
    %v3795 = vpop.f32.mrf.mxu0
    %v3796 = vadd.f32 %v3723, %v3795
    %3797 = vmatmul.bf16.gmra.mxu0 %v954
    %v3798 = vpop.f32.mrf.mxu0
    %v3799 = vadd.f32 %v3726, %v3798
    %v3800 = vpop.f32.mrf.mxu0
    %v3801 = vadd.f32 %v3728, %v3800
    %3802 = vmatmul.bf16.gmra.mxu0 %v962
    %v3803 = vpop.f32.mrf.mxu0
    %v3804 = vadd.f32 %v3731, %v3803
    %v3805 = vpop.f32.mrf.mxu0
    %v3806 = vadd.f32 %v3733, %v3805
    %3807 = vmatmul.bf16.gmra.mxu0 %v970
    %v3808 = vpop.f32.mrf.mxu0
    %v3809 = vadd.f32 %v3736, %v3808
    %v3810 = vpop.f32.mrf.mxu0
    %v3811 = vadd.f32 %v3738, %v3810
    %3812 = vmatmul.bf16.gmra.mxu0 %v978
    %v3813 = vpop.f32.mrf.mxu0
    %v3814 = vadd.f32 %v3741, %v3813
    %v3815 = vpop.f32.mrf.mxu0
    %v3816 = vadd.f32 %v3743, %v3815
    %3817 = vmatmul.bf16.gmra.mxu0 %v986
    %v3818 = vpop.f32.mrf.mxu0
    %v3819 = vadd.f32 %v3746, %v3818
    %v3820 = vpop.f32.mrf.mxu0
    %v3821 = vadd.f32 %v3748, %v3820
    %3822 = vmatmul.bf16.gmra.mxu0 %v994
    %v3823 = vpop.f32.mrf.mxu0
    %v3824 = vadd.f32 %v3751, %v3823
    %v3825 = vpop.f32.mrf.mxu0
    %3826 = vdwg.mxu0
    %3827 = vmatpush.bf16.msra.mxu0 %v2443
    %3828 = vmatpush.bf16.msra.mxu0 %v2437
    %3829 = vmatpush.bf16.msra.mxu0 %v2431
    %3830 = vmatpush.bf16.msra.mxu0 %v2425
    %3831 = vmatpush.bf16.msra.mxu0 %v2419
    %3832 = vmatpush.bf16.msra.mxu0 %v2413
    %3833 = vmatpush.bf16.msra.mxu0 %v2407
    %3834 = vmatpush.bf16.msra.mxu0 %v2401
    %3835 = vmatmul.bf16.gmra.mxu0 %v899
    %v3836 = vpop.f32.mrf.mxu0
    %v3837 = vadd.f32 %v3764, %v3836
    %v3838 = vpop.f32.mrf.mxu0
    %v3839 = vadd.f32 %v3766, %v3838
    %3840 = vmatmul.bf16.gmra.mxu0 %v907
    %v3841 = vpop.f32.mrf.mxu0
    %v3842 = vadd.f32 %v3769, %v3841
    %v3843 = vpop.f32.mrf.mxu0
    %v3844 = vadd.f32 %v3771, %v3843
    %3845 = vmatmul.bf16.gmra.mxu0 %v915
    %v3846 = vpop.f32.mrf.mxu0
    %v3847 = vadd.f32 %v3774, %v3846
    %v3848 = vpop.f32.mrf.mxu0
    %v3849 = vadd.f32 %v3776, %v3848
    %3850 = vmatmul.bf16.gmra.mxu0 %v923
    %v3851 = vpop.f32.mrf.mxu0
    %v3852 = vadd.f32 %v3779, %v3851
    %v3853 = vpop.f32.mrf.mxu0
    %v3854 = vadd.f32 %v3781, %v3853
    %3855 = vmatmul.bf16.gmra.mxu0 %v931
    %v3856 = vpop.f32.mrf.mxu0
    %v3857 = vadd.f32 %v3784, %v3856
    %v3858 = vpop.f32.mrf.mxu0
    %v3859 = vadd.f32 %v3786, %v3858
    %3860 = vmatmul.bf16.gmra.mxu0 %v939
    %v3861 = vpop.f32.mrf.mxu0
    %v3862 = vadd.f32 %v3789, %v3861
    %v3863 = vpop.f32.mrf.mxu0
    %v3864 = vadd.f32 %v3791, %v3863
    %3865 = vmatmul.bf16.gmra.mxu0 %v947
    %v3866 = vpop.f32.mrf.mxu0
    %v3867 = vadd.f32 %v3794, %v3866
    %v3868 = vpop.f32.mrf.mxu0
    %v3869 = vadd.f32 %v3796, %v3868
    %3870 = vmatmul.bf16.gmra.mxu0 %v955
    %v3871 = vpop.f32.mrf.mxu0
    %v3872 = vadd.f32 %v3799, %v3871
    %v3873 = vpop.f32.mrf.mxu0
    %v3874 = vadd.f32 %v3801, %v3873
    %3875 = vmatmul.bf16.gmra.mxu0 %v963
    %v3876 = vpop.f32.mrf.mxu0
    %v3877 = vadd.f32 %v3804, %v3876
    %v3878 = vpop.f32.mrf.mxu0
    %v3879 = vadd.f32 %v3806, %v3878
    %3880 = vmatmul.bf16.gmra.mxu0 %v971
    %v3881 = vpop.f32.mrf.mxu0
    %v3882 = vadd.f32 %v3809, %v3881
    %v3883 = vpop.f32.mrf.mxu0
    %v3884 = vadd.f32 %v3811, %v3883
    %3885 = vmatmul.bf16.gmra.mxu0 %v979
    %v3886 = vpop.f32.mrf.mxu0
    %v3887 = vadd.f32 %v3814, %v3886
    %v3888 = vpop.f32.mrf.mxu0
    %v3889 = vadd.f32 %v3816, %v3888
    %3890 = vmatmul.bf16.gmra.mxu0 %v987
    %v3891 = vpop.f32.mrf.mxu0
    %v3892 = vadd.f32 %v3819, %v3891
    %v3893 = vpop.f32.mrf.mxu0
    %v3894 = vadd.f32 %v3821, %v3893
    %3895 = vmatmul.bf16.gmra.mxu0 %v995
    %v3896 = vpop.f32.mrf.mxu0
    %v3897 = vadd.f32 %v3824, %v3896
    %v3898 = vpop.f32.mrf.mxu0
    %3899 = vdwg.mxu0
    %3900 = vmatpush.bf16.msra.mxu0 %v2491
    %3901 = vmatpush.bf16.msra.mxu0 %v2485
    %3902 = vmatpush.bf16.msra.mxu0 %v2479
    %3903 = vmatpush.bf16.msra.mxu0 %v2473
    %3904 = vmatpush.bf16.msra.mxu0 %v2467
    %3905 = vmatpush.bf16.msra.mxu0 %v2461
    %3906 = vmatpush.bf16.msra.mxu0 %v2455
    %3907 = vmatpush.bf16.msra.mxu0 %v2449
    %3908 = vmatmul.bf16.gmra.mxu0 %v900
    %v3909 = vpop.f32.mrf.mxu0
    %v3910 = vadd.f32 %v3837, %v3909
    %v3911 = vpop.f32.mrf.mxu0
    %v3912 = vadd.f32 %v3839, %v3911
    %3913 = vmatmul.bf16.gmra.mxu0 %v908
    %v3914 = vpop.f32.mrf.mxu0
    %v3915 = vadd.f32 %v3842, %v3914
    %v3916 = vpop.f32.mrf.mxu0
    %v3917 = vadd.f32 %v3844, %v3916
    %3918 = vmatmul.bf16.gmra.mxu0 %v916
    %v3919 = vpop.f32.mrf.mxu0
    %v3920 = vadd.f32 %v3847, %v3919
    %v3921 = vpop.f32.mrf.mxu0
    %v3922 = vadd.f32 %v3849, %v3921
    %3923 = vmatmul.bf16.gmra.mxu0 %v924
    %v3924 = vpop.f32.mrf.mxu0
    %v3925 = vadd.f32 %v3852, %v3924
    %v3926 = vpop.f32.mrf.mxu0
    %v3927 = vadd.f32 %v3854, %v3926
    %3928 = vmatmul.bf16.gmra.mxu0 %v932
    %v3929 = vpop.f32.mrf.mxu0
    %v3930 = vadd.f32 %v3857, %v3929
    %v3931 = vpop.f32.mrf.mxu0
    %v3932 = vadd.f32 %v3859, %v3931
    %3933 = vmatmul.bf16.gmra.mxu0 %v940
    %v3934 = vpop.f32.mrf.mxu0
    %v3935 = vadd.f32 %v3862, %v3934
    %v3936 = vpop.f32.mrf.mxu0
    %v3937 = vadd.f32 %v3864, %v3936
    %3938 = vmatmul.bf16.gmra.mxu0 %v948
    %v3939 = vpop.f32.mrf.mxu0
    %v3940 = vadd.f32 %v3867, %v3939
    %v3941 = vpop.f32.mrf.mxu0
    %v3942 = vadd.f32 %v3869, %v3941
    %3943 = vmatmul.bf16.gmra.mxu0 %v956
    %v3944 = vpop.f32.mrf.mxu0
    %v3945 = vadd.f32 %v3872, %v3944
    %v3946 = vpop.f32.mrf.mxu0
    %v3947 = vadd.f32 %v3874, %v3946
    %3948 = vmatmul.bf16.gmra.mxu0 %v964
    %v3949 = vpop.f32.mrf.mxu0
    %v3950 = vadd.f32 %v3877, %v3949
    %v3951 = vpop.f32.mrf.mxu0
    %v3952 = vadd.f32 %v3879, %v3951
    %3953 = vmatmul.bf16.gmra.mxu0 %v972
    %v3954 = vpop.f32.mrf.mxu0
    %v3955 = vadd.f32 %v3882, %v3954
    %v3956 = vpop.f32.mrf.mxu0
    %v3957 = vadd.f32 %v3884, %v3956
    %3958 = vmatmul.bf16.gmra.mxu0 %v980
    %v3959 = vpop.f32.mrf.mxu0
    %v3960 = vadd.f32 %v3887, %v3959
    %v3961 = vpop.f32.mrf.mxu0
    %v3962 = vadd.f32 %v3889, %v3961
    %3963 = vmatmul.bf16.gmra.mxu0 %v988
    %v3964 = vpop.f32.mrf.mxu0
    %v3965 = vadd.f32 %v3892, %v3964
    %v3966 = vpop.f32.mrf.mxu0
    %v3967 = vadd.f32 %v3894, %v3966
    %3968 = vmatmul.bf16.gmra.mxu0 %v996
    %v3969 = vpop.f32.mrf.mxu0
    %v3970 = vadd.f32 %v3897, %v3969
    %v3971 = vpop.f32.mrf.mxu0
    %3972 = vdwg.mxu0
    %3973 = vmatpush.bf16.msra.mxu0 %v2539
    %3974 = vmatpush.bf16.msra.mxu0 %v2533
    %3975 = vmatpush.bf16.msra.mxu0 %v2527
    %3976 = vmatpush.bf16.msra.mxu0 %v2521
    %3977 = vmatpush.bf16.msra.mxu0 %v2515
    %3978 = vmatpush.bf16.msra.mxu0 %v2509
    %3979 = vmatpush.bf16.msra.mxu0 %v2503
    %3980 = vmatpush.bf16.msra.mxu0 %v2497
    %3981 = vmatmul.bf16.gmra.mxu0 %v901
    %v3982 = vpop.f32.mrf.mxu0
    %v3983 = vadd.f32 %v3910, %v3982
    %v3984 = vpop.f32.mrf.mxu0
    %v3985 = vadd.f32 %v3912, %v3984
    %3986 = vmatmul.bf16.gmra.mxu0 %v909
    %v3987 = vpop.f32.mrf.mxu0
    %v3988 = vadd.f32 %v3915, %v3987
    %v3989 = vpop.f32.mrf.mxu0
    %v3990 = vadd.f32 %v3917, %v3989
    %3991 = vmatmul.bf16.gmra.mxu0 %v917
    %v3992 = vpop.f32.mrf.mxu0
    %v3993 = vadd.f32 %v3920, %v3992
    %v3994 = vpop.f32.mrf.mxu0
    %v3995 = vadd.f32 %v3922, %v3994
    %3996 = vmatmul.bf16.gmra.mxu0 %v925
    %v3997 = vpop.f32.mrf.mxu0
    %v3998 = vadd.f32 %v3925, %v3997
    %v3999 = vpop.f32.mrf.mxu0
    %v4000 = vadd.f32 %v3927, %v3999
    %4001 = vmatmul.bf16.gmra.mxu0 %v933
    %v4002 = vpop.f32.mrf.mxu0
    %v4003 = vadd.f32 %v3930, %v4002
    %v4004 = vpop.f32.mrf.mxu0
    %v4005 = vadd.f32 %v3932, %v4004
    %4006 = vmatmul.bf16.gmra.mxu0 %v941
    %v4007 = vpop.f32.mrf.mxu0
    %v4008 = vadd.f32 %v3935, %v4007
    %v4009 = vpop.f32.mrf.mxu0
    %v4010 = vadd.f32 %v3937, %v4009
    %4011 = vmatmul.bf16.gmra.mxu0 %v949
    %v4012 = vpop.f32.mrf.mxu0
    %v4013 = vadd.f32 %v3940, %v4012
    %v4014 = vpop.f32.mrf.mxu0
    %v4015 = vadd.f32 %v3942, %v4014
    %4016 = vmatmul.bf16.gmra.mxu0 %v957
    %v4017 = vpop.f32.mrf.mxu0
    %v4018 = vadd.f32 %v3945, %v4017
    %v4019 = vpop.f32.mrf.mxu0
    %v4020 = vadd.f32 %v3947, %v4019
    %4021 = vmatmul.bf16.gmra.mxu0 %v965
    %v4022 = vpop.f32.mrf.mxu0
    %v4023 = vadd.f32 %v3950, %v4022
    %v4024 = vpop.f32.mrf.mxu0
    %v4025 = vadd.f32 %v3952, %v4024
    %4026 = vmatmul.bf16.gmra.mxu0 %v973
    %v4027 = vpop.f32.mrf.mxu0
    %v4028 = vadd.f32 %v3955, %v4027
    %v4029 = vpop.f32.mrf.mxu0
    %v4030 = vadd.f32 %v3957, %v4029
    %4031 = vmatmul.bf16.gmra.mxu0 %v981
    %v4032 = vpop.f32.mrf.mxu0
    %v4033 = vadd.f32 %v3960, %v4032
    %v4034 = vpop.f32.mrf.mxu0
    %v4035 = vadd.f32 %v3962, %v4034
    %4036 = vmatmul.bf16.gmra.mxu0 %v989
    %v4037 = vpop.f32.mrf.mxu0
    %v4038 = vadd.f32 %v3965, %v4037
    %v4039 = vpop.f32.mrf.mxu0
    %v4040 = vadd.f32 %v3967, %v4039
    %4041 = vmatmul.bf16.gmra.mxu0 %v997
    %v4042 = vpop.f32.mrf.mxu0
    %v4043 = vadd.f32 %v3970, %v4042
    %v4044 = vpop.f32.mrf.mxu0
    %4045 = vdwg.mxu0
    %4046 = vmatpush.bf16.msra.mxu0 %v2587
    %4047 = vmatpush.bf16.msra.mxu0 %v2581
    %4048 = vmatpush.bf16.msra.mxu0 %v2575
    %4049 = vmatpush.bf16.msra.mxu0 %v2569
    %4050 = vmatpush.bf16.msra.mxu0 %v2563
    %4051 = vmatpush.bf16.msra.mxu0 %v2557
    %4052 = vmatpush.bf16.msra.mxu0 %v2551
    %4053 = vmatpush.bf16.msra.mxu0 %v2545
    %4054 = vmatmul.bf16.gmra.mxu0 %v902
    %v4055 = vpop.f32.mrf.mxu0
    %v4056 = vadd.f32 %v3983, %v4055
    %v4057 = vpop.f32.mrf.mxu0
    %v4058 = vadd.f32 %v3985, %v4057
    %4059 = vmatmul.bf16.gmra.mxu0 %v910
    %v4060 = vpop.f32.mrf.mxu0
    %v4061 = vadd.f32 %v3988, %v4060
    %v4062 = vpop.f32.mrf.mxu0
    %v4063 = vadd.f32 %v3990, %v4062
    %4064 = vmatmul.bf16.gmra.mxu0 %v918
    %v4065 = vpop.f32.mrf.mxu0
    %v4066 = vadd.f32 %v3993, %v4065
    %v4067 = vpop.f32.mrf.mxu0
    %v4068 = vadd.f32 %v3995, %v4067
    %4069 = vmatmul.bf16.gmra.mxu0 %v926
    %v4070 = vpop.f32.mrf.mxu0
    %v4071 = vadd.f32 %v3998, %v4070
    %v4072 = vpop.f32.mrf.mxu0
    %v4073 = vadd.f32 %v4000, %v4072
    %4074 = vmatmul.bf16.gmra.mxu0 %v934
    %v4075 = vpop.f32.mrf.mxu0
    %v4076 = vadd.f32 %v4003, %v4075
    %v4077 = vpop.f32.mrf.mxu0
    %v4078 = vadd.f32 %v4005, %v4077
    %4079 = vmatmul.bf16.gmra.mxu0 %v942
    %v4080 = vpop.f32.mrf.mxu0
    %v4081 = vadd.f32 %v4008, %v4080
    %v4082 = vpop.f32.mrf.mxu0
    %v4083 = vadd.f32 %v4010, %v4082
    %4084 = vmatmul.bf16.gmra.mxu0 %v950
    %v4085 = vpop.f32.mrf.mxu0
    %v4086 = vadd.f32 %v4013, %v4085
    %v4087 = vpop.f32.mrf.mxu0
    %v4088 = vadd.f32 %v4015, %v4087
    %4089 = vmatmul.bf16.gmra.mxu0 %v958
    %v4090 = vpop.f32.mrf.mxu0
    %v4091 = vadd.f32 %v4018, %v4090
    %v4092 = vpop.f32.mrf.mxu0
    %v4093 = vadd.f32 %v4020, %v4092
    %4094 = vmatmul.bf16.gmra.mxu0 %v966
    %v4095 = vpop.f32.mrf.mxu0
    %v4096 = vadd.f32 %v4023, %v4095
    %v4097 = vpop.f32.mrf.mxu0
    %v4098 = vadd.f32 %v4025, %v4097
    %4099 = vmatmul.bf16.gmra.mxu0 %v974
    %v4100 = vpop.f32.mrf.mxu0
    %v4101 = vadd.f32 %v4028, %v4100
    %v4102 = vpop.f32.mrf.mxu0
    %v4103 = vadd.f32 %v4030, %v4102
    %4104 = vmatmul.bf16.gmra.mxu0 %v982
    %v4105 = vpop.f32.mrf.mxu0
    %v4106 = vadd.f32 %v4033, %v4105
    %v4107 = vpop.f32.mrf.mxu0
    %v4108 = vadd.f32 %v4035, %v4107
    %4109 = vmatmul.bf16.gmra.mxu0 %v990
    %v4110 = vpop.f32.mrf.mxu0
    %v4111 = vadd.f32 %v4038, %v4110
    %v4112 = vpop.f32.mrf.mxu0
    %v4113 = vadd.f32 %v4040, %v4112
    %4114 = vmatmul.bf16.gmra.mxu0 %v998
    %v4115 = vpop.f32.mrf.mxu0
    %v4116 = vadd.f32 %v4043, %v4115
    %v4117 = vpop.f32.mrf.mxu0
    %4118 = vdwg.mxu0
    %4119 = vmatpush.bf16.msra.mxu0 %v2635
    %4120 = vmatpush.bf16.msra.mxu0 %v2629
    %4121 = vmatpush.bf16.msra.mxu0 %v2623
    %4122 = vmatpush.bf16.msra.mxu0 %v2617
    %4123 = vmatpush.bf16.msra.mxu0 %v2611
    %4124 = vmatpush.bf16.msra.mxu0 %v2605
    %4125 = vmatpush.bf16.msra.mxu0 %v2599
    %4126 = vmatpush.bf16.msra.mxu0 %v2593
    %4127 = vmatmul.bf16.gmra.mxu0 %v903
    %v4128 = vpop.f32.mrf.mxu0
    %v4129 = vadd.f32 %v4056, %v4128
    %v4130 = vpop.f32.mrf.mxu0
    %v4131 = vadd.f32 %v4058, %v4130
    %4132 = vmatmul.bf16.gmra.mxu0 %v911
    %v4133 = vpop.f32.mrf.mxu0
    %v4134 = vadd.f32 %v4061, %v4133
    %v4135 = vpop.f32.mrf.mxu0
    %v4136 = vadd.f32 %v4063, %v4135
    %4137 = vmatmul.bf16.gmra.mxu0 %v919
    %v4138 = vpop.f32.mrf.mxu0
    %v4139 = vadd.f32 %v4066, %v4138
    %v4140 = vpop.f32.mrf.mxu0
    %v4141 = vadd.f32 %v4068, %v4140
    %4142 = vmatmul.bf16.gmra.mxu0 %v927
    %v4143 = vpop.f32.mrf.mxu0
    %v4144 = vadd.f32 %v4071, %v4143
    %v4145 = vpop.f32.mrf.mxu0
    %v4146 = vadd.f32 %v4073, %v4145
    %4147 = vmatmul.bf16.gmra.mxu0 %v935
    %v4148 = vpop.f32.mrf.mxu0
    %v4149 = vadd.f32 %v4076, %v4148
    %v4150 = vpop.f32.mrf.mxu0
    %v4151 = vadd.f32 %v4078, %v4150
    %4152 = vmatmul.bf16.gmra.mxu0 %v943
    %v4153 = vpop.f32.mrf.mxu0
    %v4154 = vadd.f32 %v4081, %v4153
    %v4155 = vpop.f32.mrf.mxu0
    %v4156 = vadd.f32 %v4083, %v4155
    %4157 = vmatmul.bf16.gmra.mxu0 %v951
    %v4158 = vpop.f32.mrf.mxu0
    %v4159 = vadd.f32 %v4086, %v4158
    %v4160 = vpop.f32.mrf.mxu0
    %v4161 = vadd.f32 %v4088, %v4160
    %4162 = vmatmul.bf16.gmra.mxu0 %v959
    %v4163 = vpop.f32.mrf.mxu0
    %v4164 = vadd.f32 %v4091, %v4163
    %v4165 = vpop.f32.mrf.mxu0
    %v4166 = vadd.f32 %v4093, %v4165
    %4167 = vmatmul.bf16.gmra.mxu0 %v967
    %v4168 = vpop.f32.mrf.mxu0
    %v4169 = vadd.f32 %v4096, %v4168
    %v4170 = vpop.f32.mrf.mxu0
    %v4171 = vadd.f32 %v4098, %v4170
    %4172 = vmatmul.bf16.gmra.mxu0 %v975
    %v4173 = vpop.f32.mrf.mxu0
    %v4174 = vadd.f32 %v4101, %v4173
    %v4175 = vpop.f32.mrf.mxu0
    %v4176 = vadd.f32 %v4103, %v4175
    %4177 = vmatmul.bf16.gmra.mxu0 %v983
    %v4178 = vpop.f32.mrf.mxu0
    %v4179 = vadd.f32 %v4106, %v4178
    %v4180 = vpop.f32.mrf.mxu0
    %v4181 = vadd.f32 %v4108, %v4180
    %4182 = vmatmul.bf16.gmra.mxu0 %v991
    %v4183 = vpop.f32.mrf.mxu0
    %v4184 = vadd.f32 %v4111, %v4183
    %v4185 = vpop.f32.mrf.mxu0
    %v4186 = vadd.f32 %v4113, %v4185
    %4187 = vmatmul.bf16.gmra.mxu0 %v999
    %v4188 = vpop.f32.mrf.mxu0
    %v4189 = vadd.f32 %v4116, %v4188
    %v4190 = vpop.f32.mrf.mxu0
    %4191 = vdwg.mxu0
    %4192 = vmatpush.bf16.msra.mxu0 %v2300
    %4193 = vmatpush.bf16.msra.mxu0 %v2294
    %4194 = vmatpush.bf16.msra.mxu0 %v2288
    %4195 = vmatpush.bf16.msra.mxu0 %v2282
    %4196 = vmatpush.bf16.msra.mxu0 %v2276
    %4197 = vmatpush.bf16.msra.mxu0 %v2270
    %4198 = vmatpush.bf16.msra.mxu0 %v2264
    %4199 = vmatpush.bf16.msra.mxu0 %v2258
    %4200 = vmatmul.bf16.gmra.mxu0 %v896
    %v4201 = vpop.f32.mrf.mxu0
    %v4202 = vadd.f32 0.0, %v4201
    %v4203 = vpop.f32.mrf.mxu0
    %v4204 = vadd.f32 0.0, %v4203
    %4205 = vmatmul.bf16.gmra.mxu0 %v904
    %v4206 = vpop.f32.mrf.mxu0
    %v4207 = vadd.f32 0.0, %v4206
    %v4208 = vpop.f32.mrf.mxu0
    %v4209 = vadd.f32 0.0, %v4208
    %4210 = vmatmul.bf16.gmra.mxu0 %v912
    %v4211 = vpop.f32.mrf.mxu0
    %v4212 = vadd.f32 0.0, %v4211
    %v4213 = vpop.f32.mrf.mxu0
    %v4214 = vadd.f32 0.0, %v4213
    %4215 = vmatmul.bf16.gmra.mxu0 %v920
    %v4216 = vpop.f32.mrf.mxu0
    %v4217 = vadd.f32 0.0, %v4216
    %v4218 = vpop.f32.mrf.mxu0
    %v4219 = vadd.f32 0.0, %v4218
    %4220 = vmatmul.bf16.gmra.mxu0 %v928
    %v4221 = vpop.f32.mrf.mxu0
    %v4222 = vadd.f32 0.0, %v4221
    %v4223 = vpop.f32.mrf.mxu0
    %v4224 = vadd.f32 0.0, %v4223
    %4225 = vmatmul.bf16.gmra.mxu0 %v936
    %v4226 = vpop.f32.mrf.mxu0
    %v4227 = vadd.f32 0.0, %v4226
    %v4228 = vpop.f32.mrf.mxu0
    %v4229 = vadd.f32 0.0, %v4228
    %4230 = vmatmul.bf16.gmra.mxu0 %v944
    %v4231 = vpop.f32.mrf.mxu0
    %v4232 = vadd.f32 0.0, %v4231
    %v4233 = vpop.f32.mrf.mxu0
    %v4234 = vadd.f32 0.0, %v4233
    %4235 = vmatmul.bf16.gmra.mxu0 %v952
    %v4236 = vpop.f32.mrf.mxu0
    %v4237 = vadd.f32 0.0, %v4236
    %v4238 = vpop.f32.mrf.mxu0
    %v4239 = vadd.f32 0.0, %v4238
    %4240 = vmatmul.bf16.gmra.mxu0 %v960
    %v4241 = vpop.f32.mrf.mxu0
    %v4242 = vadd.f32 0.0, %v4241
    %v4243 = vpop.f32.mrf.mxu0
    %v4244 = vadd.f32 0.0, %v4243
    %4245 = vmatmul.bf16.gmra.mxu0 %v968
    %v4246 = vpop.f32.mrf.mxu0
    %v4247 = vadd.f32 0.0, %v4246
    %v4248 = vpop.f32.mrf.mxu0
    %v4249 = vadd.f32 0.0, %v4248
    %4250 = vmatmul.bf16.gmra.mxu0 %v976
    %v4251 = vpop.f32.mrf.mxu0
    %v4252 = vadd.f32 0.0, %v4251
    %v4253 = vpop.f32.mrf.mxu0
    %v4254 = vadd.f32 0.0, %v4253
    %4255 = vmatmul.bf16.gmra.mxu0 %v984
    %v4256 = vpop.f32.mrf.mxu0
    %v4257 = vadd.f32 0.0, %v4256
    %v4258 = vpop.f32.mrf.mxu0
    %v4259 = vadd.f32 0.0, %v4258
    %4260 = vmatmul.bf16.gmra.mxu0 %v992
    %v4261 = vpop.f32.mrf.mxu0
    %v4262 = vadd.f32 0.0, %v4261
    %v4263 = vpop.f32.mrf.mxu0
    %4264 = vdwg.mxu0
    %4265 = vmatpush.bf16.msra.mxu0 %v2348
    %4266 = vmatpush.bf16.msra.mxu0 %v2342
    %4267 = vmatpush.bf16.msra.mxu0 %v2336
    %4268 = vmatpush.bf16.msra.mxu0 %v2330
    %4269 = vmatpush.bf16.msra.mxu0 %v2324
    %4270 = vmatpush.bf16.msra.mxu0 %v2318
    %4271 = vmatpush.bf16.msra.mxu0 %v2312
    %4272 = vmatpush.bf16.msra.mxu0 %v2306
    %4273 = vmatmul.bf16.gmra.mxu0 %v897
    %v4274 = vpop.f32.mrf.mxu0
    %v4275 = vadd.f32 %v4202, %v4274
    %v4276 = vpop.f32.mrf.mxu0
    %v4277 = vadd.f32 %v4204, %v4276
    %4278 = vmatmul.bf16.gmra.mxu0 %v905
    %v4279 = vpop.f32.mrf.mxu0
    %v4280 = vadd.f32 %v4207, %v4279
    %v4281 = vpop.f32.mrf.mxu0
    %v4282 = vadd.f32 %v4209, %v4281
    %4283 = vmatmul.bf16.gmra.mxu0 %v913
    %v4284 = vpop.f32.mrf.mxu0
    %v4285 = vadd.f32 %v4212, %v4284
    %v4286 = vpop.f32.mrf.mxu0
    %v4287 = vadd.f32 %v4214, %v4286
    %4288 = vmatmul.bf16.gmra.mxu0 %v921
    %v4289 = vpop.f32.mrf.mxu0
    %v4290 = vadd.f32 %v4217, %v4289
    %v4291 = vpop.f32.mrf.mxu0
    %v4292 = vadd.f32 %v4219, %v4291
    %4293 = vmatmul.bf16.gmra.mxu0 %v929
    %v4294 = vpop.f32.mrf.mxu0
    %v4295 = vadd.f32 %v4222, %v4294
    %v4296 = vpop.f32.mrf.mxu0
    %v4297 = vadd.f32 %v4224, %v4296
    %4298 = vmatmul.bf16.gmra.mxu0 %v937
    %v4299 = vpop.f32.mrf.mxu0
    %v4300 = vadd.f32 %v4227, %v4299
    %v4301 = vpop.f32.mrf.mxu0
    %v4302 = vadd.f32 %v4229, %v4301
    %4303 = vmatmul.bf16.gmra.mxu0 %v945
    %v4304 = vpop.f32.mrf.mxu0
    %v4305 = vadd.f32 %v4232, %v4304
    %v4306 = vpop.f32.mrf.mxu0
    %v4307 = vadd.f32 %v4234, %v4306
    %4308 = vmatmul.bf16.gmra.mxu0 %v953
    %v4309 = vpop.f32.mrf.mxu0
    %v4310 = vadd.f32 %v4237, %v4309
    %v4311 = vpop.f32.mrf.mxu0
    %v4312 = vadd.f32 %v4239, %v4311
    %4313 = vmatmul.bf16.gmra.mxu0 %v961
    %v4314 = vpop.f32.mrf.mxu0
    %v4315 = vadd.f32 %v4242, %v4314
    %v4316 = vpop.f32.mrf.mxu0
    %v4317 = vadd.f32 %v4244, %v4316
    %4318 = vmatmul.bf16.gmra.mxu0 %v969
    %v4319 = vpop.f32.mrf.mxu0
    %v4320 = vadd.f32 %v4247, %v4319
    %v4321 = vpop.f32.mrf.mxu0
    %v4322 = vadd.f32 %v4249, %v4321
    %4323 = vmatmul.bf16.gmra.mxu0 %v977
    %v4324 = vpop.f32.mrf.mxu0
    %v4325 = vadd.f32 %v4252, %v4324
    %v4326 = vpop.f32.mrf.mxu0
    %v4327 = vadd.f32 %v4254, %v4326
    %4328 = vmatmul.bf16.gmra.mxu0 %v985
    %v4329 = vpop.f32.mrf.mxu0
    %v4330 = vadd.f32 %v4257, %v4329
    %v4331 = vpop.f32.mrf.mxu0
    %v4332 = vadd.f32 %v4259, %v4331
    %4333 = vmatmul.bf16.gmra.mxu0 %v993
    %v4334 = vpop.f32.mrf.mxu0
    %v4335 = vadd.f32 %v4262, %v4334
    %v4336 = vpop.f32.mrf.mxu0
    %4337 = vdwg.mxu0
    %4338 = vmatpush.bf16.msra.mxu0 %v2396
    %4339 = vmatpush.bf16.msra.mxu0 %v2390
    %4340 = vmatpush.bf16.msra.mxu0 %v2384
    %4341 = vmatpush.bf16.msra.mxu0 %v2378
    %4342 = vmatpush.bf16.msra.mxu0 %v2372
    %4343 = vmatpush.bf16.msra.mxu0 %v2366
    %4344 = vmatpush.bf16.msra.mxu0 %v2360
    %4345 = vmatpush.bf16.msra.mxu0 %v2354
    %4346 = vmatmul.bf16.gmra.mxu0 %v898
    %v4347 = vpop.f32.mrf.mxu0
    %v4348 = vadd.f32 %v4275, %v4347
    %v4349 = vpop.f32.mrf.mxu0
    %v4350 = vadd.f32 %v4277, %v4349
    %4351 = vmatmul.bf16.gmra.mxu0 %v906
    %v4352 = vpop.f32.mrf.mxu0
    %v4353 = vadd.f32 %v4280, %v4352
    %v4354 = vpop.f32.mrf.mxu0
    %v4355 = vadd.f32 %v4282, %v4354
    %4356 = vmatmul.bf16.gmra.mxu0 %v914
    %v4357 = vpop.f32.mrf.mxu0
    %v4358 = vadd.f32 %v4285, %v4357
    %v4359 = vpop.f32.mrf.mxu0
    %v4360 = vadd.f32 %v4287, %v4359
    %4361 = vmatmul.bf16.gmra.mxu0 %v922
    %v4362 = vpop.f32.mrf.mxu0
    %v4363 = vadd.f32 %v4290, %v4362
    %v4364 = vpop.f32.mrf.mxu0
    %v4365 = vadd.f32 %v4292, %v4364
    %4366 = vmatmul.bf16.gmra.mxu0 %v930
    %v4367 = vpop.f32.mrf.mxu0
    %v4368 = vadd.f32 %v4295, %v4367
    %v4369 = vpop.f32.mrf.mxu0
    %v4370 = vadd.f32 %v4297, %v4369
    %4371 = vmatmul.bf16.gmra.mxu0 %v938
    %v4372 = vpop.f32.mrf.mxu0
    %v4373 = vadd.f32 %v4300, %v4372
    %v4374 = vpop.f32.mrf.mxu0
    %v4375 = vadd.f32 %v4302, %v4374
    %4376 = vmatmul.bf16.gmra.mxu0 %v946
    %v4377 = vpop.f32.mrf.mxu0
    %v4378 = vadd.f32 %v4305, %v4377
    %v4379 = vpop.f32.mrf.mxu0
    %v4380 = vadd.f32 %v4307, %v4379
    %4381 = vmatmul.bf16.gmra.mxu0 %v954
    %v4382 = vpop.f32.mrf.mxu0
    %v4383 = vadd.f32 %v4310, %v4382
    %v4384 = vpop.f32.mrf.mxu0
    %v4385 = vadd.f32 %v4312, %v4384
    %4386 = vmatmul.bf16.gmra.mxu0 %v962
    %v4387 = vpop.f32.mrf.mxu0
    %v4388 = vadd.f32 %v4315, %v4387
    %v4389 = vpop.f32.mrf.mxu0
    %v4390 = vadd.f32 %v4317, %v4389
    %4391 = vmatmul.bf16.gmra.mxu0 %v970
    %v4392 = vpop.f32.mrf.mxu0
    %v4393 = vadd.f32 %v4320, %v4392
    %v4394 = vpop.f32.mrf.mxu0
    %v4395 = vadd.f32 %v4322, %v4394
    %4396 = vmatmul.bf16.gmra.mxu0 %v978
    %v4397 = vpop.f32.mrf.mxu0
    %v4398 = vadd.f32 %v4325, %v4397
    %v4399 = vpop.f32.mrf.mxu0
    %v4400 = vadd.f32 %v4327, %v4399
    %4401 = vmatmul.bf16.gmra.mxu0 %v986
    %v4402 = vpop.f32.mrf.mxu0
    %v4403 = vadd.f32 %v4330, %v4402
    %v4404 = vpop.f32.mrf.mxu0
    %v4405 = vadd.f32 %v4332, %v4404
    %4406 = vmatmul.bf16.gmra.mxu0 %v994
    %v4407 = vpop.f32.mrf.mxu0
    %v4408 = vadd.f32 %v4335, %v4407
    %v4409 = vpop.f32.mrf.mxu0
    %4410 = vdwg.mxu0
    %4411 = vmatpush.bf16.msra.mxu0 %v2444
    %4412 = vmatpush.bf16.msra.mxu0 %v2438
    %4413 = vmatpush.bf16.msra.mxu0 %v2432
    %4414 = vmatpush.bf16.msra.mxu0 %v2426
    %4415 = vmatpush.bf16.msra.mxu0 %v2420
    %4416 = vmatpush.bf16.msra.mxu0 %v2414
    %4417 = vmatpush.bf16.msra.mxu0 %v2408
    %4418 = vmatpush.bf16.msra.mxu0 %v2402
    %4419 = vmatmul.bf16.gmra.mxu0 %v899
    %v4420 = vpop.f32.mrf.mxu0
    %v4421 = vadd.f32 %v4348, %v4420
    %v4422 = vpop.f32.mrf.mxu0
    %v4423 = vadd.f32 %v4350, %v4422
    %4424 = vmatmul.bf16.gmra.mxu0 %v907
    %v4425 = vpop.f32.mrf.mxu0
    %v4426 = vadd.f32 %v4353, %v4425
    %v4427 = vpop.f32.mrf.mxu0
    %v4428 = vadd.f32 %v4355, %v4427
    %4429 = vmatmul.bf16.gmra.mxu0 %v915
    %v4430 = vpop.f32.mrf.mxu0
    %v4431 = vadd.f32 %v4358, %v4430
    %v4432 = vpop.f32.mrf.mxu0
    %v4433 = vadd.f32 %v4360, %v4432
    %4434 = vmatmul.bf16.gmra.mxu0 %v923
    %v4435 = vpop.f32.mrf.mxu0
    %v4436 = vadd.f32 %v4363, %v4435
    %v4437 = vpop.f32.mrf.mxu0
    %v4438 = vadd.f32 %v4365, %v4437
    %4439 = vmatmul.bf16.gmra.mxu0 %v931
    %v4440 = vpop.f32.mrf.mxu0
    %v4441 = vadd.f32 %v4368, %v4440
    %v4442 = vpop.f32.mrf.mxu0
    %v4443 = vadd.f32 %v4370, %v4442
    %4444 = vmatmul.bf16.gmra.mxu0 %v939
    %v4445 = vpop.f32.mrf.mxu0
    %v4446 = vadd.f32 %v4373, %v4445
    %v4447 = vpop.f32.mrf.mxu0
    %v4448 = vadd.f32 %v4375, %v4447
    %4449 = vmatmul.bf16.gmra.mxu0 %v947
    %v4450 = vpop.f32.mrf.mxu0
    %v4451 = vadd.f32 %v4378, %v4450
    %v4452 = vpop.f32.mrf.mxu0
    %v4453 = vadd.f32 %v4380, %v4452
    %4454 = vmatmul.bf16.gmra.mxu0 %v955
    %v4455 = vpop.f32.mrf.mxu0
    %v4456 = vadd.f32 %v4383, %v4455
    %v4457 = vpop.f32.mrf.mxu0
    %v4458 = vadd.f32 %v4385, %v4457
    %4459 = vmatmul.bf16.gmra.mxu0 %v963
    %v4460 = vpop.f32.mrf.mxu0
    %v4461 = vadd.f32 %v4388, %v4460
    %v4462 = vpop.f32.mrf.mxu0
    %v4463 = vadd.f32 %v4390, %v4462
    %4464 = vmatmul.bf16.gmra.mxu0 %v971
    %v4465 = vpop.f32.mrf.mxu0
    %v4466 = vadd.f32 %v4393, %v4465
    %v4467 = vpop.f32.mrf.mxu0
    %v4468 = vadd.f32 %v4395, %v4467
    %4469 = vmatmul.bf16.gmra.mxu0 %v979
    %v4470 = vpop.f32.mrf.mxu0
    %v4471 = vadd.f32 %v4398, %v4470
    %v4472 = vpop.f32.mrf.mxu0
    %v4473 = vadd.f32 %v4400, %v4472
    %4474 = vmatmul.bf16.gmra.mxu0 %v987
    %v4475 = vpop.f32.mrf.mxu0
    %v4476 = vadd.f32 %v4403, %v4475
    %v4477 = vpop.f32.mrf.mxu0
    %v4478 = vadd.f32 %v4405, %v4477
    %4479 = vmatmul.bf16.gmra.mxu0 %v995
    %v4480 = vpop.f32.mrf.mxu0
    %v4481 = vadd.f32 %v4408, %v4480
    %v4482 = vpop.f32.mrf.mxu0
    %4483 = vdwg.mxu0
    %4484 = vmatpush.bf16.msra.mxu0 %v2492
    %4485 = vmatpush.bf16.msra.mxu0 %v2486
    %4486 = vmatpush.bf16.msra.mxu0 %v2480
    %4487 = vmatpush.bf16.msra.mxu0 %v2474
    %4488 = vmatpush.bf16.msra.mxu0 %v2468
    %4489 = vmatpush.bf16.msra.mxu0 %v2462
    %4490 = vmatpush.bf16.msra.mxu0 %v2456
    %4491 = vmatpush.bf16.msra.mxu0 %v2450
    %4492 = vmatmul.bf16.gmra.mxu0 %v900
    %v4493 = vpop.f32.mrf.mxu0
    %v4494 = vadd.f32 %v4421, %v4493
    %v4495 = vpop.f32.mrf.mxu0
    %v4496 = vadd.f32 %v4423, %v4495
    %4497 = vmatmul.bf16.gmra.mxu0 %v908
    %v4498 = vpop.f32.mrf.mxu0
    %v4499 = vadd.f32 %v4426, %v4498
    %v4500 = vpop.f32.mrf.mxu0
    %v4501 = vadd.f32 %v4428, %v4500
    %4502 = vmatmul.bf16.gmra.mxu0 %v916
    %v4503 = vpop.f32.mrf.mxu0
    %v4504 = vadd.f32 %v4431, %v4503
    %v4505 = vpop.f32.mrf.mxu0
    %v4506 = vadd.f32 %v4433, %v4505
    %4507 = vmatmul.bf16.gmra.mxu0 %v924
    %v4508 = vpop.f32.mrf.mxu0
    %v4509 = vadd.f32 %v4436, %v4508
    %v4510 = vpop.f32.mrf.mxu0
    %v4511 = vadd.f32 %v4438, %v4510
    %4512 = vmatmul.bf16.gmra.mxu0 %v932
    %v4513 = vpop.f32.mrf.mxu0
    %v4514 = vadd.f32 %v4441, %v4513
    %v4515 = vpop.f32.mrf.mxu0
    %v4516 = vadd.f32 %v4443, %v4515
    %4517 = vmatmul.bf16.gmra.mxu0 %v940
    %v4518 = vpop.f32.mrf.mxu0
    %v4519 = vadd.f32 %v4446, %v4518
    %v4520 = vpop.f32.mrf.mxu0
    %v4521 = vadd.f32 %v4448, %v4520
    %4522 = vmatmul.bf16.gmra.mxu0 %v948
    %v4523 = vpop.f32.mrf.mxu0
    %v4524 = vadd.f32 %v4451, %v4523
    %v4525 = vpop.f32.mrf.mxu0
    %v4526 = vadd.f32 %v4453, %v4525
    %4527 = vmatmul.bf16.gmra.mxu0 %v956
    %v4528 = vpop.f32.mrf.mxu0
    %v4529 = vadd.f32 %v4456, %v4528
    %v4530 = vpop.f32.mrf.mxu0
    %v4531 = vadd.f32 %v4458, %v4530
    %4532 = vmatmul.bf16.gmra.mxu0 %v964
    %v4533 = vpop.f32.mrf.mxu0
    %v4534 = vadd.f32 %v4461, %v4533
    %v4535 = vpop.f32.mrf.mxu0
    %v4536 = vadd.f32 %v4463, %v4535
    %4537 = vmatmul.bf16.gmra.mxu0 %v972
    %v4538 = vpop.f32.mrf.mxu0
    %v4539 = vadd.f32 %v4466, %v4538
    %v4540 = vpop.f32.mrf.mxu0
    %v4541 = vadd.f32 %v4468, %v4540
    %4542 = vmatmul.bf16.gmra.mxu0 %v980
    %v4543 = vpop.f32.mrf.mxu0
    %v4544 = vadd.f32 %v4471, %v4543
    %v4545 = vpop.f32.mrf.mxu0
    %v4546 = vadd.f32 %v4473, %v4545
    %4547 = vmatmul.bf16.gmra.mxu0 %v988
    %v4548 = vpop.f32.mrf.mxu0
    %v4549 = vadd.f32 %v4476, %v4548
    %v4550 = vpop.f32.mrf.mxu0
    %v4551 = vadd.f32 %v4478, %v4550
    %4552 = vmatmul.bf16.gmra.mxu0 %v996
    %v4553 = vpop.f32.mrf.mxu0
    %v4554 = vadd.f32 %v4481, %v4553
    %v4555 = vpop.f32.mrf.mxu0
    %4556 = vdwg.mxu0
    %4557 = vmatpush.bf16.msra.mxu0 %v2540
    %4558 = vmatpush.bf16.msra.mxu0 %v2534
    %4559 = vmatpush.bf16.msra.mxu0 %v2528
    %4560 = vmatpush.bf16.msra.mxu0 %v2522
    %4561 = vmatpush.bf16.msra.mxu0 %v2516
    %4562 = vmatpush.bf16.msra.mxu0 %v2510
    %4563 = vmatpush.bf16.msra.mxu0 %v2504
    %4564 = vmatpush.bf16.msra.mxu0 %v2498
    %4565 = vmatmul.bf16.gmra.mxu0 %v901
    %v4566 = vpop.f32.mrf.mxu0
    %v4567 = vadd.f32 %v4494, %v4566
    %v4568 = vpop.f32.mrf.mxu0
    %v4569 = vadd.f32 %v4496, %v4568
    %4570 = vmatmul.bf16.gmra.mxu0 %v909
    %v4571 = vpop.f32.mrf.mxu0
    %v4572 = vadd.f32 %v4499, %v4571
    %v4573 = vpop.f32.mrf.mxu0
    %v4574 = vadd.f32 %v4501, %v4573
    %4575 = vmatmul.bf16.gmra.mxu0 %v917
    %v4576 = vpop.f32.mrf.mxu0
    %v4577 = vadd.f32 %v4504, %v4576
    %v4578 = vpop.f32.mrf.mxu0
    %v4579 = vadd.f32 %v4506, %v4578
    %4580 = vmatmul.bf16.gmra.mxu0 %v925
    %v4581 = vpop.f32.mrf.mxu0
    %v4582 = vadd.f32 %v4509, %v4581
    %v4583 = vpop.f32.mrf.mxu0
    %v4584 = vadd.f32 %v4511, %v4583
    %4585 = vmatmul.bf16.gmra.mxu0 %v933
    %v4586 = vpop.f32.mrf.mxu0
    %v4587 = vadd.f32 %v4514, %v4586
    %v4588 = vpop.f32.mrf.mxu0
    %v4589 = vadd.f32 %v4516, %v4588
    %4590 = vmatmul.bf16.gmra.mxu0 %v941
    %v4591 = vpop.f32.mrf.mxu0
    %v4592 = vadd.f32 %v4519, %v4591
    %v4593 = vpop.f32.mrf.mxu0
    %v4594 = vadd.f32 %v4521, %v4593
    %4595 = vmatmul.bf16.gmra.mxu0 %v949
    %v4596 = vpop.f32.mrf.mxu0
    %v4597 = vadd.f32 %v4524, %v4596
    %v4598 = vpop.f32.mrf.mxu0
    %v4599 = vadd.f32 %v4526, %v4598
    %4600 = vmatmul.bf16.gmra.mxu0 %v957
    %v4601 = vpop.f32.mrf.mxu0
    %v4602 = vadd.f32 %v4529, %v4601
    %v4603 = vpop.f32.mrf.mxu0
    %v4604 = vadd.f32 %v4531, %v4603
    %4605 = vmatmul.bf16.gmra.mxu0 %v965
    %v4606 = vpop.f32.mrf.mxu0
    %v4607 = vadd.f32 %v4534, %v4606
    %v4608 = vpop.f32.mrf.mxu0
    %v4609 = vadd.f32 %v4536, %v4608
    %4610 = vmatmul.bf16.gmra.mxu0 %v973
    %v4611 = vpop.f32.mrf.mxu0
    %v4612 = vadd.f32 %v4539, %v4611
    %v4613 = vpop.f32.mrf.mxu0
    %v4614 = vadd.f32 %v4541, %v4613
    %4615 = vmatmul.bf16.gmra.mxu0 %v981
    %v4616 = vpop.f32.mrf.mxu0
    %v4617 = vadd.f32 %v4544, %v4616
    %v4618 = vpop.f32.mrf.mxu0
    %v4619 = vadd.f32 %v4546, %v4618
    %4620 = vmatmul.bf16.gmra.mxu0 %v989
    %v4621 = vpop.f32.mrf.mxu0
    %v4622 = vadd.f32 %v4549, %v4621
    %v4623 = vpop.f32.mrf.mxu0
    %v4624 = vadd.f32 %v4551, %v4623
    %4625 = vmatmul.bf16.gmra.mxu0 %v997
    %v4626 = vpop.f32.mrf.mxu0
    %v4627 = vadd.f32 %v4554, %v4626
    %v4628 = vpop.f32.mrf.mxu0
    %4629 = vdwg.mxu0
    %4630 = vmatpush.bf16.msra.mxu0 %v2588
    %4631 = vmatpush.bf16.msra.mxu0 %v2582
    %4632 = vmatpush.bf16.msra.mxu0 %v2576
    %4633 = vmatpush.bf16.msra.mxu0 %v2570
    %4634 = vmatpush.bf16.msra.mxu0 %v2564
    %4635 = vmatpush.bf16.msra.mxu0 %v2558
    %4636 = vmatpush.bf16.msra.mxu0 %v2552
    %4637 = vmatpush.bf16.msra.mxu0 %v2546
    %4638 = vmatmul.bf16.gmra.mxu0 %v902
    %v4639 = vpop.f32.mrf.mxu0
    %v4640 = vadd.f32 %v4567, %v4639
    %v4641 = vpop.f32.mrf.mxu0
    %v4642 = vadd.f32 %v4569, %v4641
    %4643 = vmatmul.bf16.gmra.mxu0 %v910
    %v4644 = vpop.f32.mrf.mxu0
    %v4645 = vadd.f32 %v4572, %v4644
    %v4646 = vpop.f32.mrf.mxu0
    %v4647 = vadd.f32 %v4574, %v4646
    %4648 = vmatmul.bf16.gmra.mxu0 %v918
    %v4649 = vpop.f32.mrf.mxu0
    %v4650 = vadd.f32 %v4577, %v4649
    %v4651 = vpop.f32.mrf.mxu0
    %v4652 = vadd.f32 %v4579, %v4651
    %4653 = vmatmul.bf16.gmra.mxu0 %v926
    %v4654 = vpop.f32.mrf.mxu0
    %v4655 = vadd.f32 %v4582, %v4654
    %v4656 = vpop.f32.mrf.mxu0
    %v4657 = vadd.f32 %v4584, %v4656
    %4658 = vmatmul.bf16.gmra.mxu0 %v934
    %v4659 = vpop.f32.mrf.mxu0
    %v4660 = vadd.f32 %v4587, %v4659
    %v4661 = vpop.f32.mrf.mxu0
    %v4662 = vadd.f32 %v4589, %v4661
    %4663 = vmatmul.bf16.gmra.mxu0 %v942
    %v4664 = vpop.f32.mrf.mxu0
    %v4665 = vadd.f32 %v4592, %v4664
    %v4666 = vpop.f32.mrf.mxu0
    %v4667 = vadd.f32 %v4594, %v4666
    %4668 = vmatmul.bf16.gmra.mxu0 %v950
    %v4669 = vpop.f32.mrf.mxu0
    %v4670 = vadd.f32 %v4597, %v4669
    %v4671 = vpop.f32.mrf.mxu0
    %v4672 = vadd.f32 %v4599, %v4671
    %4673 = vmatmul.bf16.gmra.mxu0 %v958
    %v4674 = vpop.f32.mrf.mxu0
    %v4675 = vadd.f32 %v4602, %v4674
    %v4676 = vpop.f32.mrf.mxu0
    %v4677 = vadd.f32 %v4604, %v4676
    %4678 = vmatmul.bf16.gmra.mxu0 %v966
    %v4679 = vpop.f32.mrf.mxu0
    %v4680 = vadd.f32 %v4607, %v4679
    %v4681 = vpop.f32.mrf.mxu0
    %v4682 = vadd.f32 %v4609, %v4681
    %4683 = vmatmul.bf16.gmra.mxu0 %v974
    %v4684 = vpop.f32.mrf.mxu0
    %v4685 = vadd.f32 %v4612, %v4684
    %v4686 = vpop.f32.mrf.mxu0
    %v4687 = vadd.f32 %v4614, %v4686
    %4688 = vmatmul.bf16.gmra.mxu0 %v982
    %v4689 = vpop.f32.mrf.mxu0
    %v4690 = vadd.f32 %v4617, %v4689
    %v4691 = vpop.f32.mrf.mxu0
    %v4692 = vadd.f32 %v4619, %v4691
    %4693 = vmatmul.bf16.gmra.mxu0 %v990
    %v4694 = vpop.f32.mrf.mxu0
    %v4695 = vadd.f32 %v4622, %v4694
    %v4696 = vpop.f32.mrf.mxu0
    %v4697 = vadd.f32 %v4624, %v4696
    %4698 = vmatmul.bf16.gmra.mxu0 %v998
    %v4699 = vpop.f32.mrf.mxu0
    %v4700 = vadd.f32 %v4627, %v4699
    %v4701 = vpop.f32.mrf.mxu0
    %4702 = vdwg.mxu0
    %4703 = vmatpush.bf16.msra.mxu0 %v2636
    %4704 = vmatpush.bf16.msra.mxu0 %v2630
    %4705 = vmatpush.bf16.msra.mxu0 %v2624
    %4706 = vmatpush.bf16.msra.mxu0 %v2618
    %4707 = vmatpush.bf16.msra.mxu0 %v2612
    %4708 = vmatpush.bf16.msra.mxu0 %v2606
    %4709 = vmatpush.bf16.msra.mxu0 %v2600
    %4710 = vmatpush.bf16.msra.mxu0 %v2594
    %4711 = vmatmul.bf16.gmra.mxu0 %v903
    %v4712 = vpop.f32.mrf.mxu0
    %v4713 = vadd.f32 %v4640, %v4712
    %v4714 = vpop.f32.mrf.mxu0
    %v4715 = vadd.f32 %v4642, %v4714
    %4716 = vmatmul.bf16.gmra.mxu0 %v911
    %v4717 = vpop.f32.mrf.mxu0
    %v4718 = vadd.f32 %v4645, %v4717
    %v4719 = vpop.f32.mrf.mxu0
    %v4720 = vadd.f32 %v4647, %v4719
    %4721 = vmatmul.bf16.gmra.mxu0 %v919
    %v4722 = vpop.f32.mrf.mxu0
    %v4723 = vadd.f32 %v4650, %v4722
    %v4724 = vpop.f32.mrf.mxu0
    %v4725 = vadd.f32 %v4652, %v4724
    %4726 = vmatmul.bf16.gmra.mxu0 %v927
    %v4727 = vpop.f32.mrf.mxu0
    %v4728 = vadd.f32 %v4655, %v4727
    %v4729 = vpop.f32.mrf.mxu0
    %v4730 = vadd.f32 %v4657, %v4729
    %4731 = vmatmul.bf16.gmra.mxu0 %v935
    %v4732 = vpop.f32.mrf.mxu0
    %v4733 = vadd.f32 %v4660, %v4732
    %v4734 = vpop.f32.mrf.mxu0
    %v4735 = vadd.f32 %v4662, %v4734
    %4736 = vmatmul.bf16.gmra.mxu0 %v943
    %v4737 = vpop.f32.mrf.mxu0
    %v4738 = vadd.f32 %v4665, %v4737
    %v4739 = vpop.f32.mrf.mxu0
    %v4740 = vadd.f32 %v4667, %v4739
    %4741 = vmatmul.bf16.gmra.mxu0 %v951
    %v4742 = vpop.f32.mrf.mxu0
    %v4743 = vadd.f32 %v4670, %v4742
    %v4744 = vpop.f32.mrf.mxu0
    %v4745 = vadd.f32 %v4672, %v4744
    %4746 = vmatmul.bf16.gmra.mxu0 %v959
    %v4747 = vpop.f32.mrf.mxu0
    %v4748 = vadd.f32 %v4675, %v4747
    %v4749 = vpop.f32.mrf.mxu0
    %v4750 = vadd.f32 %v4677, %v4749
    %4751 = vmatmul.bf16.gmra.mxu0 %v967
    %v4752 = vpop.f32.mrf.mxu0
    %v4753 = vadd.f32 %v4680, %v4752
    %v4754 = vpop.f32.mrf.mxu0
    %v4755 = vadd.f32 %v4682, %v4754
    %4756 = vmatmul.bf16.gmra.mxu0 %v975
    %v4757 = vpop.f32.mrf.mxu0
    %v4758 = vadd.f32 %v4685, %v4757
    %v4759 = vpop.f32.mrf.mxu0
    %v4760 = vadd.f32 %v4687, %v4759
    %4761 = vmatmul.bf16.gmra.mxu0 %v983
    %v4762 = vpop.f32.mrf.mxu0
    %v4763 = vadd.f32 %v4690, %v4762
    %v4764 = vpop.f32.mrf.mxu0
    %v4765 = vadd.f32 %v4692, %v4764
    %4766 = vmatmul.bf16.gmra.mxu0 %v991
    %v4767 = vpop.f32.mrf.mxu0
    %v4768 = vadd.f32 %v4695, %v4767
    %v4769 = vpop.f32.mrf.mxu0
    %v4770 = vadd.f32 %v4697, %v4769
    %4771 = vmatmul.bf16.gmra.mxu0 %v999
    %v4772 = vpop.f32.mrf.mxu0
    %v4773 = vadd.f32 %v4700, %v4772
    %v4774 = vpop.f32.mrf.mxu0
    %4775 = vdwg.mxu0
    %4776 = vmatpush.bf16.msra.mxu0 %v2301
    %4777 = vmatpush.bf16.msra.mxu0 %v2295
    %4778 = vmatpush.bf16.msra.mxu0 %v2289
    %4779 = vmatpush.bf16.msra.mxu0 %v2283
    %4780 = vmatpush.bf16.msra.mxu0 %v2277
    %4781 = vmatpush.bf16.msra.mxu0 %v2271
    %4782 = vmatpush.bf16.msra.mxu0 %v2265
    %4783 = vmatpush.bf16.msra.mxu0 %v2259
    %4784 = vmatmul.bf16.gmra.mxu0 %v896
    %v4785 = vpop.f32.mrf.mxu0
    %v4786 = vadd.f32 0.0, %v4785
    %v4787 = vpop.f32.mrf.mxu0
    %v4788 = vadd.f32 0.0, %v4787
    %4789 = vmatmul.bf16.gmra.mxu0 %v904
    %v4790 = vpop.f32.mrf.mxu0
    %v4791 = vadd.f32 0.0, %v4790
    %v4792 = vpop.f32.mrf.mxu0
    %v4793 = vadd.f32 0.0, %v4792
    %4794 = vmatmul.bf16.gmra.mxu0 %v912
    %v4795 = vpop.f32.mrf.mxu0
    %v4796 = vadd.f32 0.0, %v4795
    %v4797 = vpop.f32.mrf.mxu0
    %v4798 = vadd.f32 0.0, %v4797
    %4799 = vmatmul.bf16.gmra.mxu0 %v920
    %v4800 = vpop.f32.mrf.mxu0
    %v4801 = vadd.f32 0.0, %v4800
    %v4802 = vpop.f32.mrf.mxu0
    %v4803 = vadd.f32 0.0, %v4802
    %4804 = vmatmul.bf16.gmra.mxu0 %v928
    %v4805 = vpop.f32.mrf.mxu0
    %v4806 = vadd.f32 0.0, %v4805
    %v4807 = vpop.f32.mrf.mxu0
    %v4808 = vadd.f32 0.0, %v4807
    %4809 = vmatmul.bf16.gmra.mxu0 %v936
    %v4810 = vpop.f32.mrf.mxu0
    %v4811 = vadd.f32 0.0, %v4810
    %v4812 = vpop.f32.mrf.mxu0
    %v4813 = vadd.f32 0.0, %v4812
    %4814 = vmatmul.bf16.gmra.mxu0 %v944
    %v4815 = vpop.f32.mrf.mxu0
    %v4816 = vadd.f32 0.0, %v4815
    %v4817 = vpop.f32.mrf.mxu0
    %v4818 = vadd.f32 0.0, %v4817
    %4819 = vmatmul.bf16.gmra.mxu0 %v952
    %v4820 = vpop.f32.mrf.mxu0
    %v4821 = vadd.f32 0.0, %v4820
    %v4822 = vpop.f32.mrf.mxu0
    %v4823 = vadd.f32 0.0, %v4822
    %4824 = vmatmul.bf16.gmra.mxu0 %v960
    %v4825 = vpop.f32.mrf.mxu0
    %v4826 = vadd.f32 0.0, %v4825
    %v4827 = vpop.f32.mrf.mxu0
    %v4828 = vadd.f32 0.0, %v4827
    %4829 = vmatmul.bf16.gmra.mxu0 %v968
    %v4830 = vpop.f32.mrf.mxu0
    %v4831 = vadd.f32 0.0, %v4830
    %v4832 = vpop.f32.mrf.mxu0
    %v4833 = vadd.f32 0.0, %v4832
    %4834 = vmatmul.bf16.gmra.mxu0 %v976
    %v4835 = vpop.f32.mrf.mxu0
    %v4836 = vadd.f32 0.0, %v4835
    %v4837 = vpop.f32.mrf.mxu0
    %v4838 = vadd.f32 0.0, %v4837
    %4839 = vmatmul.bf16.gmra.mxu0 %v984
    %v4840 = vpop.f32.mrf.mxu0
    %v4841 = vadd.f32 0.0, %v4840
    %v4842 = vpop.f32.mrf.mxu0
    %v4843 = vadd.f32 0.0, %v4842
    %4844 = vmatmul.bf16.gmra.mxu0 %v992
    %v4845 = vpop.f32.mrf.mxu0
    %v4846 = vadd.f32 0.0, %v4845
    %v4847 = vpop.f32.mrf.mxu0
    %4848 = vdwg.mxu0
    %4849 = vmatpush.bf16.msra.mxu0 %v2349
    %4850 = vmatpush.bf16.msra.mxu0 %v2343
    %4851 = vmatpush.bf16.msra.mxu0 %v2337
    %4852 = vmatpush.bf16.msra.mxu0 %v2331
    %4853 = vmatpush.bf16.msra.mxu0 %v2325
    %4854 = vmatpush.bf16.msra.mxu0 %v2319
    %4855 = vmatpush.bf16.msra.mxu0 %v2313
    %4856 = vmatpush.bf16.msra.mxu0 %v2307
    %4857 = vmatmul.bf16.gmra.mxu0 %v897
    %v4858 = vpop.f32.mrf.mxu0
    %v4859 = vadd.f32 %v4786, %v4858
    %v4860 = vpop.f32.mrf.mxu0
    %v4861 = vadd.f32 %v4788, %v4860
    %4862 = vmatmul.bf16.gmra.mxu0 %v905
    %v4863 = vpop.f32.mrf.mxu0
    %v4864 = vadd.f32 %v4791, %v4863
    %v4865 = vpop.f32.mrf.mxu0
    %v4866 = vadd.f32 %v4793, %v4865
    %4867 = vmatmul.bf16.gmra.mxu0 %v913
    %v4868 = vpop.f32.mrf.mxu0
    %v4869 = vadd.f32 %v4796, %v4868
    %v4870 = vpop.f32.mrf.mxu0
    %v4871 = vadd.f32 %v4798, %v4870
    %4872 = vmatmul.bf16.gmra.mxu0 %v921
    %v4873 = vpop.f32.mrf.mxu0
    %v4874 = vadd.f32 %v4801, %v4873
    %v4875 = vpop.f32.mrf.mxu0
    %v4876 = vadd.f32 %v4803, %v4875
    %4877 = vmatmul.bf16.gmra.mxu0 %v929
    %v4878 = vpop.f32.mrf.mxu0
    %v4879 = vadd.f32 %v4806, %v4878
    %v4880 = vpop.f32.mrf.mxu0
    %v4881 = vadd.f32 %v4808, %v4880
    %4882 = vmatmul.bf16.gmra.mxu0 %v937
    %v4883 = vpop.f32.mrf.mxu0
    %v4884 = vadd.f32 %v4811, %v4883
    %v4885 = vpop.f32.mrf.mxu0
    %v4886 = vadd.f32 %v4813, %v4885
    %4887 = vmatmul.bf16.gmra.mxu0 %v945
    %v4888 = vpop.f32.mrf.mxu0
    %v4889 = vadd.f32 %v4816, %v4888
    %v4890 = vpop.f32.mrf.mxu0
    %v4891 = vadd.f32 %v4818, %v4890
    %4892 = vmatmul.bf16.gmra.mxu0 %v953
    %v4893 = vpop.f32.mrf.mxu0
    %v4894 = vadd.f32 %v4821, %v4893
    %v4895 = vpop.f32.mrf.mxu0
    %v4896 = vadd.f32 %v4823, %v4895
    %4897 = vmatmul.bf16.gmra.mxu0 %v961
    %v4898 = vpop.f32.mrf.mxu0
    %v4899 = vadd.f32 %v4826, %v4898
    %v4900 = vpop.f32.mrf.mxu0
    %v4901 = vadd.f32 %v4828, %v4900
    %4902 = vmatmul.bf16.gmra.mxu0 %v969
    %v4903 = vpop.f32.mrf.mxu0
    %v4904 = vadd.f32 %v4831, %v4903
    %v4905 = vpop.f32.mrf.mxu0
    %v4906 = vadd.f32 %v4833, %v4905
    %4907 = vmatmul.bf16.gmra.mxu0 %v977
    %v4908 = vpop.f32.mrf.mxu0
    %v4909 = vadd.f32 %v4836, %v4908
    %v4910 = vpop.f32.mrf.mxu0
    %v4911 = vadd.f32 %v4838, %v4910
    %4912 = vmatmul.bf16.gmra.mxu0 %v985
    %v4913 = vpop.f32.mrf.mxu0
    %v4914 = vadd.f32 %v4841, %v4913
    %v4915 = vpop.f32.mrf.mxu0
    %v4916 = vadd.f32 %v4843, %v4915
    %4917 = vmatmul.bf16.gmra.mxu0 %v993
    %v4918 = vpop.f32.mrf.mxu0
    %v4919 = vadd.f32 %v4846, %v4918
    %v4920 = vpop.f32.mrf.mxu0
    %4921 = vdwg.mxu0
    %4922 = vmatpush.bf16.msra.mxu0 %v2397
    %4923 = vmatpush.bf16.msra.mxu0 %v2391
    %4924 = vmatpush.bf16.msra.mxu0 %v2385
    %4925 = vmatpush.bf16.msra.mxu0 %v2379
    %4926 = vmatpush.bf16.msra.mxu0 %v2373
    %4927 = vmatpush.bf16.msra.mxu0 %v2367
    %4928 = vmatpush.bf16.msra.mxu0 %v2361
    %4929 = vmatpush.bf16.msra.mxu0 %v2355
    %4930 = vmatmul.bf16.gmra.mxu0 %v898
    %v4931 = vpop.f32.mrf.mxu0
    %v4932 = vadd.f32 %v4859, %v4931
    %v4933 = vpop.f32.mrf.mxu0
    %v4934 = vadd.f32 %v4861, %v4933
    %4935 = vmatmul.bf16.gmra.mxu0 %v906
    %v4936 = vpop.f32.mrf.mxu0
    %v4937 = vadd.f32 %v4864, %v4936
    %v4938 = vpop.f32.mrf.mxu0
    %v4939 = vadd.f32 %v4866, %v4938
    %4940 = vmatmul.bf16.gmra.mxu0 %v914
    %v4941 = vpop.f32.mrf.mxu0
    %v4942 = vadd.f32 %v4869, %v4941
    %v4943 = vpop.f32.mrf.mxu0
    %v4944 = vadd.f32 %v4871, %v4943
    %4945 = vmatmul.bf16.gmra.mxu0 %v922
    %v4946 = vpop.f32.mrf.mxu0
    %v4947 = vadd.f32 %v4874, %v4946
    %v4948 = vpop.f32.mrf.mxu0
    %v4949 = vadd.f32 %v4876, %v4948
    %4950 = vmatmul.bf16.gmra.mxu0 %v930
    %v4951 = vpop.f32.mrf.mxu0
    %v4952 = vadd.f32 %v4879, %v4951
    %v4953 = vpop.f32.mrf.mxu0
    %v4954 = vadd.f32 %v4881, %v4953
    %4955 = vmatmul.bf16.gmra.mxu0 %v938
    %v4956 = vpop.f32.mrf.mxu0
    %v4957 = vadd.f32 %v4884, %v4956
    %v4958 = vpop.f32.mrf.mxu0
    %v4959 = vadd.f32 %v4886, %v4958
    %4960 = vmatmul.bf16.gmra.mxu0 %v946
    %v4961 = vpop.f32.mrf.mxu0
    %v4962 = vadd.f32 %v4889, %v4961
    %v4963 = vpop.f32.mrf.mxu0
    %v4964 = vadd.f32 %v4891, %v4963
    %4965 = vmatmul.bf16.gmra.mxu0 %v954
    %v4966 = vpop.f32.mrf.mxu0
    %v4967 = vadd.f32 %v4894, %v4966
    %v4968 = vpop.f32.mrf.mxu0
    %v4969 = vadd.f32 %v4896, %v4968
    %4970 = vmatmul.bf16.gmra.mxu0 %v962
    %v4971 = vpop.f32.mrf.mxu0
    %v4972 = vadd.f32 %v4899, %v4971
    %v4973 = vpop.f32.mrf.mxu0
    %v4974 = vadd.f32 %v4901, %v4973
    %4975 = vmatmul.bf16.gmra.mxu0 %v970
    %v4976 = vpop.f32.mrf.mxu0
    %v4977 = vadd.f32 %v4904, %v4976
    %v4978 = vpop.f32.mrf.mxu0
    %v4979 = vadd.f32 %v4906, %v4978
    %4980 = vmatmul.bf16.gmra.mxu0 %v978
    %v4981 = vpop.f32.mrf.mxu0
    %v4982 = vadd.f32 %v4909, %v4981
    %v4983 = vpop.f32.mrf.mxu0
    %v4984 = vadd.f32 %v4911, %v4983
    %4985 = vmatmul.bf16.gmra.mxu0 %v986
    %v4986 = vpop.f32.mrf.mxu0
    %v4987 = vadd.f32 %v4914, %v4986
    %v4988 = vpop.f32.mrf.mxu0
    %v4989 = vadd.f32 %v4916, %v4988
    %4990 = vmatmul.bf16.gmra.mxu0 %v994
    %v4991 = vpop.f32.mrf.mxu0
    %v4992 = vadd.f32 %v4919, %v4991
    %v4993 = vpop.f32.mrf.mxu0
    %4994 = vdwg.mxu0
    %4995 = vmatpush.bf16.msra.mxu0 %v2445
    %4996 = vmatpush.bf16.msra.mxu0 %v2439
    %4997 = vmatpush.bf16.msra.mxu0 %v2433
    %4998 = vmatpush.bf16.msra.mxu0 %v2427
    %4999 = vmatpush.bf16.msra.mxu0 %v2421
    %5000 = vmatpush.bf16.msra.mxu0 %v2415
    %5001 = vmatpush.bf16.msra.mxu0 %v2409
    %5002 = vmatpush.bf16.msra.mxu0 %v2403
    %5003 = vmatmul.bf16.gmra.mxu0 %v899
    %v5004 = vpop.f32.mrf.mxu0
    %v5005 = vadd.f32 %v4932, %v5004
    %v5006 = vpop.f32.mrf.mxu0
    %v5007 = vadd.f32 %v4934, %v5006
    %5008 = vmatmul.bf16.gmra.mxu0 %v907
    %v5009 = vpop.f32.mrf.mxu0
    %v5010 = vadd.f32 %v4937, %v5009
    %v5011 = vpop.f32.mrf.mxu0
    %v5012 = vadd.f32 %v4939, %v5011
    %5013 = vmatmul.bf16.gmra.mxu0 %v915
    %v5014 = vpop.f32.mrf.mxu0
    %v5015 = vadd.f32 %v4942, %v5014
    %v5016 = vpop.f32.mrf.mxu0
    %v5017 = vadd.f32 %v4944, %v5016
    %5018 = vmatmul.bf16.gmra.mxu0 %v923
    %v5019 = vpop.f32.mrf.mxu0
    %v5020 = vadd.f32 %v4947, %v5019
    %v5021 = vpop.f32.mrf.mxu0
    %v5022 = vadd.f32 %v4949, %v5021
    %5023 = vmatmul.bf16.gmra.mxu0 %v931
    %v5024 = vpop.f32.mrf.mxu0
    %v5025 = vadd.f32 %v4952, %v5024
    %v5026 = vpop.f32.mrf.mxu0
    %v5027 = vadd.f32 %v4954, %v5026
    %5028 = vmatmul.bf16.gmra.mxu0 %v939
    %v5029 = vpop.f32.mrf.mxu0
    %v5030 = vadd.f32 %v4957, %v5029
    %v5031 = vpop.f32.mrf.mxu0
    %v5032 = vadd.f32 %v4959, %v5031
    %5033 = vmatmul.bf16.gmra.mxu0 %v947
    %v5034 = vpop.f32.mrf.mxu0
    %v5035 = vadd.f32 %v4962, %v5034
    %v5036 = vpop.f32.mrf.mxu0
    %v5037 = vadd.f32 %v4964, %v5036
    %5038 = vmatmul.bf16.gmra.mxu0 %v955
    %v5039 = vpop.f32.mrf.mxu0
    %v5040 = vadd.f32 %v4967, %v5039
    %v5041 = vpop.f32.mrf.mxu0
    %v5042 = vadd.f32 %v4969, %v5041
    %5043 = vmatmul.bf16.gmra.mxu0 %v963
    %v5044 = vpop.f32.mrf.mxu0
    %v5045 = vadd.f32 %v4972, %v5044
    %v5046 = vpop.f32.mrf.mxu0
    %v5047 = vadd.f32 %v4974, %v5046
    %5048 = vmatmul.bf16.gmra.mxu0 %v971
    %v5049 = vpop.f32.mrf.mxu0
    %v5050 = vadd.f32 %v4977, %v5049
    %v5051 = vpop.f32.mrf.mxu0
    %v5052 = vadd.f32 %v4979, %v5051
    %5053 = vmatmul.bf16.gmra.mxu0 %v979
    %v5054 = vpop.f32.mrf.mxu0
    %v5055 = vadd.f32 %v4982, %v5054
    %v5056 = vpop.f32.mrf.mxu0
    %v5057 = vadd.f32 %v4984, %v5056
    %5058 = vmatmul.bf16.gmra.mxu0 %v987
    %v5059 = vpop.f32.mrf.mxu0
    %v5060 = vadd.f32 %v4987, %v5059
    %v5061 = vpop.f32.mrf.mxu0
    %v5062 = vadd.f32 %v4989, %v5061
    %5063 = vmatmul.bf16.gmra.mxu0 %v995
    %v5064 = vpop.f32.mrf.mxu0
    %v5065 = vadd.f32 %v4992, %v5064
    %v5066 = vpop.f32.mrf.mxu0
    %5067 = vdwg.mxu0
    %5068 = vmatpush.bf16.msra.mxu0 %v2493
    %5069 = vmatpush.bf16.msra.mxu0 %v2487
    %5070 = vmatpush.bf16.msra.mxu0 %v2481
    %5071 = vmatpush.bf16.msra.mxu0 %v2475
    %5072 = vmatpush.bf16.msra.mxu0 %v2469
    %5073 = vmatpush.bf16.msra.mxu0 %v2463
    %5074 = vmatpush.bf16.msra.mxu0 %v2457
    %5075 = vmatpush.bf16.msra.mxu0 %v2451
    %5076 = vmatmul.bf16.gmra.mxu0 %v900
    %v5077 = vpop.f32.mrf.mxu0
    %v5078 = vadd.f32 %v5005, %v5077
    %v5079 = vpop.f32.mrf.mxu0
    %v5080 = vadd.f32 %v5007, %v5079
    %5081 = vmatmul.bf16.gmra.mxu0 %v908
    %v5082 = vpop.f32.mrf.mxu0
    %v5083 = vadd.f32 %v5010, %v5082
    %v5084 = vpop.f32.mrf.mxu0
    %v5085 = vadd.f32 %v5012, %v5084
    %5086 = vmatmul.bf16.gmra.mxu0 %v916
    %v5087 = vpop.f32.mrf.mxu0
    %v5088 = vadd.f32 %v5015, %v5087
    %v5089 = vpop.f32.mrf.mxu0
    %v5090 = vadd.f32 %v5017, %v5089
    %5091 = vmatmul.bf16.gmra.mxu0 %v924
    %v5092 = vpop.f32.mrf.mxu0
    %v5093 = vadd.f32 %v5020, %v5092
    %v5094 = vpop.f32.mrf.mxu0
    %v5095 = vadd.f32 %v5022, %v5094
    %5096 = vmatmul.bf16.gmra.mxu0 %v932
    %v5097 = vpop.f32.mrf.mxu0
    %v5098 = vadd.f32 %v5025, %v5097
    %v5099 = vpop.f32.mrf.mxu0
    %v5100 = vadd.f32 %v5027, %v5099
    %5101 = vmatmul.bf16.gmra.mxu0 %v940
    %v5102 = vpop.f32.mrf.mxu0
    %v5103 = vadd.f32 %v5030, %v5102
    %v5104 = vpop.f32.mrf.mxu0
    %v5105 = vadd.f32 %v5032, %v5104
    %5106 = vmatmul.bf16.gmra.mxu0 %v948
    %v5107 = vpop.f32.mrf.mxu0
    %v5108 = vadd.f32 %v5035, %v5107
    %v5109 = vpop.f32.mrf.mxu0
    %v5110 = vadd.f32 %v5037, %v5109
    %5111 = vmatmul.bf16.gmra.mxu0 %v956
    %v5112 = vpop.f32.mrf.mxu0
    %v5113 = vadd.f32 %v5040, %v5112
    %v5114 = vpop.f32.mrf.mxu0
    %v5115 = vadd.f32 %v5042, %v5114
    %5116 = vmatmul.bf16.gmra.mxu0 %v964
    %v5117 = vpop.f32.mrf.mxu0
    %v5118 = vadd.f32 %v5045, %v5117
    %v5119 = vpop.f32.mrf.mxu0
    %v5120 = vadd.f32 %v5047, %v5119
    %5121 = vmatmul.bf16.gmra.mxu0 %v972
    %v5122 = vpop.f32.mrf.mxu0
    %v5123 = vadd.f32 %v5050, %v5122
    %v5124 = vpop.f32.mrf.mxu0
    %v5125 = vadd.f32 %v5052, %v5124
    %5126 = vmatmul.bf16.gmra.mxu0 %v980
    %v5127 = vpop.f32.mrf.mxu0
    %v5128 = vadd.f32 %v5055, %v5127
    %v5129 = vpop.f32.mrf.mxu0
    %v5130 = vadd.f32 %v5057, %v5129
    %5131 = vmatmul.bf16.gmra.mxu0 %v988
    %v5132 = vpop.f32.mrf.mxu0
    %v5133 = vadd.f32 %v5060, %v5132
    %v5134 = vpop.f32.mrf.mxu0
    %v5135 = vadd.f32 %v5062, %v5134
    %5136 = vmatmul.bf16.gmra.mxu0 %v996
    %v5137 = vpop.f32.mrf.mxu0
    %v5138 = vadd.f32 %v5065, %v5137
    %v5139 = vpop.f32.mrf.mxu0
    %5140 = vdwg.mxu0
    %5141 = vmatpush.bf16.msra.mxu0 %v2541
    %5142 = vmatpush.bf16.msra.mxu0 %v2535
    %5143 = vmatpush.bf16.msra.mxu0 %v2529
    %5144 = vmatpush.bf16.msra.mxu0 %v2523
    %5145 = vmatpush.bf16.msra.mxu0 %v2517
    %5146 = vmatpush.bf16.msra.mxu0 %v2511
    %5147 = vmatpush.bf16.msra.mxu0 %v2505
    %5148 = vmatpush.bf16.msra.mxu0 %v2499
    %5149 = vmatmul.bf16.gmra.mxu0 %v901
    %v5150 = vpop.f32.mrf.mxu0
    %v5151 = vadd.f32 %v5078, %v5150
    %v5152 = vpop.f32.mrf.mxu0
    %v5153 = vadd.f32 %v5080, %v5152
    %5154 = vmatmul.bf16.gmra.mxu0 %v909
    %v5155 = vpop.f32.mrf.mxu0
    %v5156 = vadd.f32 %v5083, %v5155
    %v5157 = vpop.f32.mrf.mxu0
    %v5158 = vadd.f32 %v5085, %v5157
    %5159 = vmatmul.bf16.gmra.mxu0 %v917
    %v5160 = vpop.f32.mrf.mxu0
    %v5161 = vadd.f32 %v5088, %v5160
    %v5162 = vpop.f32.mrf.mxu0
    %v5163 = vadd.f32 %v5090, %v5162
    %5164 = vmatmul.bf16.gmra.mxu0 %v925
    %v5165 = vpop.f32.mrf.mxu0
    %v5166 = vadd.f32 %v5093, %v5165
    %v5167 = vpop.f32.mrf.mxu0
    %v5168 = vadd.f32 %v5095, %v5167
    %5169 = vmatmul.bf16.gmra.mxu0 %v933
    %v5170 = vpop.f32.mrf.mxu0
    %v5171 = vadd.f32 %v5098, %v5170
    %v5172 = vpop.f32.mrf.mxu0
    %v5173 = vadd.f32 %v5100, %v5172
    %5174 = vmatmul.bf16.gmra.mxu0 %v941
    %v5175 = vpop.f32.mrf.mxu0
    %v5176 = vadd.f32 %v5103, %v5175
    %v5177 = vpop.f32.mrf.mxu0
    %v5178 = vadd.f32 %v5105, %v5177
    %5179 = vmatmul.bf16.gmra.mxu0 %v949
    %v5180 = vpop.f32.mrf.mxu0
    %v5181 = vadd.f32 %v5108, %v5180
    %v5182 = vpop.f32.mrf.mxu0
    %v5183 = vadd.f32 %v5110, %v5182
    %5184 = vmatmul.bf16.gmra.mxu0 %v957
    %v5185 = vpop.f32.mrf.mxu0
    %v5186 = vadd.f32 %v5113, %v5185
    %v5187 = vpop.f32.mrf.mxu0
    %v5188 = vadd.f32 %v5115, %v5187
    %5189 = vmatmul.bf16.gmra.mxu0 %v965
    %v5190 = vpop.f32.mrf.mxu0
    %v5191 = vadd.f32 %v5118, %v5190
    %v5192 = vpop.f32.mrf.mxu0
    %v5193 = vadd.f32 %v5120, %v5192
    %5194 = vmatmul.bf16.gmra.mxu0 %v973
    %v5195 = vpop.f32.mrf.mxu0
    %v5196 = vadd.f32 %v5123, %v5195
    %v5197 = vpop.f32.mrf.mxu0
    %v5198 = vadd.f32 %v5125, %v5197
    %5199 = vmatmul.bf16.gmra.mxu0 %v981
    %v5200 = vpop.f32.mrf.mxu0
    %v5201 = vadd.f32 %v5128, %v5200
    %v5202 = vpop.f32.mrf.mxu0
    %v5203 = vadd.f32 %v5130, %v5202
    %5204 = vmatmul.bf16.gmra.mxu0 %v989
    %v5205 = vpop.f32.mrf.mxu0
    %v5206 = vadd.f32 %v5133, %v5205
    %v5207 = vpop.f32.mrf.mxu0
    %v5208 = vadd.f32 %v5135, %v5207
    %5209 = vmatmul.bf16.gmra.mxu0 %v997
    %v5210 = vpop.f32.mrf.mxu0
    %v5211 = vadd.f32 %v5138, %v5210
    %v5212 = vpop.f32.mrf.mxu0
    %5213 = vdwg.mxu0
    %5214 = vmatpush.bf16.msra.mxu0 %v2589
    %5215 = vmatpush.bf16.msra.mxu0 %v2583
    %5216 = vmatpush.bf16.msra.mxu0 %v2577
    %5217 = vmatpush.bf16.msra.mxu0 %v2571
    %5218 = vmatpush.bf16.msra.mxu0 %v2565
    %5219 = vmatpush.bf16.msra.mxu0 %v2559
    %5220 = vmatpush.bf16.msra.mxu0 %v2553
    %5221 = vmatpush.bf16.msra.mxu0 %v2547
    %5222 = vmatmul.bf16.gmra.mxu0 %v902
    %v5223 = vpop.f32.mrf.mxu0
    %v5224 = vadd.f32 %v5151, %v5223
    %v5225 = vpop.f32.mrf.mxu0
    %v5226 = vadd.f32 %v5153, %v5225
    %5227 = vmatmul.bf16.gmra.mxu0 %v910
    %v5228 = vpop.f32.mrf.mxu0
    %v5229 = vadd.f32 %v5156, %v5228
    %v5230 = vpop.f32.mrf.mxu0
    %v5231 = vadd.f32 %v5158, %v5230
    %5232 = vmatmul.bf16.gmra.mxu0 %v918
    %v5233 = vpop.f32.mrf.mxu0
    %v5234 = vadd.f32 %v5161, %v5233
    %v5235 = vpop.f32.mrf.mxu0
    %v5236 = vadd.f32 %v5163, %v5235
    %5237 = vmatmul.bf16.gmra.mxu0 %v926
    %v5238 = vpop.f32.mrf.mxu0
    %v5239 = vadd.f32 %v5166, %v5238
    %v5240 = vpop.f32.mrf.mxu0
    %v5241 = vadd.f32 %v5168, %v5240
    %5242 = vmatmul.bf16.gmra.mxu0 %v934
    %v5243 = vpop.f32.mrf.mxu0
    %v5244 = vadd.f32 %v5171, %v5243
    %v5245 = vpop.f32.mrf.mxu0
    %v5246 = vadd.f32 %v5173, %v5245
    %5247 = vmatmul.bf16.gmra.mxu0 %v942
    %v5248 = vpop.f32.mrf.mxu0
    %v5249 = vadd.f32 %v5176, %v5248
    %v5250 = vpop.f32.mrf.mxu0
    %v5251 = vadd.f32 %v5178, %v5250
    %5252 = vmatmul.bf16.gmra.mxu0 %v950
    %v5253 = vpop.f32.mrf.mxu0
    %v5254 = vadd.f32 %v5181, %v5253
    %v5255 = vpop.f32.mrf.mxu0
    %v5256 = vadd.f32 %v5183, %v5255
    %5257 = vmatmul.bf16.gmra.mxu0 %v958
    %v5258 = vpop.f32.mrf.mxu0
    %v5259 = vadd.f32 %v5186, %v5258
    %v5260 = vpop.f32.mrf.mxu0
    %v5261 = vadd.f32 %v5188, %v5260
    %5262 = vmatmul.bf16.gmra.mxu0 %v966
    %v5263 = vpop.f32.mrf.mxu0
    %v5264 = vadd.f32 %v5191, %v5263
    %v5265 = vpop.f32.mrf.mxu0
    %v5266 = vadd.f32 %v5193, %v5265
    %5267 = vmatmul.bf16.gmra.mxu0 %v974
    %v5268 = vpop.f32.mrf.mxu0
    %v5269 = vadd.f32 %v5196, %v5268
    %v5270 = vpop.f32.mrf.mxu0
    %v5271 = vadd.f32 %v5198, %v5270
    %5272 = vmatmul.bf16.gmra.mxu0 %v982
    %v5273 = vpop.f32.mrf.mxu0
    %v5274 = vadd.f32 %v5201, %v5273
    %v5275 = vpop.f32.mrf.mxu0
    %v5276 = vadd.f32 %v5203, %v5275
    %5277 = vmatmul.bf16.gmra.mxu0 %v990
    %v5278 = vpop.f32.mrf.mxu0
    %v5279 = vadd.f32 %v5206, %v5278
    %v5280 = vpop.f32.mrf.mxu0
    %v5281 = vadd.f32 %v5208, %v5280
    %5282 = vmatmul.bf16.gmra.mxu0 %v998
    %v5283 = vpop.f32.mrf.mxu0
    %v5284 = vadd.f32 %v5211, %v5283
    %v5285 = vpop.f32.mrf.mxu0
    %5286 = vdwg.mxu0
    %5287 = vmatpush.bf16.msra.mxu0 %v2637
    %5288 = vmatpush.bf16.msra.mxu0 %v2631
    %5289 = vmatpush.bf16.msra.mxu0 %v2625
    %5290 = vmatpush.bf16.msra.mxu0 %v2619
    %5291 = vmatpush.bf16.msra.mxu0 %v2613
    %5292 = vmatpush.bf16.msra.mxu0 %v2607
    %5293 = vmatpush.bf16.msra.mxu0 %v2601
    %5294 = vmatpush.bf16.msra.mxu0 %v2595
    %5295 = vmatmul.bf16.gmra.mxu0 %v903
    %v5296 = vpop.f32.mrf.mxu0
    %v5297 = vadd.f32 %v5224, %v5296
    %v5298 = vpop.f32.mrf.mxu0
    %v5299 = vadd.f32 %v5226, %v5298
    %5300 = vmatmul.bf16.gmra.mxu0 %v911
    %v5301 = vpop.f32.mrf.mxu0
    %v5302 = vadd.f32 %v5229, %v5301
    %v5303 = vpop.f32.mrf.mxu0
    %v5304 = vadd.f32 %v5231, %v5303
    %5305 = vmatmul.bf16.gmra.mxu0 %v919
    %v5306 = vpop.f32.mrf.mxu0
    %v5307 = vadd.f32 %v5234, %v5306
    %v5308 = vpop.f32.mrf.mxu0
    %v5309 = vadd.f32 %v5236, %v5308
    %5310 = vmatmul.bf16.gmra.mxu0 %v927
    %v5311 = vpop.f32.mrf.mxu0
    %v5312 = vadd.f32 %v5239, %v5311
    %v5313 = vpop.f32.mrf.mxu0
    %v5314 = vadd.f32 %v5241, %v5313
    %5315 = vmatmul.bf16.gmra.mxu0 %v935
    %v5316 = vpop.f32.mrf.mxu0
    %v5317 = vadd.f32 %v5244, %v5316
    %v5318 = vpop.f32.mrf.mxu0
    %v5319 = vadd.f32 %v5246, %v5318
    %5320 = vmatmul.bf16.gmra.mxu0 %v943
    %v5321 = vpop.f32.mrf.mxu0
    %v5322 = vadd.f32 %v5249, %v5321
    %v5323 = vpop.f32.mrf.mxu0
    %v5324 = vadd.f32 %v5251, %v5323
    %5325 = vmatmul.bf16.gmra.mxu0 %v951
    %v5326 = vpop.f32.mrf.mxu0
    %v5327 = vadd.f32 %v5254, %v5326
    %v5328 = vpop.f32.mrf.mxu0
    %v5329 = vadd.f32 %v5256, %v5328
    %5330 = vmatmul.bf16.gmra.mxu0 %v959
    %v5331 = vpop.f32.mrf.mxu0
    %v5332 = vadd.f32 %v5259, %v5331
    %v5333 = vpop.f32.mrf.mxu0
    %v5334 = vadd.f32 %v5261, %v5333
    %5335 = vmatmul.bf16.gmra.mxu0 %v967
    %v5336 = vpop.f32.mrf.mxu0
    %v5337 = vadd.f32 %v5264, %v5336
    %v5338 = vpop.f32.mrf.mxu0
    %v5339 = vadd.f32 %v5266, %v5338
    %5340 = vmatmul.bf16.gmra.mxu0 %v975
    %v5341 = vpop.f32.mrf.mxu0
    %v5342 = vadd.f32 %v5269, %v5341
    %v5343 = vpop.f32.mrf.mxu0
    %v5344 = vadd.f32 %v5271, %v5343
    %5345 = vmatmul.bf16.gmra.mxu0 %v983
    %v5346 = vpop.f32.mrf.mxu0
    %v5347 = vadd.f32 %v5274, %v5346
    %v5348 = vpop.f32.mrf.mxu0
    %v5349 = vadd.f32 %v5276, %v5348
    %5350 = vmatmul.bf16.gmra.mxu0 %v991
    %v5351 = vpop.f32.mrf.mxu0
    %v5352 = vadd.f32 %v5279, %v5351
    %v5353 = vpop.f32.mrf.mxu0
    %v5354 = vadd.f32 %v5281, %v5353
    %5355 = vmatmul.bf16.gmra.mxu0 %v999
    %v5356 = vpop.f32.mrf.mxu0
    %v5357 = vadd.f32 %v5284, %v5356
    %v5358 = vpop.f32.mrf.mxu0
    %5359 = vdwg.mxu0
    %5360 = vmatpush.bf16.msra.mxu0 %v2302
    %5361 = vmatpush.bf16.msra.mxu0 %v2296
    %5362 = vmatpush.bf16.msra.mxu0 %v2290
    %5363 = vmatpush.bf16.msra.mxu0 %v2284
    %5364 = vmatpush.bf16.msra.mxu0 %v2278
    %5365 = vmatpush.bf16.msra.mxu0 %v2272
    %5366 = vmatpush.bf16.msra.mxu0 %v2266
    %5367 = vmatpush.bf16.msra.mxu0 %v2260
    %5368 = vmatmul.bf16.gmra.mxu0 %v896
    %v5369 = vpop.f32.mrf.mxu0
    %v5370 = vadd.f32 0.0, %v5369
    %v5371 = vpop.f32.mrf.mxu0
    %v5372 = vadd.f32 0.0, %v5371
    %5373 = vmatmul.bf16.gmra.mxu0 %v904
    %v5374 = vpop.f32.mrf.mxu0
    %v5375 = vadd.f32 0.0, %v5374
    %v5376 = vpop.f32.mrf.mxu0
    %v5377 = vadd.f32 0.0, %v5376
    %5378 = vmatmul.bf16.gmra.mxu0 %v912
    %v5379 = vpop.f32.mrf.mxu0
    %v5380 = vadd.f32 0.0, %v5379
    %v5381 = vpop.f32.mrf.mxu0
    %v5382 = vadd.f32 0.0, %v5381
    %5383 = vmatmul.bf16.gmra.mxu0 %v920
    %v5384 = vpop.f32.mrf.mxu0
    %v5385 = vadd.f32 0.0, %v5384
    %v5386 = vpop.f32.mrf.mxu0
    %v5387 = vadd.f32 0.0, %v5386
    %5388 = vmatmul.bf16.gmra.mxu0 %v928
    %v5389 = vpop.f32.mrf.mxu0
    %v5390 = vadd.f32 0.0, %v5389
    %v5391 = vpop.f32.mrf.mxu0
    %v5392 = vadd.f32 0.0, %v5391
    %5393 = vmatmul.bf16.gmra.mxu0 %v936
    %v5394 = vpop.f32.mrf.mxu0
    %v5395 = vadd.f32 0.0, %v5394
    %v5396 = vpop.f32.mrf.mxu0
    %v5397 = vadd.f32 0.0, %v5396
    %5398 = vmatmul.bf16.gmra.mxu0 %v944
    %v5399 = vpop.f32.mrf.mxu0
    %v5400 = vadd.f32 0.0, %v5399
    %v5401 = vpop.f32.mrf.mxu0
    %v5402 = vadd.f32 0.0, %v5401
    %5403 = vmatmul.bf16.gmra.mxu0 %v952
    %v5404 = vpop.f32.mrf.mxu0
    %v5405 = vadd.f32 0.0, %v5404
    %v5406 = vpop.f32.mrf.mxu0
    %v5407 = vadd.f32 0.0, %v5406
    %5408 = vmatmul.bf16.gmra.mxu0 %v960
    %v5409 = vpop.f32.mrf.mxu0
    %v5410 = vadd.f32 0.0, %v5409
    %v5411 = vpop.f32.mrf.mxu0
    %v5412 = vadd.f32 0.0, %v5411
    %5413 = vmatmul.bf16.gmra.mxu0 %v968
    %v5414 = vpop.f32.mrf.mxu0
    %v5415 = vadd.f32 0.0, %v5414
    %v5416 = vpop.f32.mrf.mxu0
    %v5417 = vadd.f32 0.0, %v5416
    %5418 = vmatmul.bf16.gmra.mxu0 %v976
    %v5419 = vpop.f32.mrf.mxu0
    %v5420 = vadd.f32 0.0, %v5419
    %v5421 = vpop.f32.mrf.mxu0
    %v5422 = vadd.f32 0.0, %v5421
    %5423 = vmatmul.bf16.gmra.mxu0 %v984
    %v5424 = vpop.f32.mrf.mxu0
    %v5425 = vadd.f32 0.0, %v5424
    %v5426 = vpop.f32.mrf.mxu0
    %v5427 = vadd.f32 0.0, %v5426
    %5428 = vmatmul.bf16.gmra.mxu0 %v992
    %v5429 = vpop.f32.mrf.mxu0
    %v5430 = vadd.f32 0.0, %v5429
    %v5431 = vpop.f32.mrf.mxu0
    %5432 = vdwg.mxu0
    %5433 = vmatpush.bf16.msra.mxu0 %v2350
    %5434 = vmatpush.bf16.msra.mxu0 %v2344
    %5435 = vmatpush.bf16.msra.mxu0 %v2338
    %5436 = vmatpush.bf16.msra.mxu0 %v2332
    %5437 = vmatpush.bf16.msra.mxu0 %v2326
    %5438 = vmatpush.bf16.msra.mxu0 %v2320
    %5439 = vmatpush.bf16.msra.mxu0 %v2314
    %5440 = vmatpush.bf16.msra.mxu0 %v2308
    %5441 = vmatmul.bf16.gmra.mxu0 %v897
    %v5442 = vpop.f32.mrf.mxu0
    %v5443 = vadd.f32 %v5370, %v5442
    %v5444 = vpop.f32.mrf.mxu0
    %v5445 = vadd.f32 %v5372, %v5444
    %5446 = vmatmul.bf16.gmra.mxu0 %v905
    %v5447 = vpop.f32.mrf.mxu0
    %v5448 = vadd.f32 %v5375, %v5447
    %v5449 = vpop.f32.mrf.mxu0
    %v5450 = vadd.f32 %v5377, %v5449
    %5451 = vmatmul.bf16.gmra.mxu0 %v913
    %v5452 = vpop.f32.mrf.mxu0
    %v5453 = vadd.f32 %v5380, %v5452
    %v5454 = vpop.f32.mrf.mxu0
    %v5455 = vadd.f32 %v5382, %v5454
    %5456 = vmatmul.bf16.gmra.mxu0 %v921
    %v5457 = vpop.f32.mrf.mxu0
    %v5458 = vadd.f32 %v5385, %v5457
    %v5459 = vpop.f32.mrf.mxu0
    %v5460 = vadd.f32 %v5387, %v5459
    %5461 = vmatmul.bf16.gmra.mxu0 %v929
    %v5462 = vpop.f32.mrf.mxu0
    %v5463 = vadd.f32 %v5390, %v5462
    %v5464 = vpop.f32.mrf.mxu0
    %v5465 = vadd.f32 %v5392, %v5464
    %5466 = vmatmul.bf16.gmra.mxu0 %v937
    %v5467 = vpop.f32.mrf.mxu0
    %v5468 = vadd.f32 %v5395, %v5467
    %v5469 = vpop.f32.mrf.mxu0
    %v5470 = vadd.f32 %v5397, %v5469
    %5471 = vmatmul.bf16.gmra.mxu0 %v945
    %v5472 = vpop.f32.mrf.mxu0
    %v5473 = vadd.f32 %v5400, %v5472
    %v5474 = vpop.f32.mrf.mxu0
    %v5475 = vadd.f32 %v5402, %v5474
    %5476 = vmatmul.bf16.gmra.mxu0 %v953
    %v5477 = vpop.f32.mrf.mxu0
    %v5478 = vadd.f32 %v5405, %v5477
    %v5479 = vpop.f32.mrf.mxu0
    %v5480 = vadd.f32 %v5407, %v5479
    %5481 = vmatmul.bf16.gmra.mxu0 %v961
    %v5482 = vpop.f32.mrf.mxu0
    %v5483 = vadd.f32 %v5410, %v5482
    %v5484 = vpop.f32.mrf.mxu0
    %v5485 = vadd.f32 %v5412, %v5484
    %5486 = vmatmul.bf16.gmra.mxu0 %v969
    %v5487 = vpop.f32.mrf.mxu0
    %v5488 = vadd.f32 %v5415, %v5487
    %v5489 = vpop.f32.mrf.mxu0
    %v5490 = vadd.f32 %v5417, %v5489
    %5491 = vmatmul.bf16.gmra.mxu0 %v977
    %v5492 = vpop.f32.mrf.mxu0
    %v5493 = vadd.f32 %v5420, %v5492
    %v5494 = vpop.f32.mrf.mxu0
    %v5495 = vadd.f32 %v5422, %v5494
    %5496 = vmatmul.bf16.gmra.mxu0 %v985
    %v5497 = vpop.f32.mrf.mxu0
    %v5498 = vadd.f32 %v5425, %v5497
    %v5499 = vpop.f32.mrf.mxu0
    %v5500 = vadd.f32 %v5427, %v5499
    %5501 = vmatmul.bf16.gmra.mxu0 %v993
    %v5502 = vpop.f32.mrf.mxu0
    %v5503 = vadd.f32 %v5430, %v5502
    %v5504 = vpop.f32.mrf.mxu0
    %5505 = vdwg.mxu0
    %5506 = vmatpush.bf16.msra.mxu0 %v2398
    %5507 = vmatpush.bf16.msra.mxu0 %v2392
    %5508 = vmatpush.bf16.msra.mxu0 %v2386
    %5509 = vmatpush.bf16.msra.mxu0 %v2380
    %5510 = vmatpush.bf16.msra.mxu0 %v2374
    %5511 = vmatpush.bf16.msra.mxu0 %v2368
    %5512 = vmatpush.bf16.msra.mxu0 %v2362
    %5513 = vmatpush.bf16.msra.mxu0 %v2356
    %5514 = vmatmul.bf16.gmra.mxu0 %v898
    %v5515 = vpop.f32.mrf.mxu0
    %v5516 = vadd.f32 %v5443, %v5515
    %v5517 = vpop.f32.mrf.mxu0
    %v5518 = vadd.f32 %v5445, %v5517
    %5519 = vmatmul.bf16.gmra.mxu0 %v906
    %v5520 = vpop.f32.mrf.mxu0
    %v5521 = vadd.f32 %v5448, %v5520
    %v5522 = vpop.f32.mrf.mxu0
    %v5523 = vadd.f32 %v5450, %v5522
    %5524 = vmatmul.bf16.gmra.mxu0 %v914
    %v5525 = vpop.f32.mrf.mxu0
    %v5526 = vadd.f32 %v5453, %v5525
    %v5527 = vpop.f32.mrf.mxu0
    %v5528 = vadd.f32 %v5455, %v5527
    %5529 = vmatmul.bf16.gmra.mxu0 %v922
    %v5530 = vpop.f32.mrf.mxu0
    %v5531 = vadd.f32 %v5458, %v5530
    %v5532 = vpop.f32.mrf.mxu0
    %v5533 = vadd.f32 %v5460, %v5532
    %5534 = vmatmul.bf16.gmra.mxu0 %v930
    %v5535 = vpop.f32.mrf.mxu0
    %v5536 = vadd.f32 %v5463, %v5535
    %v5537 = vpop.f32.mrf.mxu0
    %v5538 = vadd.f32 %v5465, %v5537
    %5539 = vmatmul.bf16.gmra.mxu0 %v938
    %v5540 = vpop.f32.mrf.mxu0
    %v5541 = vadd.f32 %v5468, %v5540
    %v5542 = vpop.f32.mrf.mxu0
    %v5543 = vadd.f32 %v5470, %v5542
    %5544 = vmatmul.bf16.gmra.mxu0 %v946
    %v5545 = vpop.f32.mrf.mxu0
    %v5546 = vadd.f32 %v5473, %v5545
    %v5547 = vpop.f32.mrf.mxu0
    %v5548 = vadd.f32 %v5475, %v5547
    %5549 = vmatmul.bf16.gmra.mxu0 %v954
    %v5550 = vpop.f32.mrf.mxu0
    %v5551 = vadd.f32 %v5478, %v5550
    %v5552 = vpop.f32.mrf.mxu0
    %v5553 = vadd.f32 %v5480, %v5552
    %5554 = vmatmul.bf16.gmra.mxu0 %v962
    %v5555 = vpop.f32.mrf.mxu0
    %v5556 = vadd.f32 %v5483, %v5555
    %v5557 = vpop.f32.mrf.mxu0
    %v5558 = vadd.f32 %v5485, %v5557
    %5559 = vmatmul.bf16.gmra.mxu0 %v970
    %v5560 = vpop.f32.mrf.mxu0
    %v5561 = vadd.f32 %v5488, %v5560
    %v5562 = vpop.f32.mrf.mxu0
    %v5563 = vadd.f32 %v5490, %v5562
    %5564 = vmatmul.bf16.gmra.mxu0 %v978
    %v5565 = vpop.f32.mrf.mxu0
    %v5566 = vadd.f32 %v5493, %v5565
    %v5567 = vpop.f32.mrf.mxu0
    %v5568 = vadd.f32 %v5495, %v5567
    %5569 = vmatmul.bf16.gmra.mxu0 %v986
    %v5570 = vpop.f32.mrf.mxu0
    %v5571 = vadd.f32 %v5498, %v5570
    %v5572 = vpop.f32.mrf.mxu0
    %v5573 = vadd.f32 %v5500, %v5572
    %5574 = vmatmul.bf16.gmra.mxu0 %v994
    %v5575 = vpop.f32.mrf.mxu0
    %v5576 = vadd.f32 %v5503, %v5575
    %v5577 = vpop.f32.mrf.mxu0
    %5578 = vdwg.mxu0
    %5579 = vmatpush.bf16.msra.mxu0 %v2446
    %5580 = vmatpush.bf16.msra.mxu0 %v2440
    %5581 = vmatpush.bf16.msra.mxu0 %v2434
    %5582 = vmatpush.bf16.msra.mxu0 %v2428
    %5583 = vmatpush.bf16.msra.mxu0 %v2422
    %5584 = vmatpush.bf16.msra.mxu0 %v2416
    %5585 = vmatpush.bf16.msra.mxu0 %v2410
    %5586 = vmatpush.bf16.msra.mxu0 %v2404
    %5587 = vmatmul.bf16.gmra.mxu0 %v899
    %v5588 = vpop.f32.mrf.mxu0
    %v5589 = vadd.f32 %v5516, %v5588
    %v5590 = vpop.f32.mrf.mxu0
    %v5591 = vadd.f32 %v5518, %v5590
    %5592 = vmatmul.bf16.gmra.mxu0 %v907
    %v5593 = vpop.f32.mrf.mxu0
    %v5594 = vadd.f32 %v5521, %v5593
    %v5595 = vpop.f32.mrf.mxu0
    %v5596 = vadd.f32 %v5523, %v5595
    %5597 = vmatmul.bf16.gmra.mxu0 %v915
    %v5598 = vpop.f32.mrf.mxu0
    %v5599 = vadd.f32 %v5526, %v5598
    %v5600 = vpop.f32.mrf.mxu0
    %v5601 = vadd.f32 %v5528, %v5600
    %5602 = vmatmul.bf16.gmra.mxu0 %v923
    %v5603 = vpop.f32.mrf.mxu0
    %v5604 = vadd.f32 %v5531, %v5603
    %v5605 = vpop.f32.mrf.mxu0
    %v5606 = vadd.f32 %v5533, %v5605
    %5607 = vmatmul.bf16.gmra.mxu0 %v931
    %v5608 = vpop.f32.mrf.mxu0
    %v5609 = vadd.f32 %v5536, %v5608
    %v5610 = vpop.f32.mrf.mxu0
    %v5611 = vadd.f32 %v5538, %v5610
    %5612 = vmatmul.bf16.gmra.mxu0 %v939
    %v5613 = vpop.f32.mrf.mxu0
    %v5614 = vadd.f32 %v5541, %v5613
    %v5615 = vpop.f32.mrf.mxu0
    %v5616 = vadd.f32 %v5543, %v5615
    %5617 = vmatmul.bf16.gmra.mxu0 %v947
    %v5618 = vpop.f32.mrf.mxu0
    %v5619 = vadd.f32 %v5546, %v5618
    %v5620 = vpop.f32.mrf.mxu0
    %v5621 = vadd.f32 %v5548, %v5620
    %5622 = vmatmul.bf16.gmra.mxu0 %v955
    %v5623 = vpop.f32.mrf.mxu0
    %v5624 = vadd.f32 %v5551, %v5623
    %v5625 = vpop.f32.mrf.mxu0
    %v5626 = vadd.f32 %v5553, %v5625
    %5627 = vmatmul.bf16.gmra.mxu0 %v963
    %v5628 = vpop.f32.mrf.mxu0
    %v5629 = vadd.f32 %v5556, %v5628
    %v5630 = vpop.f32.mrf.mxu0
    %v5631 = vadd.f32 %v5558, %v5630
    %5632 = vmatmul.bf16.gmra.mxu0 %v971
    %v5633 = vpop.f32.mrf.mxu0
    %v5634 = vadd.f32 %v5561, %v5633
    %v5635 = vpop.f32.mrf.mxu0
    %v5636 = vadd.f32 %v5563, %v5635
    %5637 = vmatmul.bf16.gmra.mxu0 %v979
    %v5638 = vpop.f32.mrf.mxu0
    %v5639 = vadd.f32 %v5566, %v5638
    %v5640 = vpop.f32.mrf.mxu0
    %v5641 = vadd.f32 %v5568, %v5640
    %5642 = vmatmul.bf16.gmra.mxu0 %v987
    %v5643 = vpop.f32.mrf.mxu0
    %v5644 = vadd.f32 %v5571, %v5643
    %v5645 = vpop.f32.mrf.mxu0
    %v5646 = vadd.f32 %v5573, %v5645
    %5647 = vmatmul.bf16.gmra.mxu0 %v995
    %v5648 = vpop.f32.mrf.mxu0
    %v5649 = vadd.f32 %v5576, %v5648
    %v5650 = vpop.f32.mrf.mxu0
    %5651 = vdwg.mxu0
    %5652 = vmatpush.bf16.msra.mxu0 %v2494
    %5653 = vmatpush.bf16.msra.mxu0 %v2488
    %5654 = vmatpush.bf16.msra.mxu0 %v2482
    %5655 = vmatpush.bf16.msra.mxu0 %v2476
    %5656 = vmatpush.bf16.msra.mxu0 %v2470
    %5657 = vmatpush.bf16.msra.mxu0 %v2464
    %5658 = vmatpush.bf16.msra.mxu0 %v2458
    %5659 = vmatpush.bf16.msra.mxu0 %v2452
    %5660 = vmatmul.bf16.gmra.mxu0 %v900
    %v5661 = vpop.f32.mrf.mxu0
    %v5662 = vadd.f32 %v5589, %v5661
    %v5663 = vpop.f32.mrf.mxu0
    %v5664 = vadd.f32 %v5591, %v5663
    %5665 = vmatmul.bf16.gmra.mxu0 %v908
    %v5666 = vpop.f32.mrf.mxu0
    %v5667 = vadd.f32 %v5594, %v5666
    %v5668 = vpop.f32.mrf.mxu0
    %v5669 = vadd.f32 %v5596, %v5668
    %5670 = vmatmul.bf16.gmra.mxu0 %v916
    %v5671 = vpop.f32.mrf.mxu0
    %v5672 = vadd.f32 %v5599, %v5671
    %v5673 = vpop.f32.mrf.mxu0
    %v5674 = vadd.f32 %v5601, %v5673
    %5675 = vmatmul.bf16.gmra.mxu0 %v924
    %v5676 = vpop.f32.mrf.mxu0
    %v5677 = vadd.f32 %v5604, %v5676
    %v5678 = vpop.f32.mrf.mxu0
    %v5679 = vadd.f32 %v5606, %v5678
    %5680 = vmatmul.bf16.gmra.mxu0 %v932
    %v5681 = vpop.f32.mrf.mxu0
    %v5682 = vadd.f32 %v5609, %v5681
    %v5683 = vpop.f32.mrf.mxu0
    %v5684 = vadd.f32 %v5611, %v5683
    %5685 = vmatmul.bf16.gmra.mxu0 %v940
    %v5686 = vpop.f32.mrf.mxu0
    %v5687 = vadd.f32 %v5614, %v5686
    %v5688 = vpop.f32.mrf.mxu0
    %v5689 = vadd.f32 %v5616, %v5688
    %5690 = vmatmul.bf16.gmra.mxu0 %v948
    %v5691 = vpop.f32.mrf.mxu0
    %v5692 = vadd.f32 %v5619, %v5691
    %v5693 = vpop.f32.mrf.mxu0
    %v5694 = vadd.f32 %v5621, %v5693
    %5695 = vmatmul.bf16.gmra.mxu0 %v956
    %v5696 = vpop.f32.mrf.mxu0
    %v5697 = vadd.f32 %v5624, %v5696
    %v5698 = vpop.f32.mrf.mxu0
    %v5699 = vadd.f32 %v5626, %v5698
    %5700 = vmatmul.bf16.gmra.mxu0 %v964
    %v5701 = vpop.f32.mrf.mxu0
    %v5702 = vadd.f32 %v5629, %v5701
    %v5703 = vpop.f32.mrf.mxu0
    %v5704 = vadd.f32 %v5631, %v5703
    %5705 = vmatmul.bf16.gmra.mxu0 %v972
    %v5706 = vpop.f32.mrf.mxu0
    %v5707 = vadd.f32 %v5634, %v5706
    %v5708 = vpop.f32.mrf.mxu0
    %v5709 = vadd.f32 %v5636, %v5708
    %5710 = vmatmul.bf16.gmra.mxu0 %v980
    %v5711 = vpop.f32.mrf.mxu0
    %v5712 = vadd.f32 %v5639, %v5711
    %v5713 = vpop.f32.mrf.mxu0
    %v5714 = vadd.f32 %v5641, %v5713
    %5715 = vmatmul.bf16.gmra.mxu0 %v988
    %v5716 = vpop.f32.mrf.mxu0
    %v5717 = vadd.f32 %v5644, %v5716
    %v5718 = vpop.f32.mrf.mxu0
    %v5719 = vadd.f32 %v5646, %v5718
    %5720 = vmatmul.bf16.gmra.mxu0 %v996
    %v5721 = vpop.f32.mrf.mxu0
    %v5722 = vadd.f32 %v5649, %v5721
    %v5723 = vpop.f32.mrf.mxu0
    %5724 = vdwg.mxu0
    %5725 = vmatpush.bf16.msra.mxu0 %v2542
    %5726 = vmatpush.bf16.msra.mxu0 %v2536
    %5727 = vmatpush.bf16.msra.mxu0 %v2530
    %5728 = vmatpush.bf16.msra.mxu0 %v2524
    %5729 = vmatpush.bf16.msra.mxu0 %v2518
    %5730 = vmatpush.bf16.msra.mxu0 %v2512
    %5731 = vmatpush.bf16.msra.mxu0 %v2506
    %5732 = vmatpush.bf16.msra.mxu0 %v2500
    %5733 = vmatmul.bf16.gmra.mxu0 %v901
    %v5734 = vpop.f32.mrf.mxu0
    %v5735 = vadd.f32 %v5662, %v5734
    %v5736 = vpop.f32.mrf.mxu0
    %v5737 = vadd.f32 %v5664, %v5736
    %5738 = vmatmul.bf16.gmra.mxu0 %v909
    %v5739 = vpop.f32.mrf.mxu0
    %v5740 = vadd.f32 %v5667, %v5739
    %v5741 = vpop.f32.mrf.mxu0
    %v5742 = vadd.f32 %v5669, %v5741
    %5743 = vmatmul.bf16.gmra.mxu0 %v917
    %v5744 = vpop.f32.mrf.mxu0
    %v5745 = vadd.f32 %v5672, %v5744
    %v5746 = vpop.f32.mrf.mxu0
    %v5747 = vadd.f32 %v5674, %v5746
    %5748 = vmatmul.bf16.gmra.mxu0 %v925
    %v5749 = vpop.f32.mrf.mxu0
    %v5750 = vadd.f32 %v5677, %v5749
    %v5751 = vpop.f32.mrf.mxu0
    %v5752 = vadd.f32 %v5679, %v5751
    %5753 = vmatmul.bf16.gmra.mxu0 %v933
    %v5754 = vpop.f32.mrf.mxu0
    %v5755 = vadd.f32 %v5682, %v5754
    %v5756 = vpop.f32.mrf.mxu0
    %v5757 = vadd.f32 %v5684, %v5756
    %5758 = vmatmul.bf16.gmra.mxu0 %v941
    %v5759 = vpop.f32.mrf.mxu0
    %v5760 = vadd.f32 %v5687, %v5759
    %v5761 = vpop.f32.mrf.mxu0
    %v5762 = vadd.f32 %v5689, %v5761
    %5763 = vmatmul.bf16.gmra.mxu0 %v949
    %v5764 = vpop.f32.mrf.mxu0
    %v5765 = vadd.f32 %v5692, %v5764
    %v5766 = vpop.f32.mrf.mxu0
    %v5767 = vadd.f32 %v5694, %v5766
    %5768 = vmatmul.bf16.gmra.mxu0 %v957
    %v5769 = vpop.f32.mrf.mxu0
    %v5770 = vadd.f32 %v5697, %v5769
    %v5771 = vpop.f32.mrf.mxu0
    %v5772 = vadd.f32 %v5699, %v5771
    %5773 = vmatmul.bf16.gmra.mxu0 %v965
    %v5774 = vpop.f32.mrf.mxu0
    %v5775 = vadd.f32 %v5702, %v5774
    %v5776 = vpop.f32.mrf.mxu0
    %v5777 = vadd.f32 %v5704, %v5776
    %5778 = vmatmul.bf16.gmra.mxu0 %v973
    %v5779 = vpop.f32.mrf.mxu0
    %v5780 = vadd.f32 %v5707, %v5779
    %v5781 = vpop.f32.mrf.mxu0
    %v5782 = vadd.f32 %v5709, %v5781
    %5783 = vmatmul.bf16.gmra.mxu0 %v981
    %v5784 = vpop.f32.mrf.mxu0
    %v5785 = vadd.f32 %v5712, %v5784
    %v5786 = vpop.f32.mrf.mxu0
    %v5787 = vadd.f32 %v5714, %v5786
    %5788 = vmatmul.bf16.gmra.mxu0 %v989
    %v5789 = vpop.f32.mrf.mxu0
    %v5790 = vadd.f32 %v5717, %v5789
    %v5791 = vpop.f32.mrf.mxu0
    %v5792 = vadd.f32 %v5719, %v5791
    %5793 = vmatmul.bf16.gmra.mxu0 %v997
    %v5794 = vpop.f32.mrf.mxu0
    %v5795 = vadd.f32 %v5722, %v5794
    %v5796 = vpop.f32.mrf.mxu0
    %5797 = vdwg.mxu0
    %5798 = vmatpush.bf16.msra.mxu0 %v2590
    %5799 = vmatpush.bf16.msra.mxu0 %v2584
    %5800 = vmatpush.bf16.msra.mxu0 %v2578
    %5801 = vmatpush.bf16.msra.mxu0 %v2572
    %5802 = vmatpush.bf16.msra.mxu0 %v2566
    %5803 = vmatpush.bf16.msra.mxu0 %v2560
    %5804 = vmatpush.bf16.msra.mxu0 %v2554
    %5805 = vmatpush.bf16.msra.mxu0 %v2548
    %5806 = vmatmul.bf16.gmra.mxu0 %v902
    %v5807 = vpop.f32.mrf.mxu0
    %v5808 = vadd.f32 %v5735, %v5807
    %v5809 = vpop.f32.mrf.mxu0
    %v5810 = vadd.f32 %v5737, %v5809
    %5811 = vmatmul.bf16.gmra.mxu0 %v910
    %v5812 = vpop.f32.mrf.mxu0
    %v5813 = vadd.f32 %v5740, %v5812
    %v5814 = vpop.f32.mrf.mxu0
    %v5815 = vadd.f32 %v5742, %v5814
    %5816 = vmatmul.bf16.gmra.mxu0 %v918
    %v5817 = vpop.f32.mrf.mxu0
    %v5818 = vadd.f32 %v5745, %v5817
    %v5819 = vpop.f32.mrf.mxu0
    %v5820 = vadd.f32 %v5747, %v5819
    %5821 = vmatmul.bf16.gmra.mxu0 %v926
    %v5822 = vpop.f32.mrf.mxu0
    %v5823 = vadd.f32 %v5750, %v5822
    %v5824 = vpop.f32.mrf.mxu0
    %v5825 = vadd.f32 %v5752, %v5824
    %5826 = vmatmul.bf16.gmra.mxu0 %v934
    %v5827 = vpop.f32.mrf.mxu0
    %v5828 = vadd.f32 %v5755, %v5827
    %v5829 = vpop.f32.mrf.mxu0
    %v5830 = vadd.f32 %v5757, %v5829
    %5831 = vmatmul.bf16.gmra.mxu0 %v942
    %v5832 = vpop.f32.mrf.mxu0
    %v5833 = vadd.f32 %v5760, %v5832
    %v5834 = vpop.f32.mrf.mxu0
    %v5835 = vadd.f32 %v5762, %v5834
    %5836 = vmatmul.bf16.gmra.mxu0 %v950
    %v5837 = vpop.f32.mrf.mxu0
    %v5838 = vadd.f32 %v5765, %v5837
    %v5839 = vpop.f32.mrf.mxu0
    %v5840 = vadd.f32 %v5767, %v5839
    %5841 = vmatmul.bf16.gmra.mxu0 %v958
    %v5842 = vpop.f32.mrf.mxu0
    %v5843 = vadd.f32 %v5770, %v5842
    %v5844 = vpop.f32.mrf.mxu0
    %v5845 = vadd.f32 %v5772, %v5844
    %5846 = vmatmul.bf16.gmra.mxu0 %v966
    %v5847 = vpop.f32.mrf.mxu0
    %v5848 = vadd.f32 %v5775, %v5847
    %v5849 = vpop.f32.mrf.mxu0
    %v5850 = vadd.f32 %v5777, %v5849
    %5851 = vmatmul.bf16.gmra.mxu0 %v974
    %v5852 = vpop.f32.mrf.mxu0
    %v5853 = vadd.f32 %v5780, %v5852
    %v5854 = vpop.f32.mrf.mxu0
    %v5855 = vadd.f32 %v5782, %v5854
    %5856 = vmatmul.bf16.gmra.mxu0 %v982
    %v5857 = vpop.f32.mrf.mxu0
    %v5858 = vadd.f32 %v5785, %v5857
    %v5859 = vpop.f32.mrf.mxu0
    %v5860 = vadd.f32 %v5787, %v5859
    %5861 = vmatmul.bf16.gmra.mxu0 %v990
    %v5862 = vpop.f32.mrf.mxu0
    %v5863 = vadd.f32 %v5790, %v5862
    %v5864 = vpop.f32.mrf.mxu0
    %v5865 = vadd.f32 %v5792, %v5864
    %5866 = vmatmul.bf16.gmra.mxu0 %v998
    %v5867 = vpop.f32.mrf.mxu0
    %v5868 = vadd.f32 %v5795, %v5867
    %v5869 = vpop.f32.mrf.mxu0
    %5870 = vdwg.mxu0
    %5871 = vmatpush.bf16.msra.mxu0 %v2638
    %5872 = vmatpush.bf16.msra.mxu0 %v2632
    %5873 = vmatpush.bf16.msra.mxu0 %v2626
    %5874 = vmatpush.bf16.msra.mxu0 %v2620
    %5875 = vmatpush.bf16.msra.mxu0 %v2614
    %5876 = vmatpush.bf16.msra.mxu0 %v2608
    %5877 = vmatpush.bf16.msra.mxu0 %v2602
    %5878 = vmatpush.bf16.msra.mxu0 %v2596
    %5879 = vmatmul.bf16.gmra.mxu0 %v903
    %v5880 = vpop.f32.mrf.mxu0
    %v5881 = vadd.f32 %v5808, %v5880
    %v5882 = vpop.f32.mrf.mxu0
    %v5883 = vadd.f32 %v5810, %v5882
    %5884 = vmatmul.bf16.gmra.mxu0 %v911
    %v5885 = vpop.f32.mrf.mxu0
    %v5886 = vadd.f32 %v5813, %v5885
    %v5887 = vpop.f32.mrf.mxu0
    %v5888 = vadd.f32 %v5815, %v5887
    %5889 = vmatmul.bf16.gmra.mxu0 %v919
    %v5890 = vpop.f32.mrf.mxu0
    %v5891 = vadd.f32 %v5818, %v5890
    %v5892 = vpop.f32.mrf.mxu0
    %v5893 = vadd.f32 %v5820, %v5892
    %5894 = vmatmul.bf16.gmra.mxu0 %v927
    %v5895 = vpop.f32.mrf.mxu0
    %v5896 = vadd.f32 %v5823, %v5895
    %v5897 = vpop.f32.mrf.mxu0
    %v5898 = vadd.f32 %v5825, %v5897
    %5899 = vmatmul.bf16.gmra.mxu0 %v935
    %v5900 = vpop.f32.mrf.mxu0
    %v5901 = vadd.f32 %v5828, %v5900
    %v5902 = vpop.f32.mrf.mxu0
    %v5903 = vadd.f32 %v5830, %v5902
    %5904 = vmatmul.bf16.gmra.mxu0 %v943
    %v5905 = vpop.f32.mrf.mxu0
    %v5906 = vadd.f32 %v5833, %v5905
    %v5907 = vpop.f32.mrf.mxu0
    %v5908 = vadd.f32 %v5835, %v5907
    %5909 = vmatmul.bf16.gmra.mxu0 %v951
    %v5910 = vpop.f32.mrf.mxu0
    %v5911 = vadd.f32 %v5838, %v5910
    %v5912 = vpop.f32.mrf.mxu0
    %v5913 = vadd.f32 %v5840, %v5912
    %5914 = vmatmul.bf16.gmra.mxu0 %v959
    %v5915 = vpop.f32.mrf.mxu0
    %v5916 = vadd.f32 %v5843, %v5915
    %v5917 = vpop.f32.mrf.mxu0
    %v5918 = vadd.f32 %v5845, %v5917
    %5919 = vmatmul.bf16.gmra.mxu0 %v967
    %v5920 = vpop.f32.mrf.mxu0
    %v5921 = vadd.f32 %v5848, %v5920
    %v5922 = vpop.f32.mrf.mxu0
    %v5923 = vadd.f32 %v5850, %v5922
    %5924 = vmatmul.bf16.gmra.mxu0 %v975
    %v5925 = vpop.f32.mrf.mxu0
    %v5926 = vadd.f32 %v5853, %v5925
    %v5927 = vpop.f32.mrf.mxu0
    %v5928 = vadd.f32 %v5855, %v5927
    %5929 = vmatmul.bf16.gmra.mxu0 %v983
    %v5930 = vpop.f32.mrf.mxu0
    %v5931 = vadd.f32 %v5858, %v5930
    %v5932 = vpop.f32.mrf.mxu0
    %v5933 = vadd.f32 %v5860, %v5932
    %5934 = vmatmul.bf16.gmra.mxu0 %v991
    %v5935 = vpop.f32.mrf.mxu0
    %v5936 = vadd.f32 %v5863, %v5935
    %v5937 = vpop.f32.mrf.mxu0
    %v5938 = vadd.f32 %v5865, %v5937
    %5939 = vmatmul.bf16.gmra.mxu0 %v999
    %v5940 = vpop.f32.mrf.mxu0
    %v5941 = vadd.f32 %v5868, %v5940
    %v5942 = vpop.f32.mrf.mxu0
    %5943 = vdwg.mxu0
    %5944 = vmatpush.bf16.msra.mxu0 %v2303
    %5945 = vmatpush.bf16.msra.mxu0 %v2297
    %5946 = vmatpush.bf16.msra.mxu0 %v2291
    %5947 = vmatpush.bf16.msra.mxu0 %v2285
    %5948 = vmatpush.bf16.msra.mxu0 %v2279
    %5949 = vmatpush.bf16.msra.mxu0 %v2273
    %5950 = vmatpush.bf16.msra.mxu0 %v2267
    %5951 = vmatpush.bf16.msra.mxu0 %v2261
    %5952 = vmatmul.bf16.gmra.mxu0 %v896
    %v5953 = vpop.f32.mrf.mxu0
    %v5954 = vadd.f32 0.0, %v5953
    %v5955 = vpop.f32.mrf.mxu0
    %v5956 = vadd.f32 0.0, %v5955
    %5957 = vmatmul.bf16.gmra.mxu0 %v904
    %v5958 = vpop.f32.mrf.mxu0
    %v5959 = vadd.f32 0.0, %v5958
    %v5960 = vpop.f32.mrf.mxu0
    %v5961 = vadd.f32 0.0, %v5960
    %5962 = vmatmul.bf16.gmra.mxu0 %v912
    %v5963 = vpop.f32.mrf.mxu0
    %v5964 = vadd.f32 0.0, %v5963
    %v5965 = vpop.f32.mrf.mxu0
    %v5966 = vadd.f32 0.0, %v5965
    %5967 = vmatmul.bf16.gmra.mxu0 %v920
    %v5968 = vpop.f32.mrf.mxu0
    %v5969 = vadd.f32 0.0, %v5968
    %v5970 = vpop.f32.mrf.mxu0
    %v5971 = vadd.f32 0.0, %v5970
    %5972 = vmatmul.bf16.gmra.mxu0 %v928
    %v5973 = vpop.f32.mrf.mxu0
    %v5974 = vadd.f32 0.0, %v5973
    %v5975 = vpop.f32.mrf.mxu0
    %v5976 = vadd.f32 0.0, %v5975
    %5977 = vmatmul.bf16.gmra.mxu0 %v936
    %v5978 = vpop.f32.mrf.mxu0
    %v5979 = vadd.f32 0.0, %v5978
    %v5980 = vpop.f32.mrf.mxu0
    %v5981 = vadd.f32 0.0, %v5980
    %5982 = vmatmul.bf16.gmra.mxu0 %v944
    %v5983 = vpop.f32.mrf.mxu0
    %v5984 = vadd.f32 0.0, %v5983
    %v5985 = vpop.f32.mrf.mxu0
    %v5986 = vadd.f32 0.0, %v5985
    %5987 = vmatmul.bf16.gmra.mxu0 %v952
    %v5988 = vpop.f32.mrf.mxu0
    %v5989 = vadd.f32 0.0, %v5988
    %v5990 = vpop.f32.mrf.mxu0
    %v5991 = vadd.f32 0.0, %v5990
    %5992 = vmatmul.bf16.gmra.mxu0 %v960
    %v5993 = vpop.f32.mrf.mxu0
    %v5994 = vadd.f32 0.0, %v5993
    %v5995 = vpop.f32.mrf.mxu0
    %v5996 = vadd.f32 0.0, %v5995
    %5997 = vmatmul.bf16.gmra.mxu0 %v968
    %v5998 = vpop.f32.mrf.mxu0
    %v5999 = vadd.f32 0.0, %v5998
    %v6000 = vpop.f32.mrf.mxu0
    %v6001 = vadd.f32 0.0, %v6000
    %6002 = vmatmul.bf16.gmra.mxu0 %v976
    %v6003 = vpop.f32.mrf.mxu0
    %v6004 = vadd.f32 0.0, %v6003
    %v6005 = vpop.f32.mrf.mxu0
    %v6006 = vadd.f32 0.0, %v6005
    %6007 = vmatmul.bf16.gmra.mxu0 %v984
    %v6008 = vpop.f32.mrf.mxu0
    %v6009 = vadd.f32 0.0, %v6008
    %v6010 = vpop.f32.mrf.mxu0
    %v6011 = vadd.f32 0.0, %v6010
    %6012 = vmatmul.bf16.gmra.mxu0 %v992
    %v6013 = vpop.f32.mrf.mxu0
    %v6014 = vadd.f32 0.0, %v6013
    %v6015 = vpop.f32.mrf.mxu0
    %6016 = vdwg.mxu0
    %6017 = vmatpush.bf16.msra.mxu0 %v2351
    %6018 = vmatpush.bf16.msra.mxu0 %v2345
    %6019 = vmatpush.bf16.msra.mxu0 %v2339
    %6020 = vmatpush.bf16.msra.mxu0 %v2333
    %6021 = vmatpush.bf16.msra.mxu0 %v2327
    %6022 = vmatpush.bf16.msra.mxu0 %v2321
    %6023 = vmatpush.bf16.msra.mxu0 %v2315
    %6024 = vmatpush.bf16.msra.mxu0 %v2309
    %6025 = vmatmul.bf16.gmra.mxu0 %v897
    %v6026 = vpop.f32.mrf.mxu0
    %v6027 = vadd.f32 %v5954, %v6026
    %v6028 = vpop.f32.mrf.mxu0
    %v6029 = vadd.f32 %v5956, %v6028
    %6030 = vmatmul.bf16.gmra.mxu0 %v905
    %v6031 = vpop.f32.mrf.mxu0
    %v6032 = vadd.f32 %v5959, %v6031
    %v6033 = vpop.f32.mrf.mxu0
    %v6034 = vadd.f32 %v5961, %v6033
    %6035 = vmatmul.bf16.gmra.mxu0 %v913
    %v6036 = vpop.f32.mrf.mxu0
    %v6037 = vadd.f32 %v5964, %v6036
    %v6038 = vpop.f32.mrf.mxu0
    %v6039 = vadd.f32 %v5966, %v6038
    %6040 = vmatmul.bf16.gmra.mxu0 %v921
    %v6041 = vpop.f32.mrf.mxu0
    %v6042 = vadd.f32 %v5969, %v6041
    %v6043 = vpop.f32.mrf.mxu0
    %v6044 = vadd.f32 %v5971, %v6043
    %6045 = vmatmul.bf16.gmra.mxu0 %v929
    %v6046 = vpop.f32.mrf.mxu0
    %v6047 = vadd.f32 %v5974, %v6046
    %v6048 = vpop.f32.mrf.mxu0
    %v6049 = vadd.f32 %v5976, %v6048
    %6050 = vmatmul.bf16.gmra.mxu0 %v937
    %v6051 = vpop.f32.mrf.mxu0
    %v6052 = vadd.f32 %v5979, %v6051
    %v6053 = vpop.f32.mrf.mxu0
    %v6054 = vadd.f32 %v5981, %v6053
    %6055 = vmatmul.bf16.gmra.mxu0 %v945
    %v6056 = vpop.f32.mrf.mxu0
    %v6057 = vadd.f32 %v5984, %v6056
    %v6058 = vpop.f32.mrf.mxu0
    %v6059 = vadd.f32 %v5986, %v6058
    %6060 = vmatmul.bf16.gmra.mxu0 %v953
    %v6061 = vpop.f32.mrf.mxu0
    %v6062 = vadd.f32 %v5989, %v6061
    %v6063 = vpop.f32.mrf.mxu0
    %v6064 = vadd.f32 %v5991, %v6063
    %6065 = vmatmul.bf16.gmra.mxu0 %v961
    %v6066 = vpop.f32.mrf.mxu0
    %v6067 = vadd.f32 %v5994, %v6066
    %v6068 = vpop.f32.mrf.mxu0
    %v6069 = vadd.f32 %v5996, %v6068
    %6070 = vmatmul.bf16.gmra.mxu0 %v969
    %v6071 = vpop.f32.mrf.mxu0
    %v6072 = vadd.f32 %v5999, %v6071
    %v6073 = vpop.f32.mrf.mxu0
    %v6074 = vadd.f32 %v6001, %v6073
    %6075 = vmatmul.bf16.gmra.mxu0 %v977
    %v6076 = vpop.f32.mrf.mxu0
    %v6077 = vadd.f32 %v6004, %v6076
    %v6078 = vpop.f32.mrf.mxu0
    %v6079 = vadd.f32 %v6006, %v6078
    %6080 = vmatmul.bf16.gmra.mxu0 %v985
    %v6081 = vpop.f32.mrf.mxu0
    %v6082 = vadd.f32 %v6009, %v6081
    %v6083 = vpop.f32.mrf.mxu0
    %v6084 = vadd.f32 %v6011, %v6083
    %6085 = vmatmul.bf16.gmra.mxu0 %v993
    %v6086 = vpop.f32.mrf.mxu0
    %v6087 = vadd.f32 %v6014, %v6086
    %v6088 = vpop.f32.mrf.mxu0
    %6089 = vdwg.mxu0
    %6090 = vmatpush.bf16.msra.mxu0 %v2399
    %6091 = vmatpush.bf16.msra.mxu0 %v2393
    %6092 = vmatpush.bf16.msra.mxu0 %v2387
    %6093 = vmatpush.bf16.msra.mxu0 %v2381
    %6094 = vmatpush.bf16.msra.mxu0 %v2375
    %6095 = vmatpush.bf16.msra.mxu0 %v2369
    %6096 = vmatpush.bf16.msra.mxu0 %v2363
    %6097 = vmatpush.bf16.msra.mxu0 %v2357
    %6098 = vmatmul.bf16.gmra.mxu0 %v898
    %v6099 = vpop.f32.mrf.mxu0
    %v6100 = vadd.f32 %v6027, %v6099
    %v6101 = vpop.f32.mrf.mxu0
    %v6102 = vadd.f32 %v6029, %v6101
    %6103 = vmatmul.bf16.gmra.mxu0 %v906
    %v6104 = vpop.f32.mrf.mxu0
    %v6105 = vadd.f32 %v6032, %v6104
    %v6106 = vpop.f32.mrf.mxu0
    %v6107 = vadd.f32 %v6034, %v6106
    %6108 = vmatmul.bf16.gmra.mxu0 %v914
    %v6109 = vpop.f32.mrf.mxu0
    %v6110 = vadd.f32 %v6037, %v6109
    %v6111 = vpop.f32.mrf.mxu0
    %v6112 = vadd.f32 %v6039, %v6111
    %6113 = vmatmul.bf16.gmra.mxu0 %v922
    %v6114 = vpop.f32.mrf.mxu0
    %v6115 = vadd.f32 %v6042, %v6114
    %v6116 = vpop.f32.mrf.mxu0
    %v6117 = vadd.f32 %v6044, %v6116
    %6118 = vmatmul.bf16.gmra.mxu0 %v930
    %v6119 = vpop.f32.mrf.mxu0
    %v6120 = vadd.f32 %v6047, %v6119
    %v6121 = vpop.f32.mrf.mxu0
    %v6122 = vadd.f32 %v6049, %v6121
    %6123 = vmatmul.bf16.gmra.mxu0 %v938
    %v6124 = vpop.f32.mrf.mxu0
    %v6125 = vadd.f32 %v6052, %v6124
    %v6126 = vpop.f32.mrf.mxu0
    %v6127 = vadd.f32 %v6054, %v6126
    %6128 = vmatmul.bf16.gmra.mxu0 %v946
    %v6129 = vpop.f32.mrf.mxu0
    %v6130 = vadd.f32 %v6057, %v6129
    %v6131 = vpop.f32.mrf.mxu0
    %v6132 = vadd.f32 %v6059, %v6131
    %6133 = vmatmul.bf16.gmra.mxu0 %v954
    %v6134 = vpop.f32.mrf.mxu0
    %v6135 = vadd.f32 %v6062, %v6134
    %v6136 = vpop.f32.mrf.mxu0
    %v6137 = vadd.f32 %v6064, %v6136
    %6138 = vmatmul.bf16.gmra.mxu0 %v962
    %v6139 = vpop.f32.mrf.mxu0
    %v6140 = vadd.f32 %v6067, %v6139
    %v6141 = vpop.f32.mrf.mxu0
    %v6142 = vadd.f32 %v6069, %v6141
    %6143 = vmatmul.bf16.gmra.mxu0 %v970
    %v6144 = vpop.f32.mrf.mxu0
    %v6145 = vadd.f32 %v6072, %v6144
    %v6146 = vpop.f32.mrf.mxu0
    %v6147 = vadd.f32 %v6074, %v6146
    %6148 = vmatmul.bf16.gmra.mxu0 %v978
    %v6149 = vpop.f32.mrf.mxu0
    %v6150 = vadd.f32 %v6077, %v6149
    %v6151 = vpop.f32.mrf.mxu0
    %v6152 = vadd.f32 %v6079, %v6151
    %6153 = vmatmul.bf16.gmra.mxu0 %v986
    %v6154 = vpop.f32.mrf.mxu0
    %v6155 = vadd.f32 %v6082, %v6154
    %v6156 = vpop.f32.mrf.mxu0
    %v6157 = vadd.f32 %v6084, %v6156
    %6158 = vmatmul.bf16.gmra.mxu0 %v994
    %v6159 = vpop.f32.mrf.mxu0
    %v6160 = vadd.f32 %v6087, %v6159
    %v6161 = vpop.f32.mrf.mxu0
    %6162 = vdwg.mxu0
    %6163 = vmatpush.bf16.msra.mxu0 %v2447
    %6164 = vmatpush.bf16.msra.mxu0 %v2441
    %6165 = vmatpush.bf16.msra.mxu0 %v2435
    %6166 = vmatpush.bf16.msra.mxu0 %v2429
    %6167 = vmatpush.bf16.msra.mxu0 %v2423
    %6168 = vmatpush.bf16.msra.mxu0 %v2417
    %6169 = vmatpush.bf16.msra.mxu0 %v2411
    %6170 = vmatpush.bf16.msra.mxu0 %v2405
    %6171 = vmatmul.bf16.gmra.mxu0 %v899
    %v6172 = vpop.f32.mrf.mxu0
    %v6173 = vadd.f32 %v6100, %v6172
    %v6174 = vpop.f32.mrf.mxu0
    %v6175 = vadd.f32 %v6102, %v6174
    %6176 = vmatmul.bf16.gmra.mxu0 %v907
    %v6177 = vpop.f32.mrf.mxu0
    %v6178 = vadd.f32 %v6105, %v6177
    %v6179 = vpop.f32.mrf.mxu0
    %v6180 = vadd.f32 %v6107, %v6179
    %6181 = vmatmul.bf16.gmra.mxu0 %v915
    %v6182 = vpop.f32.mrf.mxu0
    %v6183 = vadd.f32 %v6110, %v6182
    %v6184 = vpop.f32.mrf.mxu0
    %v6185 = vadd.f32 %v6112, %v6184
    %6186 = vmatmul.bf16.gmra.mxu0 %v923
    %v6187 = vpop.f32.mrf.mxu0
    %v6188 = vadd.f32 %v6115, %v6187
    %v6189 = vpop.f32.mrf.mxu0
    %v6190 = vadd.f32 %v6117, %v6189
    %6191 = vmatmul.bf16.gmra.mxu0 %v931
    %v6192 = vpop.f32.mrf.mxu0
    %v6193 = vadd.f32 %v6120, %v6192
    %v6194 = vpop.f32.mrf.mxu0
    %v6195 = vadd.f32 %v6122, %v6194
    %6196 = vmatmul.bf16.gmra.mxu0 %v939
    %v6197 = vpop.f32.mrf.mxu0
    %v6198 = vadd.f32 %v6125, %v6197
    %v6199 = vpop.f32.mrf.mxu0
    %v6200 = vadd.f32 %v6127, %v6199
    %6201 = vmatmul.bf16.gmra.mxu0 %v947
    %v6202 = vpop.f32.mrf.mxu0
    %v6203 = vadd.f32 %v6130, %v6202
    %v6204 = vpop.f32.mrf.mxu0
    %v6205 = vadd.f32 %v6132, %v6204
    %6206 = vmatmul.bf16.gmra.mxu0 %v955
    %v6207 = vpop.f32.mrf.mxu0
    %v6208 = vadd.f32 %v6135, %v6207
    %v6209 = vpop.f32.mrf.mxu0
    %v6210 = vadd.f32 %v6137, %v6209
    %6211 = vmatmul.bf16.gmra.mxu0 %v963
    %v6212 = vpop.f32.mrf.mxu0
    %v6213 = vadd.f32 %v6140, %v6212
    %v6214 = vpop.f32.mrf.mxu0
    %v6215 = vadd.f32 %v6142, %v6214
    %6216 = vmatmul.bf16.gmra.mxu0 %v971
    %v6217 = vpop.f32.mrf.mxu0
    %v6218 = vadd.f32 %v6145, %v6217
    %v6219 = vpop.f32.mrf.mxu0
    %v6220 = vadd.f32 %v6147, %v6219
    %6221 = vmatmul.bf16.gmra.mxu0 %v979
    %v6222 = vpop.f32.mrf.mxu0
    %v6223 = vadd.f32 %v6150, %v6222
    %v6224 = vpop.f32.mrf.mxu0
    %v6225 = vadd.f32 %v6152, %v6224
    %6226 = vmatmul.bf16.gmra.mxu0 %v987
    %v6227 = vpop.f32.mrf.mxu0
    %v6228 = vadd.f32 %v6155, %v6227
    %v6229 = vpop.f32.mrf.mxu0
    %v6230 = vadd.f32 %v6157, %v6229
    %6231 = vmatmul.bf16.gmra.mxu0 %v995
    %v6232 = vpop.f32.mrf.mxu0
    %v6233 = vadd.f32 %v6160, %v6232
    %v6234 = vpop.f32.mrf.mxu0
    %6235 = vdwg.mxu0
    %6236 = vmatpush.bf16.msra.mxu0 %v2495
    %6237 = vmatpush.bf16.msra.mxu0 %v2489
    %6238 = vmatpush.bf16.msra.mxu0 %v2483
    %6239 = vmatpush.bf16.msra.mxu0 %v2477
    %6240 = vmatpush.bf16.msra.mxu0 %v2471
    %6241 = vmatpush.bf16.msra.mxu0 %v2465
    %6242 = vmatpush.bf16.msra.mxu0 %v2459
    %6243 = vmatpush.bf16.msra.mxu0 %v2453
    %6244 = vmatmul.bf16.gmra.mxu0 %v900
    %v6245 = vpop.f32.mrf.mxu0
    %v6246 = vadd.f32 %v6173, %v6245
    %v6247 = vpop.f32.mrf.mxu0
    %v6248 = vadd.f32 %v6175, %v6247
    %6249 = vmatmul.bf16.gmra.mxu0 %v908
    %v6250 = vpop.f32.mrf.mxu0
    %v6251 = vadd.f32 %v6178, %v6250
    %v6252 = vpop.f32.mrf.mxu0
    %v6253 = vadd.f32 %v6180, %v6252
    %6254 = vmatmul.bf16.gmra.mxu0 %v916
    %v6255 = vpop.f32.mrf.mxu0
    %v6256 = vadd.f32 %v6183, %v6255
    %v6257 = vpop.f32.mrf.mxu0
    %v6258 = vadd.f32 %v6185, %v6257
    %6259 = vmatmul.bf16.gmra.mxu0 %v924
    %v6260 = vpop.f32.mrf.mxu0
    %v6261 = vadd.f32 %v6188, %v6260
    %v6262 = vpop.f32.mrf.mxu0
    %v6263 = vadd.f32 %v6190, %v6262
    %6264 = vmatmul.bf16.gmra.mxu0 %v932
    %v6265 = vpop.f32.mrf.mxu0
    %v6266 = vadd.f32 %v6193, %v6265
    %v6267 = vpop.f32.mrf.mxu0
    %v6268 = vadd.f32 %v6195, %v6267
    %6269 = vmatmul.bf16.gmra.mxu0 %v940
    %v6270 = vpop.f32.mrf.mxu0
    %v6271 = vadd.f32 %v6198, %v6270
    %v6272 = vpop.f32.mrf.mxu0
    %v6273 = vadd.f32 %v6200, %v6272
    %6274 = vmatmul.bf16.gmra.mxu0 %v948
    %v6275 = vpop.f32.mrf.mxu0
    %v6276 = vadd.f32 %v6203, %v6275
    %v6277 = vpop.f32.mrf.mxu0
    %v6278 = vadd.f32 %v6205, %v6277
    %6279 = vmatmul.bf16.gmra.mxu0 %v956
    %v6280 = vpop.f32.mrf.mxu0
    %v6281 = vadd.f32 %v6208, %v6280
    %v6282 = vpop.f32.mrf.mxu0
    %v6283 = vadd.f32 %v6210, %v6282
    %6284 = vmatmul.bf16.gmra.mxu0 %v964
    %v6285 = vpop.f32.mrf.mxu0
    %v6286 = vadd.f32 %v6213, %v6285
    %v6287 = vpop.f32.mrf.mxu0
    %v6288 = vadd.f32 %v6215, %v6287
    %6289 = vmatmul.bf16.gmra.mxu0 %v972
    %v6290 = vpop.f32.mrf.mxu0
    %v6291 = vadd.f32 %v6218, %v6290
    %v6292 = vpop.f32.mrf.mxu0
    %v6293 = vadd.f32 %v6220, %v6292
    %6294 = vmatmul.bf16.gmra.mxu0 %v980
    %v6295 = vpop.f32.mrf.mxu0
    %v6296 = vadd.f32 %v6223, %v6295
    %v6297 = vpop.f32.mrf.mxu0
    %v6298 = vadd.f32 %v6225, %v6297
    %6299 = vmatmul.bf16.gmra.mxu0 %v988
    %v6300 = vpop.f32.mrf.mxu0
    %v6301 = vadd.f32 %v6228, %v6300
    %v6302 = vpop.f32.mrf.mxu0
    %v6303 = vadd.f32 %v6230, %v6302
    %6304 = vmatmul.bf16.gmra.mxu0 %v996
    %v6305 = vpop.f32.mrf.mxu0
    %v6306 = vadd.f32 %v6233, %v6305
    %v6307 = vpop.f32.mrf.mxu0
    %6308 = vdwg.mxu0
    %6309 = vmatpush.bf16.msra.mxu0 %v2543
    %6310 = vmatpush.bf16.msra.mxu0 %v2537
    %6311 = vmatpush.bf16.msra.mxu0 %v2531
    %6312 = vmatpush.bf16.msra.mxu0 %v2525
    %6313 = vmatpush.bf16.msra.mxu0 %v2519
    %6314 = vmatpush.bf16.msra.mxu0 %v2513
    %6315 = vmatpush.bf16.msra.mxu0 %v2507
    %6316 = vmatpush.bf16.msra.mxu0 %v2501
    %6317 = vmatmul.bf16.gmra.mxu0 %v901
    %v6318 = vpop.f32.mrf.mxu0
    %v6319 = vadd.f32 %v6246, %v6318
    %v6320 = vpop.f32.mrf.mxu0
    %v6321 = vadd.f32 %v6248, %v6320
    %6322 = vmatmul.bf16.gmra.mxu0 %v909
    %v6323 = vpop.f32.mrf.mxu0
    %v6324 = vadd.f32 %v6251, %v6323
    %v6325 = vpop.f32.mrf.mxu0
    %v6326 = vadd.f32 %v6253, %v6325
    %6327 = vmatmul.bf16.gmra.mxu0 %v917
    %v6328 = vpop.f32.mrf.mxu0
    %v6329 = vadd.f32 %v6256, %v6328
    %v6330 = vpop.f32.mrf.mxu0
    %v6331 = vadd.f32 %v6258, %v6330
    %6332 = vmatmul.bf16.gmra.mxu0 %v925
    %v6333 = vpop.f32.mrf.mxu0
    %v6334 = vadd.f32 %v6261, %v6333
    %v6335 = vpop.f32.mrf.mxu0
    %v6336 = vadd.f32 %v6263, %v6335
    %6337 = vmatmul.bf16.gmra.mxu0 %v933
    %v6338 = vpop.f32.mrf.mxu0
    %v6339 = vadd.f32 %v6266, %v6338
    %v6340 = vpop.f32.mrf.mxu0
    %v6341 = vadd.f32 %v6268, %v6340
    %6342 = vmatmul.bf16.gmra.mxu0 %v941
    %v6343 = vpop.f32.mrf.mxu0
    %v6344 = vadd.f32 %v6271, %v6343
    %v6345 = vpop.f32.mrf.mxu0
    %v6346 = vadd.f32 %v6273, %v6345
    %6347 = vmatmul.bf16.gmra.mxu0 %v949
    %v6348 = vpop.f32.mrf.mxu0
    %v6349 = vadd.f32 %v6276, %v6348
    %v6350 = vpop.f32.mrf.mxu0
    %v6351 = vadd.f32 %v6278, %v6350
    %6352 = vmatmul.bf16.gmra.mxu0 %v957
    %v6353 = vpop.f32.mrf.mxu0
    %v6354 = vadd.f32 %v6281, %v6353
    %v6355 = vpop.f32.mrf.mxu0
    %v6356 = vadd.f32 %v6283, %v6355
    %6357 = vmatmul.bf16.gmra.mxu0 %v965
    %v6358 = vpop.f32.mrf.mxu0
    %v6359 = vadd.f32 %v6286, %v6358
    %v6360 = vpop.f32.mrf.mxu0
    %v6361 = vadd.f32 %v6288, %v6360
    %6362 = vmatmul.bf16.gmra.mxu0 %v973
    %v6363 = vpop.f32.mrf.mxu0
    %v6364 = vadd.f32 %v6291, %v6363
    %v6365 = vpop.f32.mrf.mxu0
    %v6366 = vadd.f32 %v6293, %v6365
    %6367 = vmatmul.bf16.gmra.mxu0 %v981
    %v6368 = vpop.f32.mrf.mxu0
    %v6369 = vadd.f32 %v6296, %v6368
    %v6370 = vpop.f32.mrf.mxu0
    %v6371 = vadd.f32 %v6298, %v6370
    %6372 = vmatmul.bf16.gmra.mxu0 %v989
    %v6373 = vpop.f32.mrf.mxu0
    %v6374 = vadd.f32 %v6301, %v6373
    %v6375 = vpop.f32.mrf.mxu0
    %v6376 = vadd.f32 %v6303, %v6375
    %6377 = vmatmul.bf16.gmra.mxu0 %v997
    %v6378 = vpop.f32.mrf.mxu0
    %v6379 = vadd.f32 %v6306, %v6378
    %v6380 = vpop.f32.mrf.mxu0
    %6381 = vdwg.mxu0
    %6382 = vmatpush.bf16.msra.mxu0 %v2591
    %6383 = vmatpush.bf16.msra.mxu0 %v2585
    %6384 = vmatpush.bf16.msra.mxu0 %v2579
    %6385 = vmatpush.bf16.msra.mxu0 %v2573
    %6386 = vmatpush.bf16.msra.mxu0 %v2567
    %6387 = vmatpush.bf16.msra.mxu0 %v2561
    %6388 = vmatpush.bf16.msra.mxu0 %v2555
    %6389 = vmatpush.bf16.msra.mxu0 %v2549
    %6390 = vmatmul.bf16.gmra.mxu0 %v902
    %v6391 = vpop.f32.mrf.mxu0
    %v6392 = vadd.f32 %v6319, %v6391
    %v6393 = vpop.f32.mrf.mxu0
    %v6394 = vadd.f32 %v6321, %v6393
    %6395 = vmatmul.bf16.gmra.mxu0 %v910
    %v6396 = vpop.f32.mrf.mxu0
    %v6397 = vadd.f32 %v6324, %v6396
    %v6398 = vpop.f32.mrf.mxu0
    %v6399 = vadd.f32 %v6326, %v6398
    %6400 = vmatmul.bf16.gmra.mxu0 %v918
    %v6401 = vpop.f32.mrf.mxu0
    %v6402 = vadd.f32 %v6329, %v6401
    %v6403 = vpop.f32.mrf.mxu0
    %v6404 = vadd.f32 %v6331, %v6403
    %6405 = vmatmul.bf16.gmra.mxu0 %v926
    %v6406 = vpop.f32.mrf.mxu0
    %v6407 = vadd.f32 %v6334, %v6406
    %v6408 = vpop.f32.mrf.mxu0
    %v6409 = vadd.f32 %v6336, %v6408
    %6410 = vmatmul.bf16.gmra.mxu0 %v934
    %v6411 = vpop.f32.mrf.mxu0
    %v6412 = vadd.f32 %v6339, %v6411
    %v6413 = vpop.f32.mrf.mxu0
    %v6414 = vadd.f32 %v6341, %v6413
    %6415 = vmatmul.bf16.gmra.mxu0 %v942
    %v6416 = vpop.f32.mrf.mxu0
    %v6417 = vadd.f32 %v6344, %v6416
    %v6418 = vpop.f32.mrf.mxu0
    %v6419 = vadd.f32 %v6346, %v6418
    %6420 = vmatmul.bf16.gmra.mxu0 %v950
    %v6421 = vpop.f32.mrf.mxu0
    %v6422 = vadd.f32 %v6349, %v6421
    %v6423 = vpop.f32.mrf.mxu0
    %v6424 = vadd.f32 %v6351, %v6423
    %6425 = vmatmul.bf16.gmra.mxu0 %v958
    %v6426 = vpop.f32.mrf.mxu0
    %v6427 = vadd.f32 %v6354, %v6426
    %v6428 = vpop.f32.mrf.mxu0
    %v6429 = vadd.f32 %v6356, %v6428
    %6430 = vmatmul.bf16.gmra.mxu0 %v966
    %v6431 = vpop.f32.mrf.mxu0
    %v6432 = vadd.f32 %v6359, %v6431
    %v6433 = vpop.f32.mrf.mxu0
    %v6434 = vadd.f32 %v6361, %v6433
    %6435 = vmatmul.bf16.gmra.mxu0 %v974
    %v6436 = vpop.f32.mrf.mxu0
    %v6437 = vadd.f32 %v6364, %v6436
    %v6438 = vpop.f32.mrf.mxu0
    %v6439 = vadd.f32 %v6366, %v6438
    %6440 = vmatmul.bf16.gmra.mxu0 %v982
    %v6441 = vpop.f32.mrf.mxu0
    %v6442 = vadd.f32 %v6369, %v6441
    %v6443 = vpop.f32.mrf.mxu0
    %v6444 = vadd.f32 %v6371, %v6443
    %6445 = vmatmul.bf16.gmra.mxu0 %v990
    %v6446 = vpop.f32.mrf.mxu0
    %v6447 = vadd.f32 %v6374, %v6446
    %v6448 = vpop.f32.mrf.mxu0
    %v6449 = vadd.f32 %v6376, %v6448
    %6450 = vmatmul.bf16.gmra.mxu0 %v998
    %v6451 = vpop.f32.mrf.mxu0
    %v6452 = vadd.f32 %v6379, %v6451
    %v6453 = vpop.f32.mrf.mxu0
    %6454 = vdwg.mxu0
    %6455 = vmatpush.bf16.msra.mxu0 %v2639
    %6456 = vmatpush.bf16.msra.mxu0 %v2633
    %6457 = vmatpush.bf16.msra.mxu0 %v2627
    %6458 = vmatpush.bf16.msra.mxu0 %v2621
    %6459 = vmatpush.bf16.msra.mxu0 %v2615
    %6460 = vmatpush.bf16.msra.mxu0 %v2609
    %6461 = vmatpush.bf16.msra.mxu0 %v2603
    %6462 = vmatpush.bf16.msra.mxu0 %v2597
    %6463 = vmatmul.bf16.gmra.mxu0 %v903
    %v6464 = vpop.f32.mrf.mxu0
    %v6465 = vadd.f32 %v6392, %v6464
    %v6466 = vpop.f32.mrf.mxu0
    %v6467 = vadd.f32 %v6394, %v6466
    %6468 = vmatmul.bf16.gmra.mxu0 %v911
    %v6469 = vpop.f32.mrf.mxu0
    %v6470 = vadd.f32 %v6397, %v6469
    %v6471 = vpop.f32.mrf.mxu0
    %v6472 = vadd.f32 %v6399, %v6471
    %6473 = vmatmul.bf16.gmra.mxu0 %v919
    %v6474 = vpop.f32.mrf.mxu0
    %v6475 = vadd.f32 %v6402, %v6474
    %v6476 = vpop.f32.mrf.mxu0
    %v6477 = vadd.f32 %v6404, %v6476
    %6478 = vmatmul.bf16.gmra.mxu0 %v927
    %v6479 = vpop.f32.mrf.mxu0
    %v6480 = vadd.f32 %v6407, %v6479
    %v6481 = vpop.f32.mrf.mxu0
    %v6482 = vadd.f32 %v6409, %v6481
    %6483 = vmatmul.bf16.gmra.mxu0 %v935
    %v6484 = vpop.f32.mrf.mxu0
    %v6485 = vadd.f32 %v6412, %v6484
    %v6486 = vpop.f32.mrf.mxu0
    %v6487 = vadd.f32 %v6414, %v6486
    %6488 = vmatmul.bf16.gmra.mxu0 %v943
    %v6489 = vpop.f32.mrf.mxu0
    %v6490 = vadd.f32 %v6417, %v6489
    %v6491 = vpop.f32.mrf.mxu0
    %v6492 = vadd.f32 %v6419, %v6491
    %6493 = vmatmul.bf16.gmra.mxu0 %v951
    %v6494 = vpop.f32.mrf.mxu0
    %v6495 = vadd.f32 %v6422, %v6494
    %v6496 = vpop.f32.mrf.mxu0
    %v6497 = vadd.f32 %v6424, %v6496
    %6498 = vmatmul.bf16.gmra.mxu0 %v959
    %v6499 = vpop.f32.mrf.mxu0
    %v6500 = vadd.f32 %v6427, %v6499
    %v6501 = vpop.f32.mrf.mxu0
    %v6502 = vadd.f32 %v6429, %v6501
    %6503 = vmatmul.bf16.gmra.mxu0 %v967
    %v6504 = vpop.f32.mrf.mxu0
    %v6505 = vadd.f32 %v6432, %v6504
    %v6506 = vpop.f32.mrf.mxu0
    %v6507 = vadd.f32 %v6434, %v6506
    %6508 = vmatmul.bf16.gmra.mxu0 %v975
    %v6509 = vpop.f32.mrf.mxu0
    %v6510 = vadd.f32 %v6437, %v6509
    %v6511 = vpop.f32.mrf.mxu0
    %v6512 = vadd.f32 %v6439, %v6511
    %6513 = vmatmul.bf16.gmra.mxu0 %v983
    %v6514 = vpop.f32.mrf.mxu0
    %v6515 = vadd.f32 %v6442, %v6514
    %v6516 = vpop.f32.mrf.mxu0
    %v6517 = vadd.f32 %v6444, %v6516
    %6518 = vmatmul.bf16.gmra.mxu0 %v991
    %v6519 = vpop.f32.mrf.mxu0
    %v6520 = vadd.f32 %v6447, %v6519
    %v6521 = vpop.f32.mrf.mxu0
    %v6522 = vadd.f32 %v6449, %v6521
    %6523 = vmatmul.bf16.gmra.mxu0 %v999
    %v6524 = vpop.f32.mrf.mxu0
    %v6525 = vadd.f32 %v6452, %v6524
    %v6526 = vpop.f32.mrf.mxu0
    %6527 = vdwg.mxu0
    %v6528 = vld [vmem:[#allocation5] sm:$0xf]
    %v6529 = vld [vmem:[#allocation8] sm:$0x3f]
    %v6531 = vperm.slane %v6529, 0
    %v6532 = vperm.slane %v6529, 1
    %v6533 = vperm.slane %v6529, 2
    %v6534 = vperm.slane %v6529, 3
    %v6535 = vperm.slane %v6529, 4
    %v6536 = vperm.slane %v6529, 5
    %6544 = vst [vmem:[#allocation1] ss:$4 sm:$0xff] %v6528
    %v6545 = vld.sshfl [vmem:[#allocation1] sm:$0xff pattern:$0x73625140]
    %v6546 = vld.sshfl [vmem:[#allocation1 + $0x8] sm:$0xff pattern:$0x73625140]
    %vm6548 = vcmask 588800
    %v6549 = vsel %vm6548, %v6546, 0
    %6551 = vmatpush.msra.mxu0 %v3582
    %6552 = vmatpush.msra.mxu0 %v3580
    %6553 = vmatpush.msra.mxu0 %v3577
    %6554 = vmatpush.msra.mxu0 %v3575
    %6555 = vmatpush.msra.mxu0 %v3572
    %6556 = vmatpush.msra.mxu0 %v3570
    %6557 = vmatpush.msra.mxu0 %v3567
    %6558 = vmatpush.msra.mxu0 %v3565
    %6559 = vmatpush.msra.mxu0 %v3562
    %6560 = vmatpush.msra.mxu0 %v3560
    %6561 = vmatpush.msra.mxu0 %v3557
    %6562 = vmatpush.msra.mxu0 %v3555
    %6563 = vmatpush.msra.mxu0 %v3552
    %6564 = vmatpush.msra.mxu0 %v3550
    %6565 = vmatpush.msra.mxu0 %v3547
    %6566 = vmatpush.msra.mxu0 %v3545
    %6567 = vmatmul.f32.gmra.mxu0 %v6545
    %v6568 = vpop.f32.mrf.mxu0
    %v6569 = vadd.f32 %v6531, %v6568
    %6570 = vdwg.mxu0
    %6571 = vmatpush.msra.mxu0 0.0
    %6572 = vmatpush.msra.mxu0 0.0
    %6573 = vmatpush.msra.mxu0 0.0
    %6574 = vmatpush.msra.mxu0 0.0
    %6575 = vmatpush.msra.mxu0 0.0
    %6576 = vmatpush.msra.mxu0 0.0
    %6577 = vmatpush.msra.mxu0 0.0
    %6578 = vmatpush.msra.mxu0 %v3605
    %6579 = vmatpush.msra.mxu0 %v3602
    %6580 = vmatpush.msra.mxu0 %v3600
    %6581 = vmatpush.msra.mxu0 %v3597
    %6582 = vmatpush.msra.mxu0 %v3595
    %6583 = vmatpush.msra.mxu0 %v3592
    %6584 = vmatpush.msra.mxu0 %v3590
    %6585 = vmatpush.msra.mxu0 %v3587
    %6586 = vmatpush.msra.mxu0 %v3585
    %6587 = vmatmul.f32.gmra.mxu0 %v6549
    %v6588 = vpop.f32.mrf.mxu0
    %v6589 = vadd.f32 %v6569, %v6588
    %6590 = vdwg.mxu0
    %6591 = vmatpush.msra.mxu0 %v4166
    %6592 = vmatpush.msra.mxu0 %v4164
    %6593 = vmatpush.msra.mxu0 %v4161
    %6594 = vmatpush.msra.mxu0 %v4159
    %6595 = vmatpush.msra.mxu0 %v4156
    %6596 = vmatpush.msra.mxu0 %v4154
    %6597 = vmatpush.msra.mxu0 %v4151
    %6598 = vmatpush.msra.mxu0 %v4149
    %6599 = vmatpush.msra.mxu0 %v4146
    %6600 = vmatpush.msra.mxu0 %v4144
    %6601 = vmatpush.msra.mxu0 %v4141
    %6602 = vmatpush.msra.mxu0 %v4139
    %6603 = vmatpush.msra.mxu0 %v4136
    %6604 = vmatpush.msra.mxu0 %v4134
    %6605 = vmatpush.msra.mxu0 %v4131
    %6606 = vmatpush.msra.mxu0 %v4129
    %6607 = vmatmul.f32.gmra.mxu0 %v6545
    %v6608 = vpop.f32.mrf.mxu0
    %v6609 = vadd.f32 %v6532, %v6608
    %6610 = vdwg.mxu0
    %6611 = vmatpush.msra.mxu0 0.0
    %6612 = vmatpush.msra.mxu0 0.0
    %6613 = vmatpush.msra.mxu0 0.0
    %6614 = vmatpush.msra.mxu0 0.0
    %6615 = vmatpush.msra.mxu0 0.0
    %6616 = vmatpush.msra.mxu0 0.0
    %6617 = vmatpush.msra.mxu0 0.0
    %6618 = vmatpush.msra.mxu0 %v4189
    %6619 = vmatpush.msra.mxu0 %v4186
    %6620 = vmatpush.msra.mxu0 %v4184
    %6621 = vmatpush.msra.mxu0 %v4181
    %6622 = vmatpush.msra.mxu0 %v4179
    %6623 = vmatpush.msra.mxu0 %v4176
    %6624 = vmatpush.msra.mxu0 %v4174
    %6625 = vmatpush.msra.mxu0 %v4171
    %6626 = vmatpush.msra.mxu0 %v4169
    %6627 = vmatmul.f32.gmra.mxu0 %v6549
    %v6628 = vpop.f32.mrf.mxu0
    %v6629 = vadd.f32 %v6609, %v6628
    %6630 = vdwg.mxu0
    %6631 = vmatpush.msra.mxu0 %v4750
    %6632 = vmatpush.msra.mxu0 %v4748
    %6633 = vmatpush.msra.mxu0 %v4745
    %6634 = vmatpush.msra.mxu0 %v4743
    %6635 = vmatpush.msra.mxu0 %v4740
    %6636 = vmatpush.msra.mxu0 %v4738
    %6637 = vmatpush.msra.mxu0 %v4735
    %6638 = vmatpush.msra.mxu0 %v4733
    %6639 = vmatpush.msra.mxu0 %v4730
    %6640 = vmatpush.msra.mxu0 %v4728
    %6641 = vmatpush.msra.mxu0 %v4725
    %6642 = vmatpush.msra.mxu0 %v4723
    %6643 = vmatpush.msra.mxu0 %v4720
    %6644 = vmatpush.msra.mxu0 %v4718
    %6645 = vmatpush.msra.mxu0 %v4715
    %6646 = vmatpush.msra.mxu0 %v4713
    %6647 = vmatmul.f32.gmra.mxu0 %v6545
    %v6648 = vpop.f32.mrf.mxu0
    %v6649 = vadd.f32 %v6533, %v6648
    %6650 = vdwg.mxu0
    %6651 = vmatpush.msra.mxu0 0.0
    %6652 = vmatpush.msra.mxu0 0.0
    %6653 = vmatpush.msra.mxu0 0.0
    %6654 = vmatpush.msra.mxu0 0.0
    %6655 = vmatpush.msra.mxu0 0.0
    %6656 = vmatpush.msra.mxu0 0.0
    %6657 = vmatpush.msra.mxu0 0.0
    %6658 = vmatpush.msra.mxu0 %v4773
    %6659 = vmatpush.msra.mxu0 %v4770
    %6660 = vmatpush.msra.mxu0 %v4768
    %6661 = vmatpush.msra.mxu0 %v4765
    %6662 = vmatpush.msra.mxu0 %v4763
    %6663 = vmatpush.msra.mxu0 %v4760
    %6664 = vmatpush.msra.mxu0 %v4758
    %6665 = vmatpush.msra.mxu0 %v4755
    %6666 = vmatpush.msra.mxu0 %v4753
    %6667 = vmatmul.f32.gmra.mxu0 %v6549
    %v6668 = vpop.f32.mrf.mxu0
    %v6669 = vadd.f32 %v6649, %v6668
    %6670 = vdwg.mxu0
    %6671 = vmatpush.msra.mxu0 %v5334
    %6672 = vmatpush.msra.mxu0 %v5332
    %6673 = vmatpush.msra.mxu0 %v5329
    %6674 = vmatpush.msra.mxu0 %v5327
    %6675 = vmatpush.msra.mxu0 %v5324
    %6676 = vmatpush.msra.mxu0 %v5322
    %6677 = vmatpush.msra.mxu0 %v5319
    %6678 = vmatpush.msra.mxu0 %v5317
    %6679 = vmatpush.msra.mxu0 %v5314
    %6680 = vmatpush.msra.mxu0 %v5312
    %6681 = vmatpush.msra.mxu0 %v5309
    %6682 = vmatpush.msra.mxu0 %v5307
    %6683 = vmatpush.msra.mxu0 %v5304
    %6684 = vmatpush.msra.mxu0 %v5302
    %6685 = vmatpush.msra.mxu0 %v5299
    %6686 = vmatpush.msra.mxu0 %v5297
    %6687 = vmatmul.f32.gmra.mxu0 %v6545
    %v6688 = vpop.f32.mrf.mxu0
    %v6689 = vadd.f32 %v6534, %v6688
    %6690 = vdwg.mxu0
    %6691 = vmatpush.msra.mxu0 0.0
    %6692 = vmatpush.msra.mxu0 0.0
    %6693 = vmatpush.msra.mxu0 0.0
    %6694 = vmatpush.msra.mxu0 0.0
    %6695 = vmatpush.msra.mxu0 0.0
    %6696 = vmatpush.msra.mxu0 0.0
    %6697 = vmatpush.msra.mxu0 0.0
    %6698 = vmatpush.msra.mxu0 %v5357
    %6699 = vmatpush.msra.mxu0 %v5354
    %6700 = vmatpush.msra.mxu0 %v5352
    %6701 = vmatpush.msra.mxu0 %v5349
    %6702 = vmatpush.msra.mxu0 %v5347
    %6703 = vmatpush.msra.mxu0 %v5344
    %6704 = vmatpush.msra.mxu0 %v5342
    %6705 = vmatpush.msra.mxu0 %v5339
    %6706 = vmatpush.msra.mxu0 %v5337
    %6707 = vmatmul.f32.gmra.mxu0 %v6549
    %v6708 = vpop.f32.mrf.mxu0
    %v6709 = vadd.f32 %v6689, %v6708
    %6710 = vdwg.mxu0
    %6711 = vmatpush.msra.mxu0 %v5918
    %6712 = vmatpush.msra.mxu0 %v5916
    %6713 = vmatpush.msra.mxu0 %v5913
    %6714 = vmatpush.msra.mxu0 %v5911
    %6715 = vmatpush.msra.mxu0 %v5908
    %6716 = vmatpush.msra.mxu0 %v5906
    %6717 = vmatpush.msra.mxu0 %v5903
    %6718 = vmatpush.msra.mxu0 %v5901
    %6719 = vmatpush.msra.mxu0 %v5898
    %6720 = vmatpush.msra.mxu0 %v5896
    %6721 = vmatpush.msra.mxu0 %v5893
    %6722 = vmatpush.msra.mxu0 %v5891
    %6723 = vmatpush.msra.mxu0 %v5888
    %6724 = vmatpush.msra.mxu0 %v5886
    %6725 = vmatpush.msra.mxu0 %v5883
    %6726 = vmatpush.msra.mxu0 %v5881
    %6727 = vmatmul.f32.gmra.mxu0 %v6545
    %v6728 = vpop.f32.mrf.mxu0
    %v6729 = vadd.f32 %v6535, %v6728
    %6730 = vdwg.mxu0
    %6731 = vmatpush.msra.mxu0 0.0
    %6732 = vmatpush.msra.mxu0 0.0
    %6733 = vmatpush.msra.mxu0 0.0
    %6734 = vmatpush.msra.mxu0 0.0
    %6735 = vmatpush.msra.mxu0 0.0
    %6736 = vmatpush.msra.mxu0 0.0
    %6737 = vmatpush.msra.mxu0 0.0
    %6738 = vmatpush.msra.mxu0 %v5941
    %6739 = vmatpush.msra.mxu0 %v5938
    %6740 = vmatpush.msra.mxu0 %v5936
    %6741 = vmatpush.msra.mxu0 %v5933
    %6742 = vmatpush.msra.mxu0 %v5931
    %6743 = vmatpush.msra.mxu0 %v5928
    %6744 = vmatpush.msra.mxu0 %v5926
    %6745 = vmatpush.msra.mxu0 %v5923
    %6746 = vmatpush.msra.mxu0 %v5921
    %6747 = vmatmul.f32.gmra.mxu0 %v6549
    %v6748 = vpop.f32.mrf.mxu0
    %v6749 = vadd.f32 %v6729, %v6748
    %6750 = vdwg.mxu0
    %6751 = vmatpush.msra.mxu0 %v6502
    %6752 = vmatpush.msra.mxu0 %v6500
    %6753 = vmatpush.msra.mxu0 %v6497
    %6754 = vmatpush.msra.mxu0 %v6495
    %6755 = vmatpush.msra.mxu0 %v6492
    %6756 = vmatpush.msra.mxu0 %v6490
    %6757 = vmatpush.msra.mxu0 %v6487
    %6758 = vmatpush.msra.mxu0 %v6485
    %6759 = vmatpush.msra.mxu0 %v6482
    %6760 = vmatpush.msra.mxu0 %v6480
    %6761 = vmatpush.msra.mxu0 %v6477
    %6762 = vmatpush.msra.mxu0 %v6475
    %6763 = vmatpush.msra.mxu0 %v6472
    %6764 = vmatpush.msra.mxu0 %v6470
    %6765 = vmatpush.msra.mxu0 %v6467
    %6766 = vmatpush.msra.mxu0 %v6465
    %6767 = vmatmul.f32.gmra.mxu0 %v6545
    %v6768 = vpop.f32.mrf.mxu0
    %v6769 = vadd.f32 %v6536, %v6768
    %6770 = vdwg.mxu0
    %6771 = vmatpush.msra.mxu0 0.0
    %6772 = vmatpush.msra.mxu0 0.0
    %6773 = vmatpush.msra.mxu0 0.0
    %6774 = vmatpush.msra.mxu0 0.0
    %6775 = vmatpush.msra.mxu0 0.0
    %6776 = vmatpush.msra.mxu0 0.0
    %6777 = vmatpush.msra.mxu0 0.0
    %6778 = vmatpush.msra.mxu0 %v6525
    %6779 = vmatpush.msra.mxu0 %v6522
    %6780 = vmatpush.msra.mxu0 %v6520
    %6781 = vmatpush.msra.mxu0 %v6517
    %6782 = vmatpush.msra.mxu0 %v6515
    %6783 = vmatpush.msra.mxu0 %v6512
    %6784 = vmatpush.msra.mxu0 %v6510
    %6785 = vmatpush.msra.mxu0 %v6507
    %6786 = vmatpush.msra.mxu0 %v6505
    %6787 = vmatmul.f32.gmra.mxu0 %v6549
    %v6788 = vpop.f32.mrf.mxu0
    %v6789 = vadd.f32 %v6769, %v6788
    %6790 = vdwg.mxu0
    %v6791 = vld [vmem:[#allocation10] sm:$0xff]
    %v6792 = vld [vmem:[#allocation10 + $0x8] sm:$0xff]
    %v6793 = vld [vmem:[#allocation10 + $0x10] sm:$0xff]
    %v6794 = vld [vmem:[#allocation10 + $0x18] sm:$0xff]
    %v6795 = vld [vmem:[#allocation10 + $0x20] sm:$0xff]
    %v6796 = vld [vmem:[#allocation10 + $0x28] sm:$0xff]
    %v6797 = vld [vmem:[#allocation10 + $0x30] sm:$0xff]
    %v6798 = vld [vmem:[#allocation10 + $0x38] sm:$0xff]
    %v6799 = vld [vmem:[#allocation10 + $0x40] sm:$0xff]
    %v6800 = vld [vmem:[#allocation10 + $0x48] sm:$0xff]
    %v6801 = vld [vmem:[#allocation10 + $0x50] sm:$0xff]
    %v6802 = vld [vmem:[#allocation10 + $0x58] sm:$0xff]
    %v6803 = vld [vmem:[#allocation10 + $0x60] sm:$0xff]
    %v6804 = vld [vmem:[#allocation10 + $0x68] sm:$0xff]
    %v6805 = vld [vmem:[#allocation10 + $0x70] sm:$0xff]
    %v6806 = vld [vmem:[#allocation10 + $0x78] sm:$0xff]
    %v6807 = vld [vmem:[#allocation10 + $0x80] sm:$0xff]
    %v6808 = vld [vmem:[#allocation10 + $0x88] sm:$0xff]
    %v6809 = vld [vmem:[#allocation10 + $0x90] sm:$0xff]
    %v6810 = vld [vmem:[#allocation10 + $0x98] sm:$0xff]
    %v6811 = vld [vmem:[#allocation10 + $0xa0] sm:$0xff]
    %v6812 = vld [vmem:[#allocation10 + $0xa8] sm:$0xff]
    %v6813 = vld [vmem:[#allocation10 + $0xb0] sm:$0xff]
    %v6814 = vld [vmem:[#allocation10 + $0xb8] sm:$0xff]
    %v6815 = vld [vmem:[#allocation10 + $0xc0] sm:$0xff]
    %v6816 = vld [vmem:[#allocation10 + $0xc8] sm:$0xff]
    %v6817 = vld [vmem:[#allocation10 + $0xd0] sm:$0xff]
    %v6818 = vld [vmem:[#allocation10 + $0xd8] sm:$0xff]
    %v6819 = vld [vmem:[#allocation10 + $0xe0] sm:$0xff]
    %v6820 = vld [vmem:[#allocation10 + $0xe8] sm:$0xff]
    %v6821 = vld [vmem:[#allocation10 + $0xf0] sm:$0xff]
    %v6822 = vld [vmem:[#allocation10 + $0xf8] sm:$0xff]
    %v6823 = vld [vmem:[#allocation10 + $0x100] sm:$0xff]
    %v6824 = vld [vmem:[#allocation10 + $0x108] sm:$0xff]
    %v6825 = vld [vmem:[#allocation10 + $0x110] sm:$0xff]
    %v6826 = vld [vmem:[#allocation10 + $0x118] sm:$0xff]
    %v6827 = vld [vmem:[#allocation10 + $0x120] sm:$0xff]
    %v6828 = vld [vmem:[#allocation10 + $0x128] sm:$0xff]
    %v6829 = vld [vmem:[#allocation10 + $0x130] sm:$0xff]
    %v6830 = vld [vmem:[#allocation10 + $0x138] sm:$0xff]
    %v6831 = vld [vmem:[#allocation10 + $0x140] sm:$0xff]
    %v6832 = vld [vmem:[#allocation10 + $0x148] sm:$0xff]
    %v6833 = vld [vmem:[#allocation10 + $0x150] sm:$0xff]
    %v6834 = vld [vmem:[#allocation10 + $0x158] sm:$0xff]
    %v6835 = vld [vmem:[#allocation10 + $0x160] sm:$0xff]
    %v6836 = vld [vmem:[#allocation10 + $0x168] sm:$0xff]
    %v6837 = vld [vmem:[#allocation10 + $0x170] sm:$0xff]
    %v6838 = vld [vmem:[#allocation10 + $0x178] sm:$0xff]
    %v6839 = vld [vmem:[#allocation10 + $0x180] sm:$0xff]
    %v6840 = vld [vmem:[#allocation10 + $0x188] sm:$0xff]
    %v6841 = vld [vmem:[#allocation10 + $0x190] sm:$0xff]
    %v6842 = vld [vmem:[#allocation10 + $0x198] sm:$0xff]
    %v6843 = vld [vmem:[#allocation10 + $0x1a0] sm:$0xff]
    %v6844 = vld [vmem:[#allocation10 + $0x1a8] sm:$0xff]
    %v6845 = vld [vmem:[#allocation10 + $0x1b0] sm:$0xff]
    %v6846 = vld [vmem:[#allocation10 + $0x1b8] sm:$0xff]
    %v6847 = vld [vmem:[#allocation10 + $0x1c0] sm:$0xff]
    %v6848 = vld [vmem:[#allocation10 + $0x1c8] sm:$0xff]
    %v6849 = vld [vmem:[#allocation10 + $0x1d0] sm:$0xff]
    %v6850 = vld [vmem:[#allocation10 + $0x1d8] sm:$0xff]
    %v6851 = vld [vmem:[#allocation10 + $0x1e0] sm:$0xff]
    %v6852 = vld [vmem:[#allocation10 + $0x1e8] sm:$0xff]
    %v6853 = vld [vmem:[#allocation10 + $0x1f0] sm:$0xff]
    %v6854 = vld [vmem:[#allocation10 + $0x1f8] sm:$0xff]
    %v6855 = vld [vmem:[#allocation10 + $0x200] sm:$0xff]
    %v6856 = vld [vmem:[#allocation10 + $0x208] sm:$0xff]
    %v6857 = vld [vmem:[#allocation10 + $0x210] sm:$0xff]
    %v6858 = vld [vmem:[#allocation10 + $0x218] sm:$0xff]
    %v6859 = vld [vmem:[#allocation10 + $0x220] sm:$0xff]
    %v6860 = vld [vmem:[#allocation10 + $0x228] sm:$0xff]
    %v6861 = vld [vmem:[#allocation10 + $0x230] sm:$0xff]
    %v6862 = vld [vmem:[#allocation10 + $0x238] sm:$0xff]
    %v6863 = vld [vmem:[#allocation10 + $0x240] sm:$0xff]
    %v6864 = vld [vmem:[#allocation10 + $0x248] sm:$0xff]
    %v6865 = vld [vmem:[#allocation10 + $0x250] sm:$0xff]
    %v6866 = vld [vmem:[#allocation10 + $0x258] sm:$0xff]
    %v6867 = vld [vmem:[#allocation10 + $0x260] sm:$0xff]
    %v6868 = vld [vmem:[#allocation10 + $0x268] sm:$0xff]
    %v6869 = vld [vmem:[#allocation10 + $0x270] sm:$0xff]
    %v6870 = vld [vmem:[#allocation10 + $0x278] sm:$0xff]
    %v6871 = vld [vmem:[#allocation10 + $0x280] sm:$0xff]
    %v6872 = vld [vmem:[#allocation10 + $0x288] sm:$0xff]
    %v6873 = vld [vmem:[#allocation10 + $0x290] sm:$0xff]
    %v6874 = vld [vmem:[#allocation10 + $0x298] sm:$0xff]
    %v6875 = vld [vmem:[#allocation10 + $0x2a0] sm:$0xff]
    %v6876 = vld [vmem:[#allocation10 + $0x2a8] sm:$0xff]
    %v6877 = vld [vmem:[#allocation10 + $0x2b0] sm:$0xff]
    %v6878 = vld [vmem:[#allocation10 + $0x2b8] sm:$0xff]
    %v6879 = vld [vmem:[#allocation10 + $0x2c0] sm:$0xff]
    %v6880 = vld [vmem:[#allocation10 + $0x2c8] sm:$0xff]
    %v6881 = vld [vmem:[#allocation10 + $0x2d0] sm:$0xff]
    %v6882 = vld [vmem:[#allocation10 + $0x2d8] sm:$0xff]
    %v6883 = vld [vmem:[#allocation10 + $0x2e0] sm:$0xff]
    %v6884 = vld [vmem:[#allocation10 + $0x2e8] sm:$0xff]
    %v6885 = vld [vmem:[#allocation10 + $0x2f0] sm:$0xff]
    %v6886 = vld [vmem:[#allocation10 + $0x2f8] sm:$0xff]
    %v6887 = vld [vmem:[#allocation11] sm:$0x1]
    %v6889 = vperm.slane %v6887, 0
    %6891 = vmatpush.msra.mxu0 %v6806
    %6892 = vmatpush.msra.mxu0 %v6805
    %6893 = vmatpush.msra.mxu0 %v6804
    %6894 = vmatpush.msra.mxu0 %v6803
    %6895 = vmatpush.msra.mxu0 %v6802
    %6896 = vmatpush.msra.mxu0 %v6801
    %6897 = vmatpush.msra.mxu0 %v6800
    %6898 = vmatpush.msra.mxu0 %v6799
    %6899 = vmatpush.msra.mxu0 %v6798
    %6900 = vmatpush.msra.mxu0 %v6797
    %6901 = vmatpush.msra.mxu0 %v6796
    %6902 = vmatpush.msra.mxu0 %v6795
    %6903 = vmatpush.msra.mxu0 %v6794
    %6904 = vmatpush.msra.mxu0 %v6793
    %6905 = vmatpush.msra.mxu0 %v6792
    %6906 = vmatpush.msra.mxu0 %v6791
    %6907 = vmatmul.f32.gmra.mxu0 %v6589
    %v6908 = vpop.f32.mrf.mxu0
    %v6909 = vadd.f32 %v6889, %v6908
    %6910 = vdwg.mxu0
    %6911 = vmatpush.msra.mxu0 %v6822
    %6912 = vmatpush.msra.mxu0 %v6821
    %6913 = vmatpush.msra.mxu0 %v6820
    %6914 = vmatpush.msra.mxu0 %v6819
    %6915 = vmatpush.msra.mxu0 %v6818
    %6916 = vmatpush.msra.mxu0 %v6817
    %6917 = vmatpush.msra.mxu0 %v6816
    %6918 = vmatpush.msra.mxu0 %v6815
    %6919 = vmatpush.msra.mxu0 %v6814
    %6920 = vmatpush.msra.mxu0 %v6813
    %6921 = vmatpush.msra.mxu0 %v6812
    %6922 = vmatpush.msra.mxu0 %v6811
    %6923 = vmatpush.msra.mxu0 %v6810
    %6924 = vmatpush.msra.mxu0 %v6809
    %6925 = vmatpush.msra.mxu0 %v6808
    %6926 = vmatpush.msra.mxu0 %v6807
    %6927 = vmatmul.f32.gmra.mxu0 %v6629
    %v6928 = vpop.f32.mrf.mxu0
    %v6929 = vadd.f32 %v6909, %v6928
    %6930 = vdwg.mxu0
    %6931 = vmatpush.msra.mxu0 %v6838
    %6932 = vmatpush.msra.mxu0 %v6837
    %6933 = vmatpush.msra.mxu0 %v6836
    %6934 = vmatpush.msra.mxu0 %v6835
    %6935 = vmatpush.msra.mxu0 %v6834
    %6936 = vmatpush.msra.mxu0 %v6833
    %6937 = vmatpush.msra.mxu0 %v6832
    %6938 = vmatpush.msra.mxu0 %v6831
    %6939 = vmatpush.msra.mxu0 %v6830
    %6940 = vmatpush.msra.mxu0 %v6829
    %6941 = vmatpush.msra.mxu0 %v6828
    %6942 = vmatpush.msra.mxu0 %v6827
    %6943 = vmatpush.msra.mxu0 %v6826
    %6944 = vmatpush.msra.mxu0 %v6825
    %6945 = vmatpush.msra.mxu0 %v6824
    %6946 = vmatpush.msra.mxu0 %v6823
    %6947 = vmatmul.f32.gmra.mxu0 %v6669
    %v6948 = vpop.f32.mrf.mxu0
    %v6949 = vadd.f32 %v6929, %v6948
    %6950 = vdwg.mxu0
    %6951 = vmatpush.msra.mxu0 %v6854
    %6952 = vmatpush.msra.mxu0 %v6853
    %6953 = vmatpush.msra.mxu0 %v6852
    %6954 = vmatpush.msra.mxu0 %v6851
    %6955 = vmatpush.msra.mxu0 %v6850
    %6956 = vmatpush.msra.mxu0 %v6849
    %6957 = vmatpush.msra.mxu0 %v6848
    %6958 = vmatpush.msra.mxu0 %v6847
    %6959 = vmatpush.msra.mxu0 %v6846
    %6960 = vmatpush.msra.mxu0 %v6845
    %6961 = vmatpush.msra.mxu0 %v6844
    %6962 = vmatpush.msra.mxu0 %v6843
    %6963 = vmatpush.msra.mxu0 %v6842
    %6964 = vmatpush.msra.mxu0 %v6841
    %6965 = vmatpush.msra.mxu0 %v6840
    %6966 = vmatpush.msra.mxu0 %v6839
    %6967 = vmatmul.f32.gmra.mxu0 %v6709
    %v6968 = vpop.f32.mrf.mxu0
    %v6969 = vadd.f32 %v6949, %v6968
    %6970 = vdwg.mxu0
    %6971 = vmatpush.msra.mxu0 %v6870
    %6972 = vmatpush.msra.mxu0 %v6869
    %6973 = vmatpush.msra.mxu0 %v6868
    %6974 = vmatpush.msra.mxu0 %v6867
    %6975 = vmatpush.msra.mxu0 %v6866
    %6976 = vmatpush.msra.mxu0 %v6865
    %6977 = vmatpush.msra.mxu0 %v6864
    %6978 = vmatpush.msra.mxu0 %v6863
    %6979 = vmatpush.msra.mxu0 %v6862
    %6980 = vmatpush.msra.mxu0 %v6861
    %6981 = vmatpush.msra.mxu0 %v6860
    %6982 = vmatpush.msra.mxu0 %v6859
    %6983 = vmatpush.msra.mxu0 %v6858
    %6984 = vmatpush.msra.mxu0 %v6857
    %6985 = vmatpush.msra.mxu0 %v6856
    %6986 = vmatpush.msra.mxu0 %v6855
    %6987 = vmatmul.f32.gmra.mxu0 %v6749
    %v6988 = vpop.f32.mrf.mxu0
    %v6989 = vadd.f32 %v6969, %v6988
    %6990 = vdwg.mxu0
    %6991 = vmatpush.msra.mxu0 %v6886
    %6992 = vmatpush.msra.mxu0 %v6885
    %6993 = vmatpush.msra.mxu0 %v6884
    %6994 = vmatpush.msra.mxu0 %v6883
    %6995 = vmatpush.msra.mxu0 %v6882
    %6996 = vmatpush.msra.mxu0 %v6881
    %6997 = vmatpush.msra.mxu0 %v6880
    %6998 = vmatpush.msra.mxu0 %v6879
    %6999 = vmatpush.msra.mxu0 %v6878
    %7000 = vmatpush.msra.mxu0 %v6877
    %7001 = vmatpush.msra.mxu0 %v6876
    %7002 = vmatpush.msra.mxu0 %v6875
    %7003 = vmatpush.msra.mxu0 %v6874
    %7004 = vmatpush.msra.mxu0 %v6873
    %7005 = vmatpush.msra.mxu0 %v6872
    %7006 = vmatpush.msra.mxu0 %v6871
    %7007 = vmatmul.f32.gmra.mxu0 %v6789
    %v7008 = vpop.f32.mrf.mxu0
    %v7009 = vadd.f32 %v6989, %v7008
    %7010 = vdwg.mxu0
    %7011 = vst [vmem:[#allocation13] sm:$0x3] %v7009
    // Predicated region
    $region50: #{tpu_custom_call.1} parent=1 // pred_check
      _
    $region51: #{tpu_custom_call.1} parent=1 // pred_check_branch
      %7013 = sbr.rel (0) target = $region53
    $region52: #{tpu_custom_call.1} parent=1 // pred_region
      %7015 = vsyncadd [#allocation4], 0
      %s7017 = sshll.u32 [#allocation13], 4
      %s7018 = int_to_ptr.vmem [resolvable:$true] %s7017
      %s7019 = sshll.u32 %s6, 4
      %s7020 = int_to_ptr.hbm [resolvable:$true] %s7019
      %7022 = dma.vmem_to_hbm [thread:$0]  %s7018, 32, %s7020, [#allocation4]
    $region53: #{tpu_custom_call.1} parent=1 // pred_fallthru
      _
    // Predicated region
    $region54: #{tpu_custom_call.1} parent=1 // pred_check
      _
    $region55: #{tpu_custom_call.1} parent=1 // pred_check_branch
      %7024 = sbr.rel (0) target = $region57
    $region56: #{tpu_custom_call.1} parent=1 // pred_region
      %7026 = dma.done [#allocation4], 32
    $region57: #{tpu_custom_call.1} parent=1 // pred_fallthru
      _
    %7027 = vsyncpa [#allocation3], 1
    %7028 = vsyncpa [#allocation6], 1
    %7029 = vsyncpa [#allocation9], 1
    %7030 = vsyncpa [#allocation12], 1
    %7031 = vsyncpa [#allocation4], 1

</llo_original>
